<compile_context>
chip_gen: v6e
topology: v6e:2x2x1
jax: 0.10.0
libtpu: 0.0.40
codegen_flags: <defaults>
</compile_context>

<pallas_src>
import functools

import jax
import jax.numpy as jnp
import numpy as np
from jax.experimental import pallas as pl
from jax.experimental.pallas import tpu as pltpu


def _round_up(x, m):
    return ((x + m - 1) // m) * m


# ---------------- Pass 1: 9-tap shifted-window conv GEMM + BN partial sums ----
def _conv_stats_kernel(xa_ref, xb_ref, w_ref, mask_ref, y_ref, sum_ref, ssq_ref,
                       *, tm, cout_pad, tap_starts):
    # xa_ref/xb_ref: (TM, Cin) bf16 -- padded-flat activation blocks i and i+1
    # w_ref:         (9, Cin, Cout_pad) bf16, resident per-tap weights
    # mask_ref:      (TM, 1) f32 row-validity mask (0 at spatial-pad rows)
    # y_ref:         (TM, Cout_pad) bf16 conv output tile
    # sum_ref/ssq_ref: (1, 1, Cout_pad) f32 per-grid-step partial sums
    window = jnp.concatenate([xa_ref[...], xb_ref[...]], axis=0)   # (2*TM, Cin)
    acc = jnp.zeros((tm, cout_pad), jnp.float32)
    for t, s in enumerate(tap_starts):        # unrolled 9-tap loop, static slices
        acc += jnp.dot(window[s:s + tm, :], w_ref[t],
                       preferred_element_type=jnp.float32)
    acc = acc * mask_ref[...]                 # zero rows at padded spatial positions
    y_ref[...] = acc.astype(y_ref.dtype)      # bf16 intermediate store
    sum_ref[0] = jnp.sum(acc, axis=0, keepdims=True)        # f32 partial stats
    ssq_ref[0] = jnp.sum(acc * acc, axis=0, keepdims=True)


# ---------------- Pass 2: folded BN affine + ReLU (streaming) -----------------
def _bn_relu_kernel(y_ref, scale_ref, shift_ref, o_ref):
    y = y_ref[...].astype(jnp.float32)
    o_ref[...] = jnp.maximum(y * scale_ref[...] + shift_ref[...], 0.0)


def cbr_forward(x_nchw, w_oihw, gamma, beta, eps=1e-5, tm=1024, tm2_mult=2):
    """CBR forward (ks=3, stride=1, padding=1). x: (N,Cin,H,W), w: (Cout,Cin,3,3)."""
    N, Cin, H, W = x_nchw.shape
    Cout, Cin_w, KH, KW = w_oihw.shape
    assert (KH, KW) == (3, 3) and Cin_w == Cin, "module uses ks=3, stride=1, pad=1"

    Hp, Wp = H + 2, W + 2
    Mp = N * Hp * Wp            # padded-flat positions (conv computed at all of them)
    Mv = N * H * W              # valid output positions (BN statistics divisor)
    halo = Wp + 1               # max |tap row offset| in padded-flat coordinates
    Cout_pad = _round_up(Cout, 128)

    # Pass-1 row tile: multiple of 256, >= 2*halo, close to the requested tm.
    TM = min(_round_up(tm, 256), _round_up(Mp, 256))
    TM = max(TM, _round_up(2 * halo, 256))
    # Pass-2 row tile: larger (pure streaming) when there is enough work.
    k2 = tm2_mult if _round_up(Mp, TM) // TM >= tm2_mult else 1
    TM2 = TM * k2
    M_rows = _round_up(Mp, TM2)               # multiple of both TM and TM2
    grid1 = M_rows // TM
    grid2 = M_rows // TM2

    # ---- glue: NCHW -> padded NHWC -> flat rows (single pass over x) ----
    x_nhwc = jnp.transpose(x_nchw, (0, 2, 3, 1)).astype(jnp.bfloat16)
    x_sp = jnp.pad(x_nhwc, ((0, 0), (1, 1), (1, 1), (0, 0)))      # SAME padding=1
    x_flat = x_sp.reshape(Mp, Cin)
    # halo zero rows on top; enough zero rows below so block i+1 always exists.
    x2 = jnp.pad(x_flat, ((halo, M_rows + TM - Mp - halo), (0, 0)))

    # per-tap weights: OIHW -> (kh, kw, Cin, Cout) -> (9, Cin, Cout_pad)
    w9 = jnp.transpose(w_oihw, (2, 3, 1, 0)).reshape(9, Cin, Cout)
    w9 = jnp.pad(w9.astype(jnp.bfloat16), ((0, 0), (0, 0), (0, Cout_pad - Cout)))
    tap_starts = tuple(kh * Wp + kw for kh in range(3) for kw in range(3))

    # validity mask over padded-flat rows (1 at real output pixels, else 0)
    hmask = (jnp.arange(Hp) >= 1) & (jnp.arange(Hp) <= H)
    wmask = (jnp.arange(Wp) >= 1) & (jnp.arange(Wp) <= W)
    vmask = (hmask[:, None] & wmask[None, :]).astype(jnp.float32)  # (Hp, Wp)
    vmask = jnp.broadcast_to(vmask[None], (N, Hp, Wp)).reshape(Mp, 1)
    vmask = jnp.pad(vmask, ((0, M_rows - Mp), (0, 0)))

    kern1 = functools.partial(_conv_stats_kernel, tm=TM, cout_pad=Cout_pad,
                              tap_starts=tap_starts)
    flops1 = 2 * M_rows * 9 * Cin * Cout_pad
    bytes1 = (2 * x2.size * 2 + w9.size * 2 + vmask.size * 4
              + M_rows * Cout_pad * 2 + 2 * grid1 * Cout_pad * 4)

    y, psum, pssq = pl.pallas_call(
        kern1,
        grid=(grid1,),
        in_specs=[
            pl.BlockSpec((TM, Cin), lambda i: (i, 0)),               # x block i
            pl.BlockSpec((TM, Cin), lambda i: (i + 1, 0)),           # x block i+1 (halo)
            pl.BlockSpec((9, Cin, Cout_pad), lambda i: (0, 0, 0)),   # resident weights
            pl.BlockSpec((TM, 1), lambda i: (i, 0)),                 # row validity mask
        ],
        out_specs=[
            pl.BlockSpec((TM, Cout_pad), lambda i: (i, 0)),          # conv out (bf16)
            pl.BlockSpec((1, 1, Cout_pad), lambda i: (i, 0, 0)),     # per-step sum
            pl.BlockSpec((1, 1, Cout_pad), lambda i: (i, 0, 0)),     # per-step ssq
        ],
        out_shape=[
            jax.ShapeDtypeStruct((M_rows, Cout_pad), jnp.bfloat16),
            jax.ShapeDtypeStruct((grid1, 1, Cout_pad), jnp.float32),
            jax.ShapeDtypeStruct((grid1, 1, Cout_pad), jnp.float32),
        ],
        compiler_params=pltpu.CompilerParams(
            dimension_semantics=("parallel",),        # no carried state -> megacore OK
            vmem_limit_bytes=48 * 1024 * 1024),
        cost_estimate=pl.CostEstimate(flops=flops1, transcendentals=0,
                                      bytes_accessed=bytes1),
    )(x2, x2, w9, vmask)

    # ---- tiny glue: reduce partials, fold BN (batch stats) into scale/shift ----
    ysum = jnp.sum(psum, axis=(0, 1))                      # (Cout_pad,)
    yssq = jnp.sum(pssq, axis=(0, 1))
    mean = ysum / Mv
    var = jnp.maximum(yssq / Mv - mean * mean, 0.0)        # biased variance (PyTorch)
    gamma_p = jnp.pad(gamma.astype(jnp.float32), (0, Cout_pad - Cout))
    beta_p = jnp.pad(beta.astype(jnp.float32), (0, Cout_pad - Cout))
    scale = (gamma_p * jax.lax.rsqrt(var + eps)).reshape(1, Cout_pad)
    shift = (beta_p.reshape(1, Cout_pad) - mean.reshape(1, Cout_pad) * scale)

    flops2 = 2 * M_rows * Cout_pad
    bytes2 = M_rows * Cout_pad * (2 + 4) + 2 * Cout_pad * 4

    out_flat = pl.pallas_call(
        _bn_relu_kernel,
        grid=(grid2,),
        in_specs=[
            pl.BlockSpec((TM2, Cout_pad), lambda i: (i, 0)),
            pl.BlockSpec((1, Cout_pad), lambda i: (0, 0)),           # resident
            pl.BlockSpec((1, Cout_pad), lambda i: (0, 0)),           # resident
        ],
        out_specs=pl.BlockSpec((TM2, Cout_pad), lambda i: (i, 0)),
        out_shape=jax.ShapeDtypeStruct((M_rows, Cout_pad), jnp.float32),
        compiler_params=pltpu.CompilerParams(
            dimension_semantics=("parallel",),
            vmem_limit_bytes=48 * 1024 * 1024),
        cost_estimate=pl.CostEstimate(flops=flops2, transcendentals=0,
                                      bytes_accessed=bytes2),
    )(y, scale, shift)

    # ---- glue: un-pad and return PyTorch NCHW ----
    out = out_flat[:Mp].reshape(N, Hp, Wp, Cout_pad)[:, 1:H + 1, 1:W + 1, :Cout]
    return jnp.transpose(out, (0, 3, 1, 2))


def cbr_reference(x, w, gamma, beta, eps=1e-5):
    """Pure-JAX f32 reference mirroring the PyTorch forward (training-mode BN)."""
    y = jax.lax.conv_general_dilated(
        x, w, window_strides=(1, 1), padding=((1, 1), (1, 1)),
        dimension_numbers=("NCHW", "OIHW", "NCHW"))
    mean = jnp.mean(y, axis=(0, 2, 3), keepdims=True)
    var = jnp.mean((y - mean) ** 2, axis=(0, 2, 3), keepdims=True)
    y = (y - mean) * jax.lax.rsqrt(var + eps)
    y = y * gamma.reshape(1, -1, 1, 1) + beta.reshape(1, -1, 1, 1)
    return jnp.maximum(y, 0.0)


if __name__ == "__main__":
    key = jax.random.PRNGKey(0)
    kx, kw = jax.random.split(key)

    N, Cin, Cout, H, W, KS = 2, 4, 8, 16, 16, 3
    x = jax.random.normal(kx, (N, Cin, H, W), dtype=jnp.float32)

    # Deterministic init matching the module:
    #   Conv2d weight: kaiming_normal_(a=1) -> gain 1, std = 1/sqrt(Cin*9); no bias.
    #   BatchNorm2d:   gamma = 1, beta = 0 (PyTorch defaults).
    std = 1.0 / np.sqrt(Cin * KS * KS)
    w = jax.random.normal(kw, (Cout, Cin, KS, KS), dtype=jnp.float32) * std
    gamma = jnp.ones((Cout,), jnp.float32)
    beta = jnp.zeros((Cout,), jnp.float32)

    # tm=256 -> 4 pass-1 grid steps (exercises the halo straddle across block
    # boundaries, the partial-sum reduction, and the 2x pass-2 tile).
    out = cbr_forward(x, w, gamma, beta, tm=256)
    out = jax.block_until_ready(out)

    ref = cbr_reference(x, w, gamma, beta)
    # bf16 MXU operands + bf16 intermediate y => relaxed tolerance vs f32 ref.
    np.testing.assert_allclose(np.asarray(out), np.asarray(ref),
                               atol=4e-2, rtol=4e-2)
    print("KERNEL_OK")
</pallas_src>

<mosaic_0001>
module attributes {stable_mosaic.version = 11 : i64} {
  func.func @_conv_stats_kernel(%arg0: i32, %arg1: memref<256x4xbf16, #tpu.memory_space<vmem>>, %arg2: memref<256x4xbf16, #tpu.memory_space<vmem>>, %arg3: memref<9x4x128xbf16, #tpu.memory_space<vmem>>, %arg4: memref<256x1xf32, #tpu.memory_space<vmem>>, %arg5: memref<256x128xbf16, #tpu.memory_space<vmem>>, %arg6: memref<1x1x128xf32, #tpu.memory_space<vmem>>, %arg7: memref<1x1x128xf32, #tpu.memory_space<vmem>>) attributes {dimension_semantics = [#tpu.dimension_semantics<parallel>], iteration_bounds = array<i64: 4>, scalar_prefetch = 0 : i64, scratch_operands = 0 : i64, tpu.core_type = #tpu.core_type<tc>, window_params = [{transform_indices = @transform_0, window_bounds = array<i64: 256, 4>}, {transform_indices = @transform_1, window_bounds = array<i64: 256, 4>}, {pipeline_mode = #tpu.pipeline_mode<synchronous>, transform_indices = @transform_2, window_bounds = array<i64: 9, 4, 128>}, {transform_indices = @transform_3, window_bounds = array<i64: 256, 1>}, {transform_indices = @transform_4, window_bounds = array<i64: 256, 128>}, {transform_indices = @transform_5, window_bounds = array<i64: 1, 1, 128>}, {transform_indices = @transform_6, window_bounds = array<i64: 1, 1, 128>}]} {
    %c0 = arith.constant 0 : index
    %c0_0 = arith.constant 0 : index
    %0 = vector.load %arg1[%c0, %c0_0] : memref<256x4xbf16, #tpu.memory_space<vmem>>, vector<256x4xbf16>
    %c0_1 = arith.constant 0 : index
    %c0_2 = arith.constant 0 : index
    %1 = vector.load %arg2[%c0_1, %c0_2] : memref<256x4xbf16, #tpu.memory_space<vmem>>, vector<256x4xbf16>
    %2 = tpu.concatenate %0, %1 in 0 : vector<256x4xbf16>, vector<256x4xbf16> -> vector<512x4xbf16>
    %cst = arith.constant 0.000000e+00 : f32
    %3 = vector.broadcast %cst : f32 to vector<256x128xf32>
    %4 = vector.extract_strided_slice %2 {offsets = [0, 0], sizes = [256, 4], strides = [1, 1]} : vector<512x4xbf16> to vector<256x4xbf16>
    %c0_3 = arith.constant 0 : index
    %c0_4 = arith.constant 0 : index
    %c0_5 = arith.constant 0 : index
    %5 = vector.load %arg3[%c0_3, %c0_4, %c0_5] : memref<9x4x128xbf16, #tpu.memory_space<vmem>>, vector<1x4x128xbf16>
    %6 = vector.shape_cast %5 : vector<1x4x128xbf16> to vector<4x128xbf16>
    %cst_6 = arith.constant dense<0.000000e+00> : vector<256x128xf32>
    %7 = tpu.matmul %4, %6, %cst_6 {dimension_numbers = #tpu.dot_dimension_numbers<[1], [0], [0], [1], [0, 0, 1, 1], [], []>} : vector<256x4xbf16>, vector<4x128xbf16>, vector<256x128xf32> -> vector<256x128xf32>
    %8 = arith.addf %3, %7 : vector<256x128xf32>
    %9 = vector.extract_strided_slice %2 {offsets = [1, 0], sizes = [256, 4], strides = [1, 1]} : vector<512x4xbf16> to vector<256x4xbf16>
    %c1 = arith.constant 1 : index
    %c0_7 = arith.constant 0 : index
    %c0_8 = arith.constant 0 : index
    %10 = vector.load %arg3[%c1, %c0_7, %c0_8] : memref<9x4x128xbf16, #tpu.memory_space<vmem>>, vector<1x4x128xbf16>
    %11 = vector.shape_cast %10 : vector<1x4x128xbf16> to vector<4x128xbf16>
    %cst_9 = arith.constant dense<0.000000e+00> : vector<256x128xf32>
    %12 = tpu.matmul %9, %11, %cst_9 {dimension_numbers = #tpu.dot_dimension_numbers<[1], [0], [0], [1], [0, 0, 1, 1], [], []>} : vector<256x4xbf16>, vector<4x128xbf16>, vector<256x128xf32> -> vector<256x128xf32>
    %13 = arith.addf %8, %12 : vector<256x128xf32>
    %14 = vector.extract_strided_slice %2 {offsets = [2, 0], sizes = [256, 4], strides = [1, 1]} : vector<512x4xbf16> to vector<256x4xbf16>
    %c2 = arith.constant 2 : index
    %c0_10 = arith.constant 0 : index
    %c0_11 = arith.constant 0 : index
    %15 = vector.load %arg3[%c2, %c0_10, %c0_11] : memref<9x4x128xbf16, #tpu.memory_space<vmem>>, vector<1x4x128xbf16>
    %16 = vector.shape_cast %15 : vector<1x4x128xbf16> to vector<4x128xbf16>
    %cst_12 = arith.constant dense<0.000000e+00> : vector<256x128xf32>
    %17 = tpu.matmul %14, %16, %cst_12 {dimension_numbers = #tpu.dot_dimension_numbers<[1], [0], [0], [1], [0, 0, 1, 1], [], []>} : vector<256x4xbf16>, vector<4x128xbf16>, vector<256x128xf32> -> vector<256x128xf32>
    %18 = arith.addf %13, %17 : vector<256x128xf32>
    %19 = vector.extract_strided_slice %2 {offsets = [18, 0], sizes = [256, 4], strides = [1, 1]} : vector<512x4xbf16> to vector<256x4xbf16>
    %c3 = arith.constant 3 : index
    %c0_13 = arith.constant 0 : index
    %c0_14 = arith.constant 0 : index
    %20 = vector.load %arg3[%c3, %c0_13, %c0_14] : memref<9x4x128xbf16, #tpu.memory_space<vmem>>, vector<1x4x128xbf16>
    %21 = vector.shape_cast %20 : vector<1x4x128xbf16> to vector<4x128xbf16>
    %cst_15 = arith.constant dense<0.000000e+00> : vector<256x128xf32>
    %22 = tpu.matmul %19, %21, %cst_15 {dimension_numbers = #tpu.dot_dimension_numbers<[1], [0], [0], [1], [0, 0, 1, 1], [], []>} : vector<256x4xbf16>, vector<4x128xbf16>, vector<256x128xf32> -> vector<256x128xf32>
    %23 = arith.addf %18, %22 : vector<256x128xf32>
    %24 = vector.extract_strided_slice %2 {offsets = [19, 0], sizes = [256, 4], strides = [1, 1]} : vector<512x4xbf16> to vector<256x4xbf16>
    %c4 = arith.constant 4 : index
    %c0_16 = arith.constant 0 : index
    %c0_17 = arith.constant 0 : index
    %25 = vector.load %arg3[%c4, %c0_16, %c0_17] : memref<9x4x128xbf16, #tpu.memory_space<vmem>>, vector<1x4x128xbf16>
    %26 = vector.shape_cast %25 : vector<1x4x128xbf16> to vector<4x128xbf16>
    %cst_18 = arith.constant dense<0.000000e+00> : vector<256x128xf32>
    %27 = tpu.matmul %24, %26, %cst_18 {dimension_numbers = #tpu.dot_dimension_numbers<[1], [0], [0], [1], [0, 0, 1, 1], [], []>} : vector<256x4xbf16>, vector<4x128xbf16>, vector<256x128xf32> -> vector<256x128xf32>
    %28 = arith.addf %23, %27 : vector<256x128xf32>
    %29 = vector.extract_strided_slice %2 {offsets = [20, 0], sizes = [256, 4], strides = [1, 1]} : vector<512x4xbf16> to vector<256x4xbf16>
    %c5 = arith.constant 5 : index
    %c0_19 = arith.constant 0 : index
    %c0_20 = arith.constant 0 : index
    %30 = vector.load %arg3[%c5, %c0_19, %c0_20] : memref<9x4x128xbf16, #tpu.memory_space<vmem>>, vector<1x4x128xbf16>
    %31 = vector.shape_cast %30 : vector<1x4x128xbf16> to vector<4x128xbf16>
    %cst_21 = arith.constant dense<0.000000e+00> : vector<256x128xf32>
    %32 = tpu.matmul %29, %31, %cst_21 {dimension_numbers = #tpu.dot_dimension_numbers<[1], [0], [0], [1], [0, 0, 1, 1], [], []>} : vector<256x4xbf16>, vector<4x128xbf16>, vector<256x128xf32> -> vector<256x128xf32>
    %33 = arith.addf %28, %32 : vector<256x128xf32>
    %34 = vector.extract_strided_slice %2 {offsets = [36, 0], sizes = [256, 4], strides = [1, 1]} : vector<512x4xbf16> to vector<256x4xbf16>
    %c6 = arith.constant 6 : index
    %c0_22 = arith.constant 0 : index
    %c0_23 = arith.constant 0 : index
    %35 = vector.load %arg3[%c6, %c0_22, %c0_23] : memref<9x4x128xbf16, #tpu.memory_space<vmem>>, vector<1x4x128xbf16>
    %36 = vector.shape_cast %35 : vector<1x4x128xbf16> to vector<4x128xbf16>
    %cst_24 = arith.constant dense<0.000000e+00> : vector<256x128xf32>
    %37 = tpu.matmul %34, %36, %cst_24 {dimension_numbers = #tpu.dot_dimension_numbers<[1], [0], [0], [1], [0, 0, 1, 1], [], []>} : vector<256x4xbf16>, vector<4x128xbf16>, vector<256x128xf32> -> vector<256x128xf32>
    %38 = arith.addf %33, %37 : vector<256x128xf32>
    %39 = vector.extract_strided_slice %2 {offsets = [37, 0], sizes = [256, 4], strides = [1, 1]} : vector<512x4xbf16> to vector<256x4xbf16>
    %c7 = arith.constant 7 : index
    %c0_25 = arith.constant 0 : index
    %c0_26 = arith.constant 0 : index
    %40 = vector.load %arg3[%c7, %c0_25, %c0_26] : memref<9x4x128xbf16, #tpu.memory_space<vmem>>, vector<1x4x128xbf16>
    %41 = vector.shape_cast %40 : vector<1x4x128xbf16> to vector<4x128xbf16>
    %cst_27 = arith.constant dense<0.000000e+00> : vector<256x128xf32>
    %42 = tpu.matmul %39, %41, %cst_27 {dimension_numbers = #tpu.dot_dimension_numbers<[1], [0], [0], [1], [0, 0, 1, 1], [], []>} : vector<256x4xbf16>, vector<4x128xbf16>, vector<256x128xf32> -> vector<256x128xf32>
    %43 = arith.addf %38, %42 : vector<256x128xf32>
    %44 = vector.extract_strided_slice %2 {offsets = [38, 0], sizes = [256, 4], strides = [1, 1]} : vector<512x4xbf16> to vector<256x4xbf16>
    %c8 = arith.constant 8 : index
    %c0_28 = arith.constant 0 : index
    %c0_29 = arith.constant 0 : index
    %45 = vector.load %arg3[%c8, %c0_28, %c0_29] : memref<9x4x128xbf16, #tpu.memory_space<vmem>>, vector<1x4x128xbf16>
    %46 = vector.shape_cast %45 : vector<1x4x128xbf16> to vector<4x128xbf16>
    %cst_30 = arith.constant dense<0.000000e+00> : vector<256x128xf32>
    %47 = tpu.matmul %44, %46, %cst_30 {dimension_numbers = #tpu.dot_dimension_numbers<[1], [0], [0], [1], [0, 0, 1, 1], [], []>} : vector<256x4xbf16>, vector<4x128xbf16>, vector<256x128xf32> -> vector<256x128xf32>
    %48 = arith.addf %43, %47 : vector<256x128xf32>
    %c0_31 = arith.constant 0 : index
    %c0_32 = arith.constant 0 : index
    %49 = vector.load %arg4[%c0_31, %c0_32] : memref<256x1xf32, #tpu.memory_space<vmem>>, vector<256x1xf32>
    %50 = vector.broadcast %49 : vector<256x1xf32> to vector<256x128xf32>
    %51 = arith.mulf %48, %50 : vector<256x128xf32>
    %52 = arith.truncf %51 : vector<256x128xf32> to vector<256x128xbf16>
    %c0_33 = arith.constant 0 : index
    %c0_34 = arith.constant 0 : index
    %53 = vector.load %arg5[%c0_33, %c0_34] : memref<256x128xbf16, #tpu.memory_space<vmem>>, vector<256x128xbf16>
    tpu.vector_store %arg5[%c0_33, %c0_34], %52 {strides = array<i32>} : memref<256x128xbf16, #tpu.memory_space<vmem>>, vector<256x128xbf16>,
    %cst_35 = arith.constant dense<0.000000e+00> : vector<128xf32>
    %54 = vector.multi_reduction <add>, %51, %cst_35 [0] : vector<256x128xf32> to vector<128xf32>
    %55 = vector.shape_cast %54 : vector<128xf32> to vector<1x128xf32>
    %c0_36 = arith.constant 0 : index
    %c0_37 = arith.constant 0 : index
    %c0_38 = arith.constant 0 : index
    %56 = vector.load %arg6[%c0_36, %c0_37, %c0_38] : memref<1x1x128xf32, #tpu.memory_space<vmem>>, vector<1x1x128xf32>
    %57 = vector.shape_cast %56 : vector<1x1x128xf32> to vector<1x128xf32>
    %58 = vector.shape_cast %55 : vector<1x128xf32> to vector<1x1x128xf32>
    tpu.vector_store %arg6[%c0_36, %c0_37, %c0_38], %58 {strides = array<i32>} : memref<1x1x128xf32, #tpu.memory_space<vmem>>, vector<1x1x128xf32>,
    %59 = arith.mulf %51, %51 : vector<256x128xf32>
    %cst_39 = arith.constant dense<0.000000e+00> : vector<128xf32>
    %60 = vector.multi_reduction <add>, %59, %cst_39 [0] : vector<256x128xf32> to vector<128xf32>
    %61 = vector.shape_cast %60 : vector<128xf32> to vector<1x128xf32>
    %c0_40 = arith.constant 0 : index
    %c0_41 = arith.constant 0 : index
    %c0_42 = arith.constant 0 : index
    %62 = vector.load %arg7[%c0_40, %c0_41, %c0_42] : memref<1x1x128xf32, #tpu.memory_space<vmem>>, vector<1x1x128xf32>
    %63 = vector.shape_cast %62 : vector<1x1x128xf32> to vector<1x128xf32>
    %64 = vector.shape_cast %61 : vector<1x128xf32> to vector<1x1x128xf32>
    tpu.vector_store %arg7[%c0_40, %c0_41, %c0_42], %64 {strides = array<i32>} : memref<1x1x128xf32, #tpu.memory_space<vmem>>, vector<1x1x128xf32>,
    return
  }
  func.func @transform_0(%arg0: i32) -> (i32, i32) {
    %c0_i32 = arith.constant 0 : i32
    %c0_i32_0 = arith.constant 0 : i32
    return %arg0, %c0_i32 : i32, i32
  }
  func.func @transform_1(%arg0: i32) -> (i32, i32) {
    %c1_i32 = arith.constant 1 : i32
    %0 = arith.addi %arg0, %c1_i32 : i32
    %c0_i32 = arith.constant 0 : i32
    %c0_i32_0 = arith.constant 0 : i32
    return %0, %c0_i32 : i32, i32
  }
  func.func @transform_2(%arg0: i32) -> (i32, i32, i32) {
    %c0_i32 = arith.constant 0 : i32
    %c0_i32_0 = arith.constant 0 : i32
    %c0_i32_1 = arith.constant 0 : i32
    %c0_i32_2 = arith.constant 0 : i32
    return %c0_i32, %c0_i32_0, %c0_i32_1 : i32, i32, i32
  }
  func.func @transform_3(%arg0: i32) -> (i32, i32) {
    %c0_i32 = arith.constant 0 : i32
    %c0_i32_0 = arith.constant 0 : i32
    return %arg0, %c0_i32 : i32, i32
  }
  func.func @transform_4(%arg0: i32) -> (i32, i32) {
    %c0_i32 = arith.constant 0 : i32
    %c0_i32_0 = arith.constant 0 : i32
    return %arg0, %c0_i32 : i32, i32
  }
  func.func @transform_5(%arg0: i32) -> (i32, i32, i32) {
    %c0_i32 = arith.constant 0 : i32
    %c0_i32_0 = arith.constant 0 : i32
    %c0_i32_1 = arith.constant 0 : i32
    return %arg0, %c0_i32, %c0_i32_0 : i32, i32, i32
  }
  func.func @transform_6(%arg0: i32) -> (i32, i32, i32) {
    %c0_i32 = arith.constant 0 : i32
    %c0_i32_0 = arith.constant 0 : i32
    %c0_i32_1 = arith.constant 0 : i32
    return %arg0, %c0_i32, %c0_i32_0 : i32, i32, i32
  }
}

</mosaic_0001>

<llo_original>
// kernel: tpu_custom_call.1
$region0: #{tpu_custom_call.1}
  #allocation0 [shape = 'u32[]', space=smem, size = 0x4, offset = 0x4, fixed_abs, tag = 'smem constant byte address 0x4 - core index']
  #allocation1 [shape = 'u32[144,128]{1,0:T(1,128)}', space=vmem, size = 0x12000, scoped, tag = 'internal scratch']
  %s0 = inlined_call_operand.vmem [shape: bf16[1280,4], index: 0, kind: input, shape index: {}]
  %s1 = inlined_call_operand.vmem [shape: bf16[1280,4], index: 1, kind: input, shape index: {}]
  %s2 = inlined_call_operand.vmem [shape: bf16[9,4,128], index: 2, kind: input, shape index: {}]
  %s3 = inlined_call_operand.vmem [shape: f32[1024,1], index: 3, kind: input, shape index: {}]
  %s4 = inlined_call_operand.hbm [shape: bf16[1024,128], index: 4, kind: output, shape index: {0}]
  %s5 = inlined_call_operand.hbm [shape: f32[4,1,128], index: 5, kind: output, shape index: {1}]
  %s6 = inlined_call_operand.hbm [shape: f32[4,1,128], index: 6, kind: output, shape index: {2}]
  %7 = xla_tuple %s4, %s5, %s6
  %s8 = sld [smem:[#allocation0]]
  $region65: #{tpu_custom_call.1} parent=0
    _
  %s10 = ssub.s32 1, %s8
  %s11 = scalar_select 0, %s10, %s8
  $region1: #{tpu_custom_call.1} parent=0
    #allocation2 [shape = 'u8[131072]{0}', space=vmem, size = 0x20000, scoped, tag = 'output window, operand 0']
    #allocation3 [shape = 's32[2]{0}', space=sflag, size = 0x8, scoped, tag = 'scoped memory for tpu_custom_call.1']
    #allocation4 [shape = 'u8[1024]{0}', space=vmem, size = 0x400, scoped, tag = 'output window, operand 1']
    #allocation5 [shape = 's32[2]{0}', space=sflag, size = 0x8, scoped, tag = 'scoped memory for tpu_custom_call.1']
    #allocation6 [shape = 'u8[1024]{0}', space=vmem, size = 0x400, scoped, tag = 'output window, operand 2']
    %12 = vsyncpa [#allocation3], 0
    %s13 = scalar_lea.sflag [#allocation3], 1
    %14 = vsyncpa %s13, 0
    %15 = vsyncpa [#allocation5], 0
    %s16 = scalar_lea.sflag [#allocation5], 1
    %17 = vsyncpa %s16, 0
    loop: start=0, step=1, limit=6
    $region2: #{tpu_custom_call.1} parent=1 // loop_pre_header
      _
    $region3: #{tpu_custom_call.1} parent=1 // loop_header
      %s19 = sphi 0, %s23
      %p20 = scmp.ge.s32.totalorder %s19, 6
      %s29 = sphi 0, %s31
      %s32 = sphi 0, %s29
      %s33 = sphi 0, %s32
      %s49 = sphi 0, %s33
      %s57 = sphi 0, %s59
      %s60 = sphi 0, %s57
      %s61 = sphi 0, %s60
      %s77 = sphi 0, %s61
      %s81 = sphi 0, %s81
      %s83 = sphi 0, %s81
      %s84 = sphi 0, %s83
      %s98 = sphi 0, %s84
      %s104 = sphi 0, %s106
      %s107 = sphi 0, %s104
      %s108 = sphi 0, %s107
      %s124 = sphi 0, %s108
      %s130 = sphi 0, %s132
      %s133 = sphi 0, %s130
      %s134 = sphi 0, %s133
      %s150 = sphi 0, %s134
      %s156 = sphi 0, %s158
      %s159 = sphi 0, %s156
      %s160 = sphi 0, %s159
      %s176 = sphi 0, %s160
      %s182 = sphi 0, %s184
      %s185 = sphi 0, %s182
      %s186 = sphi 0, %s185
      %s202 = sphi 0, %s186
    $region4: #{tpu_custom_call.1} parent=1 // loop_header_branch
      %22 = sbr.rel (%p20) target = $region8
    $region5: #{tpu_custom_call.1} parent=1 // loop_body
      %s24 = ssub.s32 %s19, 1
      %s25 = ssub.s32 %s19, 2
      %s26 = sadd.s32 %s19, 1
      %s27 = ssub.s32 %s19, %s26
      %p28 = scmp.eq.s32.totalorder %s27, 0
      %s30 = sadd.s32 %s29, 1
      %s31 = scalar_select %p28, %s29, %s30
      %p34 = pneg %p28
      %p35 = scmp.eq.s32.totalorder %s19, 3
      %p36 = por %p34, %p35
      %p37 = scmp.ne.s32.totalorder %s29, %s32
      %p38 = scmp.eq.s32.totalorder %s19, 0
      %p39 = por %p37, %p38
      %p40 = scmp.ne.s32.totalorder %s29, %s32
      %p41 = scmp.eq.s32.totalorder %s24, 3
      %p42 = por %p40, %p41
      %p43 = scmp.ne.s32.totalorder %s32, %s33
      %p44 = scmp.eq.s32.totalorder %s24, 0
      %p45 = por %p43, %p44
      %p46 = scmp.ne.s32.totalorder %s32, %s33
      %p47 = scmp.eq.s32.totalorder %s25, 3
      %p48 = por %p46, %p47
      %p50 = scmp.ne.s32.totalorder %s33, %s49
      %p51 = scmp.eq.s32.totalorder %s25, 0
      %p52 = por %p50, %p51
      %s53 = sadd.s32 %s19, 1
      %s54 = sadd.s32 %s26, 1
      %s55 = ssub.s32 %s53, %s54
      %p56 = scmp.eq.s32.totalorder %s55, 0
      %s58 = sadd.s32 %s57, 1
      %s59 = scalar_select %p56, %s57, %s58
      %p62 = pneg %p56
      %p63 = scmp.eq.s32.totalorder %s19, 3
      %p64 = por %p62, %p63
      %p65 = scmp.ne.s32.totalorder %s57, %s60
      %p66 = scmp.eq.s32.totalorder %s19, 0
      %p67 = por %p65, %p66
      %p68 = scmp.ne.s32.totalorder %s57, %s60
      %p69 = scmp.eq.s32.totalorder %s24, 3
      %p70 = por %p68, %p69
      %p71 = scmp.ne.s32.totalorder %s60, %s61
      %p72 = scmp.eq.s32.totalorder %s24, 0
      %p73 = por %p71, %p72
      %p74 = scmp.ne.s32.totalorder %s60, %s61
      %p75 = scmp.eq.s32.totalorder %s25, 3
      %p76 = por %p74, %p75
      %p78 = scmp.ne.s32.totalorder %s61, %s77
      %p79 = scmp.eq.s32.totalorder %s25, 0
      %p80 = por %p78, %p79
      %s82 = sadd.s32 %s81, 1
      %p85 = scmp.eq.s32.totalorder %s19, 3
      %p86 = scmp.ne.s32.totalorder %s81, %s83
      %p87 = scmp.eq.s32.totalorder %s19, 0
      %p88 = por %p86, %p87
      %p89 = scmp.ne.s32.totalorder %s81, %s83
      %p90 = scmp.eq.s32.totalorder %s24, 3
      %p91 = por %p89, %p90
      %p92 = scmp.ne.s32.totalorder %s83, %s84
      %p93 = scmp.eq.s32.totalorder %s24, 0
      %p94 = por %p92, %p93
      %p95 = scmp.ne.s32.totalorder %s83, %s84
      %p96 = scmp.eq.s32.totalorder %s25, 3
      %p97 = por %p95, %p96
      %p99 = scmp.ne.s32.totalorder %s84, %s98
      %p100 = scmp.eq.s32.totalorder %s25, 0
      %p101 = por %p99, %p100
      %s102 = ssub.s32 %s19, %s26
      %p103 = scmp.eq.s32.totalorder %s102, 0
      %s105 = sadd.s32 %s104, 1
      %s106 = scalar_select %p103, %s104, %s105
      %p109 = pneg %p103
      %p110 = scmp.eq.s32.totalorder %s19, 3
      %p111 = por %p109, %p110
      %p112 = scmp.ne.s32.totalorder %s104, %s107
      %p113 = scmp.eq.s32.totalorder %s19, 0
      %p114 = por %p112, %p113
      %p115 = scmp.ne.s32.totalorder %s104, %s107
      %p116 = scmp.eq.s32.totalorder %s24, 3
      %p117 = por %p115, %p116
      %p118 = scmp.ne.s32.totalorder %s107, %s108
      %p119 = scmp.eq.s32.totalorder %s24, 0
      %p120 = por %p118, %p119
      %p121 = scmp.ne.s32.totalorder %s107, %s108
      %p122 = scmp.eq.s32.totalorder %s25, 3
      %p123 = por %p121, %p122
      %p125 = scmp.ne.s32.totalorder %s108, %s124
      %p126 = scmp.eq.s32.totalorder %s25, 0
      %p127 = por %p125, %p126
      %s128 = ssub.s32 %s19, %s26
      %p129 = scmp.eq.s32.totalorder %s128, 0
      %s131 = sadd.s32 %s130, 1
      %s132 = scalar_select %p129, %s130, %s131
      %p135 = pneg %p129
      %p136 = scmp.eq.s32.totalorder %s19, 3
      %p137 = por %p135, %p136
      %p138 = scmp.ne.s32.totalorder %s130, %s133
      %p139 = scmp.eq.s32.totalorder %s19, 0
      %p140 = por %p138, %p139
      %p141 = scmp.ne.s32.totalorder %s130, %s133
      %p142 = scmp.eq.s32.totalorder %s24, 3
      %p143 = por %p141, %p142
      %p144 = scmp.ne.s32.totalorder %s133, %s134
      %p145 = scmp.eq.s32.totalorder %s24, 0
      %p146 = por %p144, %p145
      %p147 = scmp.ne.s32.totalorder %s133, %s134
      %p148 = scmp.eq.s32.totalorder %s25, 3
      %p149 = por %p147, %p148
      %p151 = scmp.ne.s32.totalorder %s134, %s150
      %p152 = scmp.eq.s32.totalorder %s25, 0
      %p153 = por %p151, %p152
      %s154 = ssub.s32 %s19, %s26
      %p155 = scmp.eq.s32.totalorder %s154, 0
      %s157 = sadd.s32 %s156, 1
      %s158 = scalar_select %p155, %s156, %s157
      %p161 = pneg %p155
      %p162 = scmp.eq.s32.totalorder %s19, 3
      %p163 = por %p161, %p162
      %p164 = scmp.ne.s32.totalorder %s156, %s159
      %p165 = scmp.eq.s32.totalorder %s19, 0
      %p166 = por %p164, %p165
      %p167 = scmp.ne.s32.totalorder %s156, %s159
      %p168 = scmp.eq.s32.totalorder %s24, 3
      %p169 = por %p167, %p168
      %p170 = scmp.ne.s32.totalorder %s159, %s160
      %p171 = scmp.eq.s32.totalorder %s24, 0
      %p172 = por %p170, %p171
      %p173 = scmp.ne.s32.totalorder %s159, %s160
      %p174 = scmp.eq.s32.totalorder %s25, 3
      %p175 = por %p173, %p174
      %p177 = scmp.ne.s32.totalorder %s160, %s176
      %p178 = scmp.eq.s32.totalorder %s25, 0
      %p179 = por %p177, %p178
      %s180 = ssub.s32 %s19, %s26
      %p181 = scmp.eq.s32.totalorder %s180, 0
      %s183 = sadd.s32 %s182, 1
      %s184 = scalar_select %p181, %s182, %s183
      %p187 = pneg %p181
      %p188 = scmp.eq.s32.totalorder %s19, 3
      %p189 = por %p187, %p188
      %p190 = scmp.ne.s32.totalorder %s182, %s185
      %p191 = scmp.eq.s32.totalorder %s19, 0
      %p192 = por %p190, %p191
      %p193 = scmp.ne.s32.totalorder %s182, %s185
      %p194 = scmp.eq.s32.totalorder %s24, 3
      %p195 = por %p193, %p194
      %p196 = scmp.ne.s32.totalorder %s185, %s186
      %p197 = scmp.eq.s32.totalorder %s24, 0
      %p198 = por %p196, %p197
      %p199 = scmp.ne.s32.totalorder %s185, %s186
      %p200 = scmp.eq.s32.totalorder %s25, 3
      %p201 = por %p199, %p200
      %p203 = scmp.ne.s32.totalorder %s186, %s202
      %p204 = scmp.eq.s32.totalorder %s25, 0
      %p205 = por %p203, %p204
      %p206 = scmp.le.s32.totalorder 1, %s19
      %p207 = scmp.lt.s32.totalorder %s19, 5
      %p208 = pnand %p206, %p207
      %p209 = pneg %p208
      // Predicated region
      $region9: #{tpu_custom_call.1} parent=5 // pred_check
        _
      $region10: #{tpu_custom_call.1} parent=5 // pred_check_branch
        %211 = sbr.rel (%p208) target = $region12
      $region11: #{tpu_custom_call.1} parent=5 // pred_region
        %s212 = ssub.s32 %s19, 1
        // Predicated region
        $region13: #{tpu_custom_call.1} parent=11 // pred_check
          %p213 = pneg %p94
        $region14: #{tpu_custom_call.1} parent=11 // pred_check_branch
          %215 = sbr.rel (%p213) target = $region16
        $region15: #{tpu_custom_call.1} parent=11 // pred_region
          _
        $region16: #{tpu_custom_call.1} parent=11 // pred_fallthru
          _
      $region12: #{tpu_custom_call.1} parent=5 // pred_fallthru
        _
      %p216 = scmp.lt.s32.totalorder %s19, 4
      // Predicated region
      $region17: #{tpu_custom_call.1} parent=5 // pred_check
        %p217 = pneg %p216
      $region18: #{tpu_custom_call.1} parent=5 // pred_check_branch
        %219 = sbr.rel (%p217) target = $region20
      $region19: #{tpu_custom_call.1} parent=5 // pred_region
        // Predicated region
        $region21: #{tpu_custom_call.1} parent=19 // pred_check
          %p220 = pneg %p39
        $region22: #{tpu_custom_call.1} parent=19 // pred_check_branch
          %222 = sbr.rel (%p220) target = $region24
        $region23: #{tpu_custom_call.1} parent=19 // pred_region
          %s223 = smul.u32 32, %s19
          %p224 = scmp.lt.s32.totalorder %s223, 159
          %s225 = scalar_select %p224, %s223, 159
          %s226 = smul.addr %s225, 4
          %s227 = scalar_lea.vmem %s0, %s226
          %s228 = smul.u32 32, %s19
        $region24: #{tpu_custom_call.1} parent=19 // pred_fallthru
          _
        // Predicated region
        $region25: #{tpu_custom_call.1} parent=19 // pred_check
          %p229 = pneg %p67
        $region26: #{tpu_custom_call.1} parent=19 // pred_check_branch
          %231 = sbr.rel (%p229) target = $region28
        $region27: #{tpu_custom_call.1} parent=19 // pred_region
          %s232 = sadd.s32 %s19, 1
          %s233 = smul.u32 32, %s232
          %p234 = scmp.lt.s32.totalorder %s233, 159
          %s235 = scalar_select %p234, %s233, 159
          %s236 = smul.addr %s235, 4
          %s237 = scalar_lea.vmem %s1, %s236
          %s238 = sadd.s32 %s19, 1
          %s239 = smul.u32 32, %s238
        $region28: #{tpu_custom_call.1} parent=19 // pred_fallthru
          _
        // Predicated region
        $region29: #{tpu_custom_call.1} parent=19 // pred_check
          %p240 = pneg %p114
        $region30: #{tpu_custom_call.1} parent=19 // pred_check_branch
          %242 = sbr.rel (%p240) target = $region32
        $region31: #{tpu_custom_call.1} parent=19 // pred_region
          %s243 = smul.u32 32, %s19
          %p244 = scmp.lt.s32.totalorder %s243, 127
          %s245 = scalar_select %p244, %s243, 127
          %s246 = smul.addr %s245, 8
          %s247 = scalar_lea.vmem %s3, %s246
          %s248 = smul.u32 32, %s19
        $region32: #{tpu_custom_call.1} parent=19 // pred_fallthru
          _
      $region20: #{tpu_custom_call.1} parent=5 // pred_fallthru
        _
      %p249 = scmp.le.s32.totalorder 1, %s19
      %p250 = scmp.lt.s32.totalorder %s19, 5
      %p251 = pnand %p249, %p250
      %p252 = pneg %p251
      // Predicated region
      $region33: #{tpu_custom_call.1} parent=5 // pred_check
        _
      $region34: #{tpu_custom_call.1} parent=5 // pred_check_branch
        %254 = sbr.rel (%p251) target = $region36
      $region35: #{tpu_custom_call.1} parent=5 // pred_region
        %s255 = ssub.s32 %s19, 1
        %s256 = smul.u32 32, %s24
        %p257 = scmp.lt.s32.totalorder %s256, 159
        %s258 = scalar_select %p257, %s256, 159
        %s259 = smul.addr %s258, 4
        %s260 = scalar_lea.vmem %s0, %s259
        %p261 = pneg %p45
        %p262 = pneg %p42
        %s263 = sadd.s32 %s24, 1
        %s264 = smul.u32 32, %s263
        %p265 = scmp.lt.s32.totalorder %s264, 159
        %s266 = scalar_select %p265, %s264, 159
        %s267 = smul.addr %s266, 4
        %s268 = scalar_lea.vmem %s1, %s267
        %p269 = pneg %p73
        %p270 = pneg %p70
        %p271 = pneg %p94
        %p272 = pneg %p91
        %s273 = smul.u32 32, %s24
        %p274 = scmp.lt.s32.totalorder %s273, 127
        %s275 = scalar_select %p274, %s273, 127
        %s276 = smul.addr %s275, 8
        %s277 = scalar_lea.vmem %s3, %s276
        %p278 = pneg %p120
        %p279 = pneg %p117
        %p280 = pneg %p146
        %p281 = pneg %p143
        %s282 = sand.u32 %s133, 1
        %s283 = scalar_lea.sflag [#allocation3], %s282
        %s284 = sand.u32 %s133, 1
        %s285 = smul.addr %s284, 128
        %s286 = scalar_lea.vmem [#allocation2], %s285
        %p287 = pneg %p172
        %p288 = pneg %p169
        %s289 = sand.u32 %s24, 1
        %s290 = scalar_lea.sflag [#allocation5], %s289
        %s291 = sand.u32 %s159, 1
        %s292 = scalar_lea.vmem [#allocation4], %s291
        %p293 = pneg %p198
        %p294 = pneg %p195
        %s295 = sand.u32 %s24, 1
        %s296 = scalar_lea.sflag [#allocation5], %s295
        %s297 = sand.u32 %s185, 1
        %s298 = scalar_lea.vmem [#allocation6], %s297
        %s299 = smul.u32 32, %s24
        %p300 = scmp.lt.s32.totalorder %s299, 159
        %s301 = scalar_select %p300, %s299, 159
        %s302 = smul.addr %s301, 4
        %s303 = scalar_lea.vmem %s0, %s302
        %s304 = smul.u32 32, %s24
        %s305 = sadd.s32 %s24, 1
        %s306 = smul.u32 32, %s305
        %p307 = scmp.lt.s32.totalorder %s306, 159
        %s308 = scalar_select %p307, %s306, 159
        %s309 = smul.addr %s308, 4
        %s310 = scalar_lea.vmem %s1, %s309
        %s311 = sadd.s32 %s24, 1
        %s312 = smul.u32 32, %s311
        %s313 = smul.u32 32, %s24
        %p314 = scmp.lt.s32.totalorder %s313, 127
        %s315 = scalar_select %p314, %s313, 127
        %s316 = smul.addr %s315, 8
        %s317 = scalar_lea.vmem %s3, %s316
        %s318 = smul.u32 32, %s24
        %s319 = smul.u32 32, %s24
        %v321 = vld [vmem:[%s303] sm:$0xf]
        %v322 = vld [vmem:[%s303 + $0x4] sm:$0xf]
        %v323 = vld [vmem:[%s303 + $0x8] sm:$0xf]
        %v324 = vld [vmem:[%s303 + $0xc] sm:$0xf]
        %v325 = vld [vmem:[%s303 + $0x10] sm:$0xf]
        %v326 = vld [vmem:[%s303 + $0x14] sm:$0xf]
        %v327 = vld [vmem:[%s303 + $0x18] sm:$0xf]
        %v328 = vld [vmem:[%s303 + $0x1c] sm:$0xf]
        %v329 = vld [vmem:[%s303 + $0x20] sm:$0xf]
        %v330 = vld [vmem:[%s303 + $0x24] sm:$0xf]
        %v331 = vld [vmem:[%s303 + $0x28] sm:$0xf]
        %v332 = vld [vmem:[%s303 + $0x2c] sm:$0xf]
        %v333 = vld [vmem:[%s303 + $0x30] sm:$0xf]
        %v334 = vld [vmem:[%s303 + $0x34] sm:$0xf]
        %v335 = vld [vmem:[%s303 + $0x38] sm:$0xf]
        %v336 = vld [vmem:[%s303 + $0x3c] sm:$0xf]
        %v337 = vld [vmem:[%s303 + $0x40] sm:$0xf]
        %v338 = vld [vmem:[%s303 + $0x44] sm:$0xf]
        %v339 = vld [vmem:[%s303 + $0x48] sm:$0xf]
        %v340 = vld [vmem:[%s303 + $0x4c] sm:$0xf]
        %v341 = vld [vmem:[%s303 + $0x50] sm:$0xf]
        %v342 = vld [vmem:[%s303 + $0x54] sm:$0xf]
        %v343 = vld [vmem:[%s303 + $0x58] sm:$0xf]
        %v344 = vld [vmem:[%s303 + $0x5c] sm:$0xf]
        %v345 = vld [vmem:[%s303 + $0x60] sm:$0xf]
        %v346 = vld [vmem:[%s303 + $0x64] sm:$0xf]
        %v347 = vld [vmem:[%s303 + $0x68] sm:$0xf]
        %v348 = vld [vmem:[%s303 + $0x6c] sm:$0xf]
        %v349 = vld [vmem:[%s303 + $0x70] sm:$0xf]
        %v350 = vld [vmem:[%s303 + $0x74] sm:$0xf]
        %v351 = vld [vmem:[%s303 + $0x78] sm:$0xf]
        %v352 = vld [vmem:[%s303 + $0x7c] sm:$0xf]
        %v353 = vld [vmem:[%s310] sm:$0xf]
        %v354 = vld [vmem:[%s310 + $0x4] sm:$0xf]
        %v355 = vld [vmem:[%s310 + $0x8] sm:$0xf]
        %v356 = vld [vmem:[%s310 + $0xc] sm:$0xf]
        %v357 = vld [vmem:[%s310 + $0x10] sm:$0xf]
        %v358 = vld [vmem:[%s310 + $0x14] sm:$0xf]
        %v391 = vunpack.c.l.b16 %v321
        %v392 = vunpack.c.l.b16 %v322
        %v393 = vunpack.c.l.b16 %v323
        %v394 = vunpack.c.l.b16 %v324
        %v395 = vunpack.c.l.b16 %v325
        %v396 = vunpack.c.l.b16 %v326
        %v397 = vunpack.c.l.b16 %v327
        %v398 = vunpack.c.l.b16 %v328
        %v399 = vunpack.c.l.b16 %v329
        %v400 = vunpack.c.l.b16 %v330
        %v401 = vunpack.c.l.b16 %v331
        %v402 = vunpack.c.l.b16 %v332
        %v403 = vunpack.c.l.b16 %v333
        %v404 = vunpack.c.l.b16 %v334
        %v405 = vunpack.c.l.b16 %v335
        %v406 = vunpack.c.l.b16 %v336
        %v407 = vunpack.c.l.b16 %v337
        %v408 = vunpack.c.l.b16 %v338
        %v409 = vunpack.c.l.b16 %v339
        %v410 = vunpack.c.l.b16 %v340
        %v411 = vunpack.c.l.b16 %v341
        %v412 = vunpack.c.l.b16 %v342
        %v413 = vunpack.c.l.b16 %v343
        %v414 = vunpack.c.l.b16 %v344
        %v415 = vunpack.c.l.b16 %v345
        %v416 = vunpack.c.l.b16 %v346
        %v417 = vunpack.c.l.b16 %v347
        %v418 = vunpack.c.l.b16 %v348
        %v419 = vunpack.c.l.b16 %v349
        %v420 = vunpack.c.l.b16 %v350
        %v421 = vunpack.c.l.b16 %v351
        %v422 = vunpack.c.l.b16 %v352
        %v423 = vpack.c.b16 %v392, %v391
        %v424 = vpack.c.b16 %v394, %v393
        %v425 = vpack.c.b16 %v396, %v395
        %v426 = vpack.c.b16 %v398, %v397
        %v427 = vpack.c.b16 %v400, %v399
        %v428 = vpack.c.b16 %v402, %v401
        %v429 = vpack.c.b16 %v404, %v403
        %v430 = vpack.c.b16 %v406, %v405
        %v431 = vpack.c.b16 %v408, %v407
        %v432 = vpack.c.b16 %v410, %v409
        %v433 = vpack.c.b16 %v412, %v411
        %v434 = vpack.c.b16 %v414, %v413
        %v435 = vpack.c.b16 %v416, %v415
        %v436 = vpack.c.b16 %v418, %v417
        %v437 = vpack.c.b16 %v420, %v419
        %v438 = vpack.c.b16 %v422, %v421
        %v445 = vunpack.c.l.b16 %v353
        %v446 = vunpack.c.l.b16 %v354
        %v447 = vunpack.c.l.b16 %v355
        %v448 = vunpack.c.l.b16 %v356
        %v449 = vunpack.c.l.b16 %v357
        %v450 = vunpack.c.l.b16 %v358
        %v451 = vpack.c.b16 %v446, %v445
        %v452 = vpack.c.b16 %v448, %v447
        %v453 = vpack.c.b16 %v450, %v449
        %v454 = vld [vmem:[%s2] sm:$0x3]
        %s455 = scalar_lea.vmem %s2, 2
        %v456 = vld [vmem:[%s455] sm:$0x3]
        %vm457 = vsmask.f32 7424
        %v459 = vshrl.u32 %v423, 16
        %v461 = vshll.u32 %v423, 16
        %v463 = vrot.slane %v461, 1
        %v464 = vor.u32 %v459, %v463
        %v466 = vshll.u32 %v424, 16
        %v468 = vrot.slane %v466, 1
        %v469 = vsel %vm457, %v464, %v468
        %v470 = vshrl.u32 %v424, 16
        %v472 = vor.u32 %v470, %v468
        %v474 = vshll.u32 %v425, 16
        %v476 = vrot.slane %v474, 1
        %v477 = vsel %vm457, %v472, %v476
        %v478 = vshrl.u32 %v425, 16
        %v480 = vor.u32 %v478, %v476
        %v482 = vshll.u32 %v426, 16
        %v484 = vrot.slane %v482, 1
        %v485 = vsel %vm457, %v480, %v484
        %v486 = vshrl.u32 %v426, 16
        %v488 = vor.u32 %v486, %v484
        %v490 = vshll.u32 %v427, 16
        %v492 = vrot.slane %v490, 1
        %v493 = vsel %vm457, %v488, %v492
        %v494 = vshrl.u32 %v427, 16
        %v496 = vor.u32 %v494, %v492
        %v498 = vshll.u32 %v428, 16
        %v500 = vrot.slane %v498, 1
        %v501 = vsel %vm457, %v496, %v500
        %v502 = vshrl.u32 %v428, 16
        %v504 = vor.u32 %v502, %v500
        %v506 = vshll.u32 %v429, 16
        %v508 = vrot.slane %v506, 1
        %v509 = vsel %vm457, %v504, %v508
        %v510 = vshrl.u32 %v429, 16
        %v512 = vor.u32 %v510, %v508
        %v514 = vshll.u32 %v430, 16
        %v516 = vrot.slane %v514, 1
        %v517 = vsel %vm457, %v512, %v516
        %v518 = vshrl.u32 %v430, 16
        %v520 = vor.u32 %v518, %v516
        %v522 = vshll.u32 %v431, 16
        %v524 = vrot.slane %v522, 1
        %v525 = vsel %vm457, %v520, %v524
        %v526 = vshrl.u32 %v431, 16
        %v528 = vor.u32 %v526, %v524
        %v530 = vshll.u32 %v432, 16
        %v532 = vrot.slane %v530, 1
        %v533 = vsel %vm457, %v528, %v532
        %v534 = vshrl.u32 %v432, 16
        %v536 = vor.u32 %v534, %v532
        %v538 = vshll.u32 %v433, 16
        %v540 = vrot.slane %v538, 1
        %v541 = vsel %vm457, %v536, %v540
        %v542 = vshrl.u32 %v433, 16
        %v544 = vor.u32 %v542, %v540
        %v546 = vshll.u32 %v434, 16
        %v548 = vrot.slane %v546, 1
        %v549 = vsel %vm457, %v544, %v548
        %v550 = vshrl.u32 %v434, 16
        %v552 = vor.u32 %v550, %v548
        %v554 = vshll.u32 %v435, 16
        %v556 = vrot.slane %v554, 1
        %v557 = vsel %vm457, %v552, %v556
        %v558 = vshrl.u32 %v435, 16
        %v560 = vor.u32 %v558, %v556
        %v562 = vshll.u32 %v436, 16
        %v564 = vrot.slane %v562, 1
        %v565 = vsel %vm457, %v560, %v564
        %v566 = vshrl.u32 %v436, 16
        %v568 = vor.u32 %v566, %v564
        %v570 = vshll.u32 %v437, 16
        %v572 = vrot.slane %v570, 1
        %v573 = vsel %vm457, %v568, %v572
        %v574 = vshrl.u32 %v437, 16
        %v576 = vor.u32 %v574, %v572
        %v578 = vshll.u32 %v438, 16
        %v580 = vrot.slane %v578, 1
        %v581 = vsel %vm457, %v576, %v580
        %v582 = vshrl.u32 %v438, 16
        %v584 = vor.u32 %v582, %v580
        %v586 = vshll.u32 %v451, 16
        %v588 = vrot.slane %v586, 1
        %v589 = vsel %vm457, %v584, %v588
        %vm590 = vcmask 31744
        %v592 = vsel %vm590, %v469, 0
        %v595 = vsel %vm590, %v477, 0
        %v598 = vsel %vm590, %v485, 0
        %v601 = vsel %vm590, %v493, 0
        %v604 = vsel %vm590, %v501, 0
        %v607 = vsel %vm590, %v509, 0
        %v610 = vsel %vm590, %v517, 0
        %v613 = vsel %vm590, %v525, 0
        %v616 = vsel %vm590, %v533, 0
        %v619 = vsel %vm590, %v541, 0
        %v622 = vsel %vm590, %v549, 0
        %v625 = vsel %vm590, %v557, 0
        %v628 = vsel %vm590, %v565, 0
        %v631 = vsel %vm590, %v573, 0
        %v634 = vsel %vm590, %v581, 0
        %v637 = vsel %vm590, %v589, 0
        %vm639 = vcmask 1041408
        %v641 = vsel %vm639, %v456, 0
        %643 = vmatprep.subr.bf16.mxu0 0
        %644 = vmatpush1.bf16.msra.mxu0 0
        %645 = vmatprep.subr.bf16.mxu0 0
        %646 = vmatpush1.bf16.msra.mxu0 0
        %647 = vmatprep.subr.bf16.mxu0 0
        %648 = vmatpush1.bf16.msra.mxu0 0
        %649 = vmatprep.subr.bf16.mxu0 0
        %650 = vmatpush1.bf16.msra.mxu0 0
        %651 = vmatprep.subr.bf16.mxu0 0
        %652 = vmatpush1.bf16.msra.mxu0 0
        %653 = vmatprep.subr.bf16.mxu0 0
        %654 = vmatpush1.bf16.msra.mxu0 0
        %655 = vmatprep.subr.bf16.mxu0 0
        %656 = vmatpush1.bf16.msra.mxu0 0
        %657 = vmatprep.subr.bf16.mxu0 0
        %658 = vmatpush1.bf16.msra.mxu0 %v641
        %659 = vmatprep.subr.bf16.mxu0 0
        %660 = vmatpush2.bf16.msra.mxu0 0
        %661 = vmatprep.subr.bf16.mxu0 0
        %662 = vmatpush2.bf16.msra.mxu0 0
        %663 = vmatprep.subr.bf16.mxu0 0
        %664 = vmatpush2.bf16.msra.mxu0 0
        %665 = vmatprep.subr.bf16.mxu0 0
        %666 = vmatpush2.bf16.msra.mxu0 0
        %667 = vmatprep.subr.bf16.mxu0 0
        %668 = vmatpush2.bf16.msra.mxu0 0
        %669 = vmatprep.subr.bf16.mxu0 0
        %670 = vmatpush2.bf16.msra.mxu0 0
        %671 = vmatprep.subr.bf16.mxu0 0
        %672 = vmatpush2.bf16.msra.mxu0 0
        %673 = vmatprep.subr.bf16.mxu0 0
        %674 = vmatpush2.bf16.msra.mxu0 0
        %675 = vmatprep.mubr.bf16.mxu0 0
        %676 = vmatmul.mubr.bf16.gmra.mxu0 %v592
        %v677 = vpop.f32.mrf.mxu0
        %v678 = vadd.f32 0.0, %v677
        %v679 = vpop.f32.mrf.mxu0
        %v680 = vpop.f32.mrf.mxu0
        %v681 = vadd.f32 0.0, %v680
        %v682 = vpop.f32.mrf.mxu0
        %683 = vmatprep.mubr.bf16.mxu0 0
        %684 = vmatmul.mubr.bf16.gmra.mxu0 %v595
        %v685 = vpop.f32.mrf.mxu0
        %v686 = vadd.f32 0.0, %v685
        %v687 = vpop.f32.mrf.mxu0
        %v688 = vpop.f32.mrf.mxu0
        %v689 = vadd.f32 0.0, %v688
        %v690 = vpop.f32.mrf.mxu0
        %691 = vmatprep.mubr.bf16.mxu0 0
        %692 = vmatmul.mubr.bf16.gmra.mxu0 %v598
        %v693 = vpop.f32.mrf.mxu0
        %v694 = vadd.f32 0.0, %v693
        %v695 = vpop.f32.mrf.mxu0
        %v696 = vpop.f32.mrf.mxu0
        %v697 = vadd.f32 0.0, %v696
        %v698 = vpop.f32.mrf.mxu0
        %699 = vmatprep.mubr.bf16.mxu0 0
        %700 = vmatmul.mubr.bf16.gmra.mxu0 %v601
        %v701 = vpop.f32.mrf.mxu0
        %v702 = vadd.f32 0.0, %v701
        %v703 = vpop.f32.mrf.mxu0
        %v704 = vpop.f32.mrf.mxu0
        %v705 = vadd.f32 0.0, %v704
        %v706 = vpop.f32.mrf.mxu0
        %707 = vmatprep.mubr.bf16.mxu0 0
        %708 = vmatmul.mubr.bf16.gmra.mxu0 %v604
        %v709 = vpop.f32.mrf.mxu0
        %v710 = vadd.f32 0.0, %v709
        %v711 = vpop.f32.mrf.mxu0
        %v712 = vpop.f32.mrf.mxu0
        %v713 = vadd.f32 0.0, %v712
        %v714 = vpop.f32.mrf.mxu0
        %715 = vmatprep.mubr.bf16.mxu0 0
        %716 = vmatmul.mubr.bf16.gmra.mxu0 %v607
        %v717 = vpop.f32.mrf.mxu0
        %v718 = vadd.f32 0.0, %v717
        %v719 = vpop.f32.mrf.mxu0
        %v720 = vpop.f32.mrf.mxu0
        %v721 = vadd.f32 0.0, %v720
        %v722 = vpop.f32.mrf.mxu0
        %723 = vmatprep.mubr.bf16.mxu0 0
        %724 = vmatmul.mubr.bf16.gmra.mxu0 %v610
        %v725 = vpop.f32.mrf.mxu0
        %v726 = vadd.f32 0.0, %v725
        %v727 = vpop.f32.mrf.mxu0
        %v728 = vpop.f32.mrf.mxu0
        %v729 = vadd.f32 0.0, %v728
        %v730 = vpop.f32.mrf.mxu0
        %731 = vmatprep.mubr.bf16.mxu0 0
        %732 = vmatmul.mubr.bf16.gmra.mxu0 %v613
        %v733 = vpop.f32.mrf.mxu0
        %v734 = vadd.f32 0.0, %v733
        %v735 = vpop.f32.mrf.mxu0
        %v736 = vpop.f32.mrf.mxu0
        %v737 = vadd.f32 0.0, %v736
        %v738 = vpop.f32.mrf.mxu0
        %739 = vmatprep.mubr.bf16.mxu0 0
        %740 = vmatmul.mubr.bf16.gmra.mxu0 %v616
        %v741 = vpop.f32.mrf.mxu0
        %v742 = vadd.f32 0.0, %v741
        %v743 = vpop.f32.mrf.mxu0
        %v744 = vpop.f32.mrf.mxu0
        %v745 = vadd.f32 0.0, %v744
        %v746 = vpop.f32.mrf.mxu0
        %747 = vmatprep.mubr.bf16.mxu0 0
        %748 = vmatmul.mubr.bf16.gmra.mxu0 %v619
        %v749 = vpop.f32.mrf.mxu0
        %v750 = vadd.f32 0.0, %v749
        %v751 = vpop.f32.mrf.mxu0
        %v752 = vpop.f32.mrf.mxu0
        %v753 = vadd.f32 0.0, %v752
        %v754 = vpop.f32.mrf.mxu0
        %755 = vmatprep.mubr.bf16.mxu0 0
        %756 = vmatmul.mubr.bf16.gmra.mxu0 %v622
        %v757 = vpop.f32.mrf.mxu0
        %v758 = vadd.f32 0.0, %v757
        %v759 = vpop.f32.mrf.mxu0
        %v760 = vpop.f32.mrf.mxu0
        %v761 = vadd.f32 0.0, %v760
        %v762 = vpop.f32.mrf.mxu0
        %763 = vmatprep.mubr.bf16.mxu0 0
        %764 = vmatmul.mubr.bf16.gmra.mxu0 %v625
        %v765 = vpop.f32.mrf.mxu0
        %v766 = vadd.f32 0.0, %v765
        %v767 = vpop.f32.mrf.mxu0
        %v768 = vpop.f32.mrf.mxu0
        %v769 = vadd.f32 0.0, %v768
        %v770 = vpop.f32.mrf.mxu0
        %771 = vmatprep.mubr.bf16.mxu0 0
        %772 = vmatmul.mubr.bf16.gmra.mxu0 %v628
        %v773 = vpop.f32.mrf.mxu0
        %v774 = vadd.f32 0.0, %v773
        %v775 = vpop.f32.mrf.mxu0
        %v776 = vpop.f32.mrf.mxu0
        %v777 = vadd.f32 0.0, %v776
        %v778 = vpop.f32.mrf.mxu0
        %779 = vmatprep.mubr.bf16.mxu0 0
        %780 = vmatmul.mubr.bf16.gmra.mxu0 %v631
        %v781 = vpop.f32.mrf.mxu0
        %v782 = vadd.f32 0.0, %v781
        %v783 = vpop.f32.mrf.mxu0
        %v784 = vpop.f32.mrf.mxu0
        %v785 = vadd.f32 0.0, %v784
        %v786 = vpop.f32.mrf.mxu0
        %787 = vmatprep.mubr.bf16.mxu0 0
        %788 = vmatmul.mubr.bf16.gmra.mxu0 %v634
        %v789 = vpop.f32.mrf.mxu0
        %v790 = vadd.f32 0.0, %v789
        %v791 = vpop.f32.mrf.mxu0
        %v792 = vpop.f32.mrf.mxu0
        %v793 = vadd.f32 0.0, %v792
        %v794 = vpop.f32.mrf.mxu0
        %795 = vmatprep.mubr.bf16.mxu0 0
        %796 = vmatmul.mubr.bf16.gmra.mxu0 %v637
        %v797 = vpop.f32.mrf.mxu0
        %v798 = vadd.f32 0.0, %v797
        %v799 = vpop.f32.mrf.mxu0
        %v800 = vpop.f32.mrf.mxu0
        %v801 = vadd.f32 0.0, %v800
        %v802 = vpop.f32.mrf.mxu0
        %803 = vdwg.mxu0
        %v804 = vsel %vm590, %v423, 0
        %v806 = vsel %vm590, %v424, 0
        %v808 = vsel %vm590, %v425, 0
        %v810 = vsel %vm590, %v426, 0
        %v812 = vsel %vm590, %v427, 0
        %v814 = vsel %vm590, %v428, 0
        %v816 = vsel %vm590, %v429, 0
        %v818 = vsel %vm590, %v430, 0
        %v820 = vsel %vm590, %v431, 0
        %v822 = vsel %vm590, %v432, 0
        %v824 = vsel %vm590, %v433, 0
        %v826 = vsel %vm590, %v434, 0
        %v828 = vsel %vm590, %v435, 0
        %v830 = vsel %vm590, %v436, 0
        %v832 = vsel %vm590, %v437, 0
        %v834 = vsel %vm590, %v438, 0
        %v837 = vsel %vm639, %v454, 0
        %839 = vmatprep.subr.bf16.mxu0 0
        %840 = vmatpush1.bf16.msra.mxu0 0
        %841 = vmatprep.subr.bf16.mxu0 0
        %842 = vmatpush1.bf16.msra.mxu0 0
        %843 = vmatprep.subr.bf16.mxu0 0
        %844 = vmatpush1.bf16.msra.mxu0 0
        %845 = vmatprep.subr.bf16.mxu0 0
        %846 = vmatpush1.bf16.msra.mxu0 0
        %847 = vmatprep.subr.bf16.mxu0 0
        %848 = vmatpush1.bf16.msra.mxu0 0
        %849 = vmatprep.subr.bf16.mxu0 0
        %850 = vmatpush1.bf16.msra.mxu0 0
        %851 = vmatprep.subr.bf16.mxu0 0
        %852 = vmatpush1.bf16.msra.mxu0 0
        %853 = vmatprep.subr.bf16.mxu0 0
        %854 = vmatpush1.bf16.msra.mxu0 %v837
        %855 = vmatprep.subr.bf16.mxu0 0
        %856 = vmatpush2.bf16.msra.mxu0 0
        %857 = vmatprep.subr.bf16.mxu0 0
        %858 = vmatpush2.bf16.msra.mxu0 0
        %859 = vmatprep.subr.bf16.mxu0 0
        %860 = vmatpush2.bf16.msra.mxu0 0
        %861 = vmatprep.subr.bf16.mxu0 0
        %862 = vmatpush2.bf16.msra.mxu0 0
        %863 = vmatprep.subr.bf16.mxu0 0
        %864 = vmatpush2.bf16.msra.mxu0 0
        %865 = vmatprep.subr.bf16.mxu0 0
        %866 = vmatpush2.bf16.msra.mxu0 0
        %867 = vmatprep.subr.bf16.mxu0 0
        %868 = vmatpush2.bf16.msra.mxu0 0
        %869 = vmatprep.subr.bf16.mxu0 0
        %870 = vmatpush2.bf16.msra.mxu0 0
        %871 = vmatprep.mubr.bf16.mxu0 0
        %872 = vmatmul.mubr.bf16.gmra.mxu0 %v804
        %v873 = vpop.f32.mrf.mxu0
        %v874 = vadd.f32 %v678, %v873
        %v875 = vpop.f32.mrf.mxu0
        %v876 = vpop.f32.mrf.mxu0
        %v877 = vadd.f32 %v681, %v876
        %v878 = vpop.f32.mrf.mxu0
        %879 = vmatprep.mubr.bf16.mxu0 0
        %880 = vmatmul.mubr.bf16.gmra.mxu0 %v806
        %v881 = vpop.f32.mrf.mxu0
        %v882 = vadd.f32 %v686, %v881
        %v883 = vpop.f32.mrf.mxu0
        %v884 = vpop.f32.mrf.mxu0
        %v885 = vadd.f32 %v689, %v884
        %v886 = vpop.f32.mrf.mxu0
        %887 = vmatprep.mubr.bf16.mxu0 0
        %888 = vmatmul.mubr.bf16.gmra.mxu0 %v808
        %v889 = vpop.f32.mrf.mxu0
        %v890 = vadd.f32 %v694, %v889
        %v891 = vpop.f32.mrf.mxu0
        %v892 = vpop.f32.mrf.mxu0
        %v893 = vadd.f32 %v697, %v892
        %v894 = vpop.f32.mrf.mxu0
        %895 = vmatprep.mubr.bf16.mxu0 0
        %896 = vmatmul.mubr.bf16.gmra.mxu0 %v810
        %v897 = vpop.f32.mrf.mxu0
        %v898 = vadd.f32 %v702, %v897
        %v899 = vpop.f32.mrf.mxu0
        %v900 = vpop.f32.mrf.mxu0
        %v901 = vadd.f32 %v705, %v900
        %v902 = vpop.f32.mrf.mxu0
        %903 = vmatprep.mubr.bf16.mxu0 0
        %904 = vmatmul.mubr.bf16.gmra.mxu0 %v812
        %v905 = vpop.f32.mrf.mxu0
        %v906 = vadd.f32 %v710, %v905
        %v907 = vpop.f32.mrf.mxu0
        %v908 = vpop.f32.mrf.mxu0
        %v909 = vadd.f32 %v713, %v908
        %v910 = vpop.f32.mrf.mxu0
        %911 = vmatprep.mubr.bf16.mxu0 0
        %912 = vmatmul.mubr.bf16.gmra.mxu0 %v814
        %v913 = vpop.f32.mrf.mxu0
        %v914 = vadd.f32 %v718, %v913
        %v915 = vpop.f32.mrf.mxu0
        %v916 = vpop.f32.mrf.mxu0
        %v917 = vadd.f32 %v721, %v916
        %v918 = vpop.f32.mrf.mxu0
        %919 = vmatprep.mubr.bf16.mxu0 0
        %920 = vmatmul.mubr.bf16.gmra.mxu0 %v816
        %v921 = vpop.f32.mrf.mxu0
        %v922 = vadd.f32 %v726, %v921
        %v923 = vpop.f32.mrf.mxu0
        %v924 = vpop.f32.mrf.mxu0
        %v925 = vadd.f32 %v729, %v924
        %v926 = vpop.f32.mrf.mxu0
        %927 = vmatprep.mubr.bf16.mxu0 0
        %928 = vmatmul.mubr.bf16.gmra.mxu0 %v818
        %v929 = vpop.f32.mrf.mxu0
        %v930 = vadd.f32 %v734, %v929
        %v931 = vpop.f32.mrf.mxu0
        %v932 = vpop.f32.mrf.mxu0
        %v933 = vadd.f32 %v737, %v932
        %v934 = vpop.f32.mrf.mxu0
        %935 = vmatprep.mubr.bf16.mxu0 0
        %936 = vmatmul.mubr.bf16.gmra.mxu0 %v820
        %v937 = vpop.f32.mrf.mxu0
        %v938 = vadd.f32 %v742, %v937
        %v939 = vpop.f32.mrf.mxu0
        %v940 = vpop.f32.mrf.mxu0
        %v941 = vadd.f32 %v745, %v940
        %v942 = vpop.f32.mrf.mxu0
        %943 = vmatprep.mubr.bf16.mxu0 0
        %944 = vmatmul.mubr.bf16.gmra.mxu0 %v822
        %v945 = vpop.f32.mrf.mxu0
        %v946 = vadd.f32 %v750, %v945
        %v947 = vpop.f32.mrf.mxu0
        %v948 = vpop.f32.mrf.mxu0
        %v949 = vadd.f32 %v753, %v948
        %v950 = vpop.f32.mrf.mxu0
        %951 = vmatprep.mubr.bf16.mxu0 0
        %952 = vmatmul.mubr.bf16.gmra.mxu0 %v824
        %v953 = vpop.f32.mrf.mxu0
        %v954 = vadd.f32 %v758, %v953
        %v955 = vpop.f32.mrf.mxu0
        %v956 = vpop.f32.mrf.mxu0
        %v957 = vadd.f32 %v761, %v956
        %v958 = vpop.f32.mrf.mxu0
        %959 = vmatprep.mubr.bf16.mxu0 0
        %960 = vmatmul.mubr.bf16.gmra.mxu0 %v826
        %v961 = vpop.f32.mrf.mxu0
        %v962 = vadd.f32 %v766, %v961
        %v963 = vpop.f32.mrf.mxu0
        %v964 = vpop.f32.mrf.mxu0
        %v965 = vadd.f32 %v769, %v964
        %v966 = vpop.f32.mrf.mxu0
        %967 = vmatprep.mubr.bf16.mxu0 0
        %968 = vmatmul.mubr.bf16.gmra.mxu0 %v828
        %v969 = vpop.f32.mrf.mxu0
        %v970 = vadd.f32 %v774, %v969
        %v971 = vpop.f32.mrf.mxu0
        %v972 = vpop.f32.mrf.mxu0
        %v973 = vadd.f32 %v777, %v972
        %v974 = vpop.f32.mrf.mxu0
        %975 = vmatprep.mubr.bf16.mxu0 0
        %976 = vmatmul.mubr.bf16.gmra.mxu0 %v830
        %v977 = vpop.f32.mrf.mxu0
        %v978 = vadd.f32 %v782, %v977
        %v979 = vpop.f32.mrf.mxu0
        %v980 = vpop.f32.mrf.mxu0
        %v981 = vadd.f32 %v785, %v980
        %v982 = vpop.f32.mrf.mxu0
        %983 = vmatprep.mubr.bf16.mxu0 0
        %984 = vmatmul.mubr.bf16.gmra.mxu0 %v832
        %v985 = vpop.f32.mrf.mxu0
        %v986 = vadd.f32 %v790, %v985
        %v987 = vpop.f32.mrf.mxu0
        %v988 = vpop.f32.mrf.mxu0
        %v989 = vadd.f32 %v793, %v988
        %v990 = vpop.f32.mrf.mxu0
        %991 = vmatprep.mubr.bf16.mxu0 0
        %992 = vmatmul.mubr.bf16.gmra.mxu0 %v834
        %v993 = vpop.f32.mrf.mxu0
        %v994 = vadd.f32 %v798, %v993
        %v995 = vpop.f32.mrf.mxu0
        %v996 = vpop.f32.mrf.mxu0
        %v997 = vadd.f32 %v801, %v996
        %v998 = vpop.f32.mrf.mxu0
        %999 = vdwg.mxu0
        %s1000 = scalar_lea.vmem %s2, 4
        %v1001 = vld [vmem:[%s1000] sm:$0x3]
        %vm1002 = vcmask 1046528
        %v1003 = vrot.slane %v423, 1
        %v1004 = vrot.slane %v424, 1
        %v1005 = vsel %vm1002, %v1003, %v1004
        %v1006 = vrot.slane %v425, 1
        %v1007 = vsel %vm1002, %v1004, %v1006
        %v1008 = vrot.slane %v426, 1
        %v1009 = vsel %vm1002, %v1006, %v1008
        %v1010 = vrot.slane %v427, 1
        %v1011 = vsel %vm1002, %v1008, %v1010
        %v1012 = vrot.slane %v428, 1
        %v1013 = vsel %vm1002, %v1010, %v1012
        %v1014 = vrot.slane %v429, 1
        %v1015 = vsel %vm1002, %v1012, %v1014
        %v1016 = vrot.slane %v430, 1
        %v1017 = vsel %vm1002, %v1014, %v1016
        %v1018 = vrot.slane %v431, 1
        %v1019 = vsel %vm1002, %v1016, %v1018
        %v1020 = vrot.slane %v432, 1
        %v1021 = vsel %vm1002, %v1018, %v1020
        %v1022 = vrot.slane %v433, 1
        %v1023 = vsel %vm1002, %v1020, %v1022
        %v1024 = vrot.slane %v434, 1
        %v1025 = vsel %vm1002, %v1022, %v1024
        %v1026 = vrot.slane %v435, 1
        %v1027 = vsel %vm1002, %v1024, %v1026
        %v1028 = vrot.slane %v436, 1
        %v1029 = vsel %vm1002, %v1026, %v1028
        %v1030 = vrot.slane %v437, 1
        %v1031 = vsel %vm1002, %v1028, %v1030
        %v1032 = vrot.slane %v438, 1
        %v1033 = vsel %vm1002, %v1030, %v1032
        %v1034 = vrot.slane %v451, 1
        %v1035 = vsel %vm1002, %v1032, %v1034
        %v1037 = vsel %vm590, %v1005, 0
        %v1040 = vsel %vm590, %v1007, 0
        %v1043 = vsel %vm590, %v1009, 0
        %v1046 = vsel %vm590, %v1011, 0
        %v1049 = vsel %vm590, %v1013, 0
        %v1052 = vsel %vm590, %v1015, 0
        %v1055 = vsel %vm590, %v1017, 0
        %v1058 = vsel %vm590, %v1019, 0
        %v1061 = vsel %vm590, %v1021, 0
        %v1064 = vsel %vm590, %v1023, 0
        %v1067 = vsel %vm590, %v1025, 0
        %v1070 = vsel %vm590, %v1027, 0
        %v1073 = vsel %vm590, %v1029, 0
        %v1076 = vsel %vm590, %v1031, 0
        %v1079 = vsel %vm590, %v1033, 0
        %v1082 = vsel %vm590, %v1035, 0
        %v1085 = vsel %vm639, %v1001, 0
        %1087 = vmatprep.subr.bf16.mxu0 0
        %1088 = vmatpush1.bf16.msra.mxu0 0
        %1089 = vmatprep.subr.bf16.mxu0 0
        %1090 = vmatpush1.bf16.msra.mxu0 0
        %1091 = vmatprep.subr.bf16.mxu0 0
        %1092 = vmatpush1.bf16.msra.mxu0 0
        %1093 = vmatprep.subr.bf16.mxu0 0
        %1094 = vmatpush1.bf16.msra.mxu0 0
        %1095 = vmatprep.subr.bf16.mxu0 0
        %1096 = vmatpush1.bf16.msra.mxu0 0
        %1097 = vmatprep.subr.bf16.mxu0 0
        %1098 = vmatpush1.bf16.msra.mxu0 0
        %1099 = vmatprep.subr.bf16.mxu0 0
        %1100 = vmatpush1.bf16.msra.mxu0 0
        %1101 = vmatprep.subr.bf16.mxu0 0
        %1102 = vmatpush1.bf16.msra.mxu0 %v1085
        %1103 = vmatprep.subr.bf16.mxu0 0
        %1104 = vmatpush2.bf16.msra.mxu0 0
        %1105 = vmatprep.subr.bf16.mxu0 0
        %1106 = vmatpush2.bf16.msra.mxu0 0
        %1107 = vmatprep.subr.bf16.mxu0 0
        %1108 = vmatpush2.bf16.msra.mxu0 0
        %1109 = vmatprep.subr.bf16.mxu0 0
        %1110 = vmatpush2.bf16.msra.mxu0 0
        %1111 = vmatprep.subr.bf16.mxu0 0
        %1112 = vmatpush2.bf16.msra.mxu0 0
        %1113 = vmatprep.subr.bf16.mxu0 0
        %1114 = vmatpush2.bf16.msra.mxu0 0
        %1115 = vmatprep.subr.bf16.mxu0 0
        %1116 = vmatpush2.bf16.msra.mxu0 0
        %1117 = vmatprep.subr.bf16.mxu0 0
        %1118 = vmatpush2.bf16.msra.mxu0 0
        %1119 = vmatprep.mubr.bf16.mxu0 0
        %1120 = vmatmul.mubr.bf16.gmra.mxu0 %v1037
        %v1121 = vpop.f32.mrf.mxu0
        %v1122 = vadd.f32 0.0, %v1121
        %v1123 = vpop.f32.mrf.mxu0
        %v1124 = vpop.f32.mrf.mxu0
        %v1125 = vadd.f32 0.0, %v1124
        %v1126 = vpop.f32.mrf.mxu0
        %1127 = vmatprep.mubr.bf16.mxu0 0
        %1128 = vmatmul.mubr.bf16.gmra.mxu0 %v1040
        %v1129 = vpop.f32.mrf.mxu0
        %v1130 = vadd.f32 0.0, %v1129
        %v1131 = vpop.f32.mrf.mxu0
        %v1132 = vpop.f32.mrf.mxu0
        %v1133 = vadd.f32 0.0, %v1132
        %v1134 = vpop.f32.mrf.mxu0
        %1135 = vmatprep.mubr.bf16.mxu0 0
        %1136 = vmatmul.mubr.bf16.gmra.mxu0 %v1043
        %v1137 = vpop.f32.mrf.mxu0
        %v1138 = vadd.f32 0.0, %v1137
        %v1139 = vpop.f32.mrf.mxu0
        %v1140 = vpop.f32.mrf.mxu0
        %v1141 = vadd.f32 0.0, %v1140
        %v1142 = vpop.f32.mrf.mxu0
        %1143 = vmatprep.mubr.bf16.mxu0 0
        %1144 = vmatmul.mubr.bf16.gmra.mxu0 %v1046
        %v1145 = vpop.f32.mrf.mxu0
        %v1146 = vadd.f32 0.0, %v1145
        %v1147 = vpop.f32.mrf.mxu0
        %v1148 = vpop.f32.mrf.mxu0
        %v1149 = vadd.f32 0.0, %v1148
        %v1150 = vpop.f32.mrf.mxu0
        %1151 = vmatprep.mubr.bf16.mxu0 0
        %1152 = vmatmul.mubr.bf16.gmra.mxu0 %v1049
        %v1153 = vpop.f32.mrf.mxu0
        %v1154 = vadd.f32 0.0, %v1153
        %v1155 = vpop.f32.mrf.mxu0
        %v1156 = vpop.f32.mrf.mxu0
        %v1157 = vadd.f32 0.0, %v1156
        %v1158 = vpop.f32.mrf.mxu0
        %1159 = vmatprep.mubr.bf16.mxu0 0
        %1160 = vmatmul.mubr.bf16.gmra.mxu0 %v1052
        %v1161 = vpop.f32.mrf.mxu0
        %v1162 = vadd.f32 0.0, %v1161
        %v1163 = vpop.f32.mrf.mxu0
        %v1164 = vpop.f32.mrf.mxu0
        %v1165 = vadd.f32 0.0, %v1164
        %v1166 = vpop.f32.mrf.mxu0
        %1167 = vmatprep.mubr.bf16.mxu0 0
        %1168 = vmatmul.mubr.bf16.gmra.mxu0 %v1055
        %v1169 = vpop.f32.mrf.mxu0
        %v1170 = vadd.f32 0.0, %v1169
        %v1171 = vpop.f32.mrf.mxu0
        %v1172 = vpop.f32.mrf.mxu0
        %v1173 = vadd.f32 0.0, %v1172
        %v1174 = vpop.f32.mrf.mxu0
        %1175 = vmatprep.mubr.bf16.mxu0 0
        %1176 = vmatmul.mubr.bf16.gmra.mxu0 %v1058
        %v1177 = vpop.f32.mrf.mxu0
        %v1178 = vadd.f32 0.0, %v1177
        %v1179 = vpop.f32.mrf.mxu0
        %v1180 = vpop.f32.mrf.mxu0
        %v1181 = vadd.f32 0.0, %v1180
        %v1182 = vpop.f32.mrf.mxu0
        %1183 = vmatprep.mubr.bf16.mxu0 0
        %1184 = vmatmul.mubr.bf16.gmra.mxu0 %v1061
        %v1185 = vpop.f32.mrf.mxu0
        %v1186 = vadd.f32 0.0, %v1185
        %v1187 = vpop.f32.mrf.mxu0
        %v1188 = vpop.f32.mrf.mxu0
        %v1189 = vadd.f32 0.0, %v1188
        %v1190 = vpop.f32.mrf.mxu0
        %1191 = vmatprep.mubr.bf16.mxu0 0
        %1192 = vmatmul.mubr.bf16.gmra.mxu0 %v1064
        %v1193 = vpop.f32.mrf.mxu0
        %v1194 = vadd.f32 0.0, %v1193
        %v1195 = vpop.f32.mrf.mxu0
        %v1196 = vpop.f32.mrf.mxu0
        %v1197 = vadd.f32 0.0, %v1196
        %v1198 = vpop.f32.mrf.mxu0
        %1199 = vmatprep.mubr.bf16.mxu0 0
        %1200 = vmatmul.mubr.bf16.gmra.mxu0 %v1067
        %v1201 = vpop.f32.mrf.mxu0
        %v1202 = vadd.f32 0.0, %v1201
        %v1203 = vpop.f32.mrf.mxu0
        %v1204 = vpop.f32.mrf.mxu0
        %v1205 = vadd.f32 0.0, %v1204
        %v1206 = vpop.f32.mrf.mxu0
        %1207 = vmatprep.mubr.bf16.mxu0 0
        %1208 = vmatmul.mubr.bf16.gmra.mxu0 %v1070
        %v1209 = vpop.f32.mrf.mxu0
        %v1210 = vadd.f32 0.0, %v1209
        %v1211 = vpop.f32.mrf.mxu0
        %v1212 = vpop.f32.mrf.mxu0
        %v1213 = vadd.f32 0.0, %v1212
        %v1214 = vpop.f32.mrf.mxu0
        %1215 = vmatprep.mubr.bf16.mxu0 0
        %1216 = vmatmul.mubr.bf16.gmra.mxu0 %v1073
        %v1217 = vpop.f32.mrf.mxu0
        %v1218 = vadd.f32 0.0, %v1217
        %v1219 = vpop.f32.mrf.mxu0
        %v1220 = vpop.f32.mrf.mxu0
        %v1221 = vadd.f32 0.0, %v1220
        %v1222 = vpop.f32.mrf.mxu0
        %1223 = vmatprep.mubr.bf16.mxu0 0
        %1224 = vmatmul.mubr.bf16.gmra.mxu0 %v1076
        %v1225 = vpop.f32.mrf.mxu0
        %v1226 = vadd.f32 0.0, %v1225
        %v1227 = vpop.f32.mrf.mxu0
        %v1228 = vpop.f32.mrf.mxu0
        %v1229 = vadd.f32 0.0, %v1228
        %v1230 = vpop.f32.mrf.mxu0
        %1231 = vmatprep.mubr.bf16.mxu0 0
        %1232 = vmatmul.mubr.bf16.gmra.mxu0 %v1079
        %v1233 = vpop.f32.mrf.mxu0
        %v1234 = vadd.f32 0.0, %v1233
        %v1235 = vpop.f32.mrf.mxu0
        %v1236 = vpop.f32.mrf.mxu0
        %v1237 = vadd.f32 0.0, %v1236
        %v1238 = vpop.f32.mrf.mxu0
        %1239 = vmatprep.mubr.bf16.mxu0 0
        %1240 = vmatmul.mubr.bf16.gmra.mxu0 %v1082
        %v1241 = vpop.f32.mrf.mxu0
        %v1242 = vadd.f32 0.0, %v1241
        %v1243 = vpop.f32.mrf.mxu0
        %v1244 = vpop.f32.mrf.mxu0
        %v1245 = vadd.f32 0.0, %v1244
        %v1246 = vpop.f32.mrf.mxu0
        %1247 = vdwg.mxu0
        %v1248 = vadd.f32 %v874, %v1122
        %v1249 = vadd.f32 %v877, %v1125
        %v1250 = vadd.f32 %v882, %v1130
        %v1251 = vadd.f32 %v885, %v1133
        %v1252 = vadd.f32 %v890, %v1138
        %v1253 = vadd.f32 %v893, %v1141
        %v1254 = vadd.f32 %v898, %v1146
        %v1255 = vadd.f32 %v901, %v1149
        %v1256 = vadd.f32 %v906, %v1154
        %v1257 = vadd.f32 %v909, %v1157
        %v1258 = vadd.f32 %v914, %v1162
        %v1259 = vadd.f32 %v917, %v1165
        %v1260 = vadd.f32 %v922, %v1170
        %v1261 = vadd.f32 %v925, %v1173
        %v1262 = vadd.f32 %v930, %v1178
        %v1263 = vadd.f32 %v933, %v1181
        %v1264 = vadd.f32 %v938, %v1186
        %v1265 = vadd.f32 %v941, %v1189
        %v1266 = vadd.f32 %v946, %v1194
        %v1267 = vadd.f32 %v949, %v1197
        %v1268 = vadd.f32 %v954, %v1202
        %v1269 = vadd.f32 %v957, %v1205
        %v1270 = vadd.f32 %v962, %v1210
        %v1271 = vadd.f32 %v965, %v1213
        %v1272 = vadd.f32 %v970, %v1218
        %v1273 = vadd.f32 %v973, %v1221
        %v1274 = vadd.f32 %v978, %v1226
        %v1275 = vadd.f32 %v981, %v1229
        %v1276 = vadd.f32 %v986, %v1234
        %v1277 = vadd.f32 %v989, %v1237
        %v1278 = vadd.f32 %v994, %v1242
        %v1279 = vadd.f32 %v997, %v1245
        %s1280 = scalar_lea.vmem %s2, 6
        %v1281 = vld [vmem:[%s1280] sm:$0x3]
        %v1282 = vrot.slane %v452, 1
        %v1283 = vsel %vm1002, %v1034, %v1282
        %v1285 = vsel %vm590, %v1283, 0
        %v1288 = vsel %vm639, %v1281, 0
        %1290 = vmatprep.subr.bf16.mxu0 0
        %1291 = vmatpush1.bf16.msra.mxu0 0
        %1292 = vmatprep.subr.bf16.mxu0 0
        %1293 = vmatpush1.bf16.msra.mxu0 0
        %1294 = vmatprep.subr.bf16.mxu0 0
        %1295 = vmatpush1.bf16.msra.mxu0 0
        %1296 = vmatprep.subr.bf16.mxu0 0
        %1297 = vmatpush1.bf16.msra.mxu0 0
        %1298 = vmatprep.subr.bf16.mxu0 0
        %1299 = vmatpush1.bf16.msra.mxu0 0
        %1300 = vmatprep.subr.bf16.mxu0 0
        %1301 = vmatpush1.bf16.msra.mxu0 0
        %1302 = vmatprep.subr.bf16.mxu0 0
        %1303 = vmatpush1.bf16.msra.mxu0 0
        %1304 = vmatprep.subr.bf16.mxu0 0
        %1305 = vmatpush1.bf16.msra.mxu0 %v1288
        %1306 = vmatprep.subr.bf16.mxu0 0
        %1307 = vmatpush2.bf16.msra.mxu0 0
        %1308 = vmatprep.subr.bf16.mxu0 0
        %1309 = vmatpush2.bf16.msra.mxu0 0
        %1310 = vmatprep.subr.bf16.mxu0 0
        %1311 = vmatpush2.bf16.msra.mxu0 0
        %1312 = vmatprep.subr.bf16.mxu0 0
        %1313 = vmatpush2.bf16.msra.mxu0 0
        %1314 = vmatprep.subr.bf16.mxu0 0
        %1315 = vmatpush2.bf16.msra.mxu0 0
        %1316 = vmatprep.subr.bf16.mxu0 0
        %1317 = vmatpush2.bf16.msra.mxu0 0
        %1318 = vmatprep.subr.bf16.mxu0 0
        %1319 = vmatpush2.bf16.msra.mxu0 0
        %1320 = vmatprep.subr.bf16.mxu0 0
        %1321 = vmatpush2.bf16.msra.mxu0 0
        %1322 = vmatprep.mubr.bf16.mxu0 0
        %1323 = vmatmul.mubr.bf16.gmra.mxu0 %v1040
        %v1324 = vpop.f32.mrf.mxu0
        %v1325 = vadd.f32 0.0, %v1324
        %v1326 = vpop.f32.mrf.mxu0
        %v1327 = vpop.f32.mrf.mxu0
        %v1328 = vadd.f32 0.0, %v1327
        %v1329 = vpop.f32.mrf.mxu0
        %1330 = vmatprep.mubr.bf16.mxu0 0
        %1331 = vmatmul.mubr.bf16.gmra.mxu0 %v1043
        %v1332 = vpop.f32.mrf.mxu0
        %v1333 = vadd.f32 0.0, %v1332
        %v1334 = vpop.f32.mrf.mxu0
        %v1335 = vpop.f32.mrf.mxu0
        %v1336 = vadd.f32 0.0, %v1335
        %v1337 = vpop.f32.mrf.mxu0
        %1338 = vmatprep.mubr.bf16.mxu0 0
        %1339 = vmatmul.mubr.bf16.gmra.mxu0 %v1046
        %v1340 = vpop.f32.mrf.mxu0
        %v1341 = vadd.f32 0.0, %v1340
        %v1342 = vpop.f32.mrf.mxu0
        %v1343 = vpop.f32.mrf.mxu0
        %v1344 = vadd.f32 0.0, %v1343
        %v1345 = vpop.f32.mrf.mxu0
        %1346 = vmatprep.mubr.bf16.mxu0 0
        %1347 = vmatmul.mubr.bf16.gmra.mxu0 %v1049
        %v1348 = vpop.f32.mrf.mxu0
        %v1349 = vadd.f32 0.0, %v1348
        %v1350 = vpop.f32.mrf.mxu0
        %v1351 = vpop.f32.mrf.mxu0
        %v1352 = vadd.f32 0.0, %v1351
        %v1353 = vpop.f32.mrf.mxu0
        %1354 = vmatprep.mubr.bf16.mxu0 0
        %1355 = vmatmul.mubr.bf16.gmra.mxu0 %v1052
        %v1356 = vpop.f32.mrf.mxu0
        %v1357 = vadd.f32 0.0, %v1356
        %v1358 = vpop.f32.mrf.mxu0
        %v1359 = vpop.f32.mrf.mxu0
        %v1360 = vadd.f32 0.0, %v1359
        %v1361 = vpop.f32.mrf.mxu0
        %1362 = vmatprep.mubr.bf16.mxu0 0
        %1363 = vmatmul.mubr.bf16.gmra.mxu0 %v1055
        %v1364 = vpop.f32.mrf.mxu0
        %v1365 = vadd.f32 0.0, %v1364
        %v1366 = vpop.f32.mrf.mxu0
        %v1367 = vpop.f32.mrf.mxu0
        %v1368 = vadd.f32 0.0, %v1367
        %v1369 = vpop.f32.mrf.mxu0
        %1370 = vmatprep.mubr.bf16.mxu0 0
        %1371 = vmatmul.mubr.bf16.gmra.mxu0 %v1058
        %v1372 = vpop.f32.mrf.mxu0
        %v1373 = vadd.f32 0.0, %v1372
        %v1374 = vpop.f32.mrf.mxu0
        %v1375 = vpop.f32.mrf.mxu0
        %v1376 = vadd.f32 0.0, %v1375
        %v1377 = vpop.f32.mrf.mxu0
        %1378 = vmatprep.mubr.bf16.mxu0 0
        %1379 = vmatmul.mubr.bf16.gmra.mxu0 %v1061
        %v1380 = vpop.f32.mrf.mxu0
        %v1381 = vadd.f32 0.0, %v1380
        %v1382 = vpop.f32.mrf.mxu0
        %v1383 = vpop.f32.mrf.mxu0
        %v1384 = vadd.f32 0.0, %v1383
        %v1385 = vpop.f32.mrf.mxu0
        %1386 = vmatprep.mubr.bf16.mxu0 0
        %1387 = vmatmul.mubr.bf16.gmra.mxu0 %v1064
        %v1388 = vpop.f32.mrf.mxu0
        %v1389 = vadd.f32 0.0, %v1388
        %v1390 = vpop.f32.mrf.mxu0
        %v1391 = vpop.f32.mrf.mxu0
        %v1392 = vadd.f32 0.0, %v1391
        %v1393 = vpop.f32.mrf.mxu0
        %1394 = vmatprep.mubr.bf16.mxu0 0
        %1395 = vmatmul.mubr.bf16.gmra.mxu0 %v1067
        %v1396 = vpop.f32.mrf.mxu0
        %v1397 = vadd.f32 0.0, %v1396
        %v1398 = vpop.f32.mrf.mxu0
        %v1399 = vpop.f32.mrf.mxu0
        %v1400 = vadd.f32 0.0, %v1399
        %v1401 = vpop.f32.mrf.mxu0
        %1402 = vmatprep.mubr.bf16.mxu0 0
        %1403 = vmatmul.mubr.bf16.gmra.mxu0 %v1070
        %v1404 = vpop.f32.mrf.mxu0
        %v1405 = vadd.f32 0.0, %v1404
        %v1406 = vpop.f32.mrf.mxu0
        %v1407 = vpop.f32.mrf.mxu0
        %v1408 = vadd.f32 0.0, %v1407
        %v1409 = vpop.f32.mrf.mxu0
        %1410 = vmatprep.mubr.bf16.mxu0 0
        %1411 = vmatmul.mubr.bf16.gmra.mxu0 %v1073
        %v1412 = vpop.f32.mrf.mxu0
        %v1413 = vadd.f32 0.0, %v1412
        %v1414 = vpop.f32.mrf.mxu0
        %v1415 = vpop.f32.mrf.mxu0
        %v1416 = vadd.f32 0.0, %v1415
        %v1417 = vpop.f32.mrf.mxu0
        %1418 = vmatprep.mubr.bf16.mxu0 0
        %1419 = vmatmul.mubr.bf16.gmra.mxu0 %v1076
        %v1420 = vpop.f32.mrf.mxu0
        %v1421 = vadd.f32 0.0, %v1420
        %v1422 = vpop.f32.mrf.mxu0
        %v1423 = vpop.f32.mrf.mxu0
        %v1424 = vadd.f32 0.0, %v1423
        %v1425 = vpop.f32.mrf.mxu0
        %1426 = vmatprep.mubr.bf16.mxu0 0
        %1427 = vmatmul.mubr.bf16.gmra.mxu0 %v1079
        %v1428 = vpop.f32.mrf.mxu0
        %v1429 = vadd.f32 0.0, %v1428
        %v1430 = vpop.f32.mrf.mxu0
        %v1431 = vpop.f32.mrf.mxu0
        %v1432 = vadd.f32 0.0, %v1431
        %v1433 = vpop.f32.mrf.mxu0
        %1434 = vmatprep.mubr.bf16.mxu0 0
        %1435 = vmatmul.mubr.bf16.gmra.mxu0 %v1082
        %v1436 = vpop.f32.mrf.mxu0
        %v1437 = vadd.f32 0.0, %v1436
        %v1438 = vpop.f32.mrf.mxu0
        %v1439 = vpop.f32.mrf.mxu0
        %v1440 = vadd.f32 0.0, %v1439
        %v1441 = vpop.f32.mrf.mxu0
        %1442 = vmatprep.mubr.bf16.mxu0 0
        %1443 = vmatmul.mubr.bf16.gmra.mxu0 %v1285
        %v1444 = vpop.f32.mrf.mxu0
        %v1445 = vadd.f32 0.0, %v1444
        %v1446 = vpop.f32.mrf.mxu0
        %v1447 = vpop.f32.mrf.mxu0
        %v1448 = vadd.f32 0.0, %v1447
        %v1449 = vpop.f32.mrf.mxu0
        %1450 = vdwg.mxu0
        %v1451 = vadd.f32 %v1248, %v1325
        %v1452 = vadd.f32 %v1249, %v1328
        %v1453 = vadd.f32 %v1250, %v1333
        %v1454 = vadd.f32 %v1251, %v1336
        %v1455 = vadd.f32 %v1252, %v1341
        %v1456 = vadd.f32 %v1253, %v1344
        %v1457 = vadd.f32 %v1254, %v1349
        %v1458 = vadd.f32 %v1255, %v1352
        %v1459 = vadd.f32 %v1256, %v1357
        %v1460 = vadd.f32 %v1257, %v1360
        %v1461 = vadd.f32 %v1258, %v1365
        %v1462 = vadd.f32 %v1259, %v1368
        %v1463 = vadd.f32 %v1260, %v1373
        %v1464 = vadd.f32 %v1261, %v1376
        %v1465 = vadd.f32 %v1262, %v1381
        %v1466 = vadd.f32 %v1263, %v1384
        %v1467 = vadd.f32 %v1264, %v1389
        %v1468 = vadd.f32 %v1265, %v1392
        %v1469 = vadd.f32 %v1266, %v1397
        %v1470 = vadd.f32 %v1267, %v1400
        %v1471 = vadd.f32 %v1268, %v1405
        %v1472 = vadd.f32 %v1269, %v1408
        %v1473 = vadd.f32 %v1270, %v1413
        %v1474 = vadd.f32 %v1271, %v1416
        %v1475 = vadd.f32 %v1272, %v1421
        %v1476 = vadd.f32 %v1273, %v1424
        %v1477 = vadd.f32 %v1274, %v1429
        %v1478 = vadd.f32 %v1275, %v1432
        %v1479 = vadd.f32 %v1276, %v1437
        %v1480 = vadd.f32 %v1277, %v1440
        %v1481 = vadd.f32 %v1278, %v1445
        %v1482 = vadd.f32 %v1279, %v1448
        %s1483 = scalar_lea.vmem %s2, 8
        %v1484 = vld [vmem:[%s1483] sm:$0x3]
        %vm1485 = vsmask.f32 6400
        %v1486 = vrot.slane %v470, 1
        %v1487 = vrot.slane %v466, 2
        %v1488 = vor.u32 %v1486, %v1487
        %v1489 = vrot.slane %v478, 1
        %v1490 = vrot.slane %v474, 2
        %v1491 = vor.u32 %v1489, %v1490
        %v1492 = vsel %vm1485, %v1488, %v1491
        %v1493 = vrot.slane %v486, 1
        %v1494 = vrot.slane %v482, 2
        %v1495 = vor.u32 %v1493, %v1494
        %v1496 = vsel %vm1485, %v1491, %v1495
        %v1497 = vrot.slane %v494, 1
        %v1498 = vrot.slane %v490, 2
        %v1499 = vor.u32 %v1497, %v1498
        %v1500 = vsel %vm1485, %v1495, %v1499
        %v1501 = vrot.slane %v502, 1
        %v1502 = vrot.slane %v498, 2
        %v1503 = vor.u32 %v1501, %v1502
        %v1504 = vsel %vm1485, %v1499, %v1503
        %v1505 = vrot.slane %v510, 1
        %v1506 = vrot.slane %v506, 2
        %v1507 = vor.u32 %v1505, %v1506
        %v1508 = vsel %vm1485, %v1503, %v1507
        %v1509 = vrot.slane %v518, 1
        %v1510 = vrot.slane %v514, 2
        %v1511 = vor.u32 %v1509, %v1510
        %v1512 = vsel %vm1485, %v1507, %v1511
        %v1513 = vrot.slane %v526, 1
        %v1514 = vrot.slane %v522, 2
        %v1515 = vor.u32 %v1513, %v1514
        %v1516 = vsel %vm1485, %v1511, %v1515
        %v1517 = vrot.slane %v534, 1
        %v1518 = vrot.slane %v530, 2
        %v1519 = vor.u32 %v1517, %v1518
        %v1520 = vsel %vm1485, %v1515, %v1519
        %v1521 = vrot.slane %v542, 1
        %v1522 = vrot.slane %v538, 2
        %v1523 = vor.u32 %v1521, %v1522
        %v1524 = vsel %vm1485, %v1519, %v1523
        %v1525 = vrot.slane %v550, 1
        %v1526 = vrot.slane %v546, 2
        %v1527 = vor.u32 %v1525, %v1526
        %v1528 = vsel %vm1485, %v1523, %v1527
        %v1529 = vrot.slane %v558, 1
        %v1530 = vrot.slane %v554, 2
        %v1531 = vor.u32 %v1529, %v1530
        %v1532 = vsel %vm1485, %v1527, %v1531
        %v1533 = vrot.slane %v566, 1
        %v1534 = vrot.slane %v562, 2
        %v1535 = vor.u32 %v1533, %v1534
        %v1536 = vsel %vm1485, %v1531, %v1535
        %v1537 = vrot.slane %v574, 1
        %v1538 = vrot.slane %v570, 2
        %v1539 = vor.u32 %v1537, %v1538
        %v1540 = vsel %vm1485, %v1535, %v1539
        %v1541 = vrot.slane %v582, 1
        %v1542 = vrot.slane %v578, 2
        %v1543 = vor.u32 %v1541, %v1542
        %v1544 = vsel %vm1485, %v1539, %v1543
        %v1545 = vshrl.u32 %v451, 16
        %v1547 = vrot.slane %v1545, 1
        %v1548 = vrot.slane %v586, 2
        %v1549 = vor.u32 %v1547, %v1548
        %v1550 = vsel %vm1485, %v1543, %v1549
        %v1552 = vshrl.u32 %v452, 16
        %v1554 = vrot.slane %v1552, 1
        %v1555 = vshll.u32 %v452, 16
        %v1557 = vrot.slane %v1555, 2
        %v1558 = vor.u32 %v1554, %v1557
        %v1559 = vsel %vm1485, %v1549, %v1558
        %v1561 = vsel %vm590, %v1492, 0
        %v1564 = vsel %vm590, %v1496, 0
        %v1567 = vsel %vm590, %v1500, 0
        %v1570 = vsel %vm590, %v1504, 0
        %v1573 = vsel %vm590, %v1508, 0
        %v1576 = vsel %vm590, %v1512, 0
        %v1579 = vsel %vm590, %v1516, 0
        %v1582 = vsel %vm590, %v1520, 0
        %v1585 = vsel %vm590, %v1524, 0
        %v1588 = vsel %vm590, %v1528, 0
        %v1591 = vsel %vm590, %v1532, 0
        %v1594 = vsel %vm590, %v1536, 0
        %v1597 = vsel %vm590, %v1540, 0
        %v1600 = vsel %vm590, %v1544, 0
        %v1603 = vsel %vm590, %v1550, 0
        %v1606 = vsel %vm590, %v1559, 0
        %v1609 = vsel %vm639, %v1484, 0
        %1611 = vmatprep.subr.bf16.mxu0 0
        %1612 = vmatpush1.bf16.msra.mxu0 0
        %1613 = vmatprep.subr.bf16.mxu0 0
        %1614 = vmatpush1.bf16.msra.mxu0 0
        %1615 = vmatprep.subr.bf16.mxu0 0
        %1616 = vmatpush1.bf16.msra.mxu0 0
        %1617 = vmatprep.subr.bf16.mxu0 0
        %1618 = vmatpush1.bf16.msra.mxu0 0
        %1619 = vmatprep.subr.bf16.mxu0 0
        %1620 = vmatpush1.bf16.msra.mxu0 0
        %1621 = vmatprep.subr.bf16.mxu0 0
        %1622 = vmatpush1.bf16.msra.mxu0 0
        %1623 = vmatprep.subr.bf16.mxu0 0
        %1624 = vmatpush1.bf16.msra.mxu0 0
        %1625 = vmatprep.subr.bf16.mxu0 0
        %1626 = vmatpush1.bf16.msra.mxu0 %v1609
        %1627 = vmatprep.subr.bf16.mxu0 0
        %1628 = vmatpush2.bf16.msra.mxu0 0
        %1629 = vmatprep.subr.bf16.mxu0 0
        %1630 = vmatpush2.bf16.msra.mxu0 0
        %1631 = vmatprep.subr.bf16.mxu0 0
        %1632 = vmatpush2.bf16.msra.mxu0 0
        %1633 = vmatprep.subr.bf16.mxu0 0
        %1634 = vmatpush2.bf16.msra.mxu0 0
        %1635 = vmatprep.subr.bf16.mxu0 0
        %1636 = vmatpush2.bf16.msra.mxu0 0
        %1637 = vmatprep.subr.bf16.mxu0 0
        %1638 = vmatpush2.bf16.msra.mxu0 0
        %1639 = vmatprep.subr.bf16.mxu0 0
        %1640 = vmatpush2.bf16.msra.mxu0 0
        %1641 = vmatprep.subr.bf16.mxu0 0
        %1642 = vmatpush2.bf16.msra.mxu0 0
        %1643 = vmatprep.mubr.bf16.mxu0 0
        %1644 = vmatmul.mubr.bf16.gmra.mxu0 %v1561
        %v1645 = vpop.f32.mrf.mxu0
        %v1646 = vadd.f32 0.0, %v1645
        %v1647 = vpop.f32.mrf.mxu0
        %v1648 = vpop.f32.mrf.mxu0
        %v1649 = vadd.f32 0.0, %v1648
        %v1650 = vpop.f32.mrf.mxu0
        %1651 = vmatprep.mubr.bf16.mxu0 0
        %1652 = vmatmul.mubr.bf16.gmra.mxu0 %v1564
        %v1653 = vpop.f32.mrf.mxu0
        %v1654 = vadd.f32 0.0, %v1653
        %v1655 = vpop.f32.mrf.mxu0
        %v1656 = vpop.f32.mrf.mxu0
        %v1657 = vadd.f32 0.0, %v1656
        %v1658 = vpop.f32.mrf.mxu0
        %1659 = vmatprep.mubr.bf16.mxu0 0
        %1660 = vmatmul.mubr.bf16.gmra.mxu0 %v1567
        %v1661 = vpop.f32.mrf.mxu0
        %v1662 = vadd.f32 0.0, %v1661
        %v1663 = vpop.f32.mrf.mxu0
        %v1664 = vpop.f32.mrf.mxu0
        %v1665 = vadd.f32 0.0, %v1664
        %v1666 = vpop.f32.mrf.mxu0
        %1667 = vmatprep.mubr.bf16.mxu0 0
        %1668 = vmatmul.mubr.bf16.gmra.mxu0 %v1570
        %v1669 = vpop.f32.mrf.mxu0
        %v1670 = vadd.f32 0.0, %v1669
        %v1671 = vpop.f32.mrf.mxu0
        %v1672 = vpop.f32.mrf.mxu0
        %v1673 = vadd.f32 0.0, %v1672
        %v1674 = vpop.f32.mrf.mxu0
        %1675 = vmatprep.mubr.bf16.mxu0 0
        %1676 = vmatmul.mubr.bf16.gmra.mxu0 %v1573
        %v1677 = vpop.f32.mrf.mxu0
        %v1678 = vadd.f32 0.0, %v1677
        %v1679 = vpop.f32.mrf.mxu0
        %v1680 = vpop.f32.mrf.mxu0
        %v1681 = vadd.f32 0.0, %v1680
        %v1682 = vpop.f32.mrf.mxu0
        %1683 = vmatprep.mubr.bf16.mxu0 0
        %1684 = vmatmul.mubr.bf16.gmra.mxu0 %v1576
        %v1685 = vpop.f32.mrf.mxu0
        %v1686 = vadd.f32 0.0, %v1685
        %v1687 = vpop.f32.mrf.mxu0
        %v1688 = vpop.f32.mrf.mxu0
        %v1689 = vadd.f32 0.0, %v1688
        %v1690 = vpop.f32.mrf.mxu0
        %1691 = vmatprep.mubr.bf16.mxu0 0
        %1692 = vmatmul.mubr.bf16.gmra.mxu0 %v1579
        %v1693 = vpop.f32.mrf.mxu0
        %v1694 = vadd.f32 0.0, %v1693
        %v1695 = vpop.f32.mrf.mxu0
        %v1696 = vpop.f32.mrf.mxu0
        %v1697 = vadd.f32 0.0, %v1696
        %v1698 = vpop.f32.mrf.mxu0
        %1699 = vmatprep.mubr.bf16.mxu0 0
        %1700 = vmatmul.mubr.bf16.gmra.mxu0 %v1582
        %v1701 = vpop.f32.mrf.mxu0
        %v1702 = vadd.f32 0.0, %v1701
        %v1703 = vpop.f32.mrf.mxu0
        %v1704 = vpop.f32.mrf.mxu0
        %v1705 = vadd.f32 0.0, %v1704
        %v1706 = vpop.f32.mrf.mxu0
        %1707 = vmatprep.mubr.bf16.mxu0 0
        %1708 = vmatmul.mubr.bf16.gmra.mxu0 %v1585
        %v1709 = vpop.f32.mrf.mxu0
        %v1710 = vadd.f32 0.0, %v1709
        %v1711 = vpop.f32.mrf.mxu0
        %v1712 = vpop.f32.mrf.mxu0
        %v1713 = vadd.f32 0.0, %v1712
        %v1714 = vpop.f32.mrf.mxu0
        %1715 = vmatprep.mubr.bf16.mxu0 0
        %1716 = vmatmul.mubr.bf16.gmra.mxu0 %v1588
        %v1717 = vpop.f32.mrf.mxu0
        %v1718 = vadd.f32 0.0, %v1717
        %v1719 = vpop.f32.mrf.mxu0
        %v1720 = vpop.f32.mrf.mxu0
        %v1721 = vadd.f32 0.0, %v1720
        %v1722 = vpop.f32.mrf.mxu0
        %1723 = vmatprep.mubr.bf16.mxu0 0
        %1724 = vmatmul.mubr.bf16.gmra.mxu0 %v1591
        %v1725 = vpop.f32.mrf.mxu0
        %v1726 = vadd.f32 0.0, %v1725
        %v1727 = vpop.f32.mrf.mxu0
        %v1728 = vpop.f32.mrf.mxu0
        %v1729 = vadd.f32 0.0, %v1728
        %v1730 = vpop.f32.mrf.mxu0
        %1731 = vmatprep.mubr.bf16.mxu0 0
        %1732 = vmatmul.mubr.bf16.gmra.mxu0 %v1594
        %v1733 = vpop.f32.mrf.mxu0
        %v1734 = vadd.f32 0.0, %v1733
        %v1735 = vpop.f32.mrf.mxu0
        %v1736 = vpop.f32.mrf.mxu0
        %v1737 = vadd.f32 0.0, %v1736
        %v1738 = vpop.f32.mrf.mxu0
        %1739 = vmatprep.mubr.bf16.mxu0 0
        %1740 = vmatmul.mubr.bf16.gmra.mxu0 %v1597
        %v1741 = vpop.f32.mrf.mxu0
        %v1742 = vadd.f32 0.0, %v1741
        %v1743 = vpop.f32.mrf.mxu0
        %v1744 = vpop.f32.mrf.mxu0
        %v1745 = vadd.f32 0.0, %v1744
        %v1746 = vpop.f32.mrf.mxu0
        %1747 = vmatprep.mubr.bf16.mxu0 0
        %1748 = vmatmul.mubr.bf16.gmra.mxu0 %v1600
        %v1749 = vpop.f32.mrf.mxu0
        %v1750 = vadd.f32 0.0, %v1749
        %v1751 = vpop.f32.mrf.mxu0
        %v1752 = vpop.f32.mrf.mxu0
        %v1753 = vadd.f32 0.0, %v1752
        %v1754 = vpop.f32.mrf.mxu0
        %1755 = vmatprep.mubr.bf16.mxu0 0
        %1756 = vmatmul.mubr.bf16.gmra.mxu0 %v1603
        %v1757 = vpop.f32.mrf.mxu0
        %v1758 = vadd.f32 0.0, %v1757
        %v1759 = vpop.f32.mrf.mxu0
        %v1760 = vpop.f32.mrf.mxu0
        %v1761 = vadd.f32 0.0, %v1760
        %v1762 = vpop.f32.mrf.mxu0
        %1763 = vmatprep.mubr.bf16.mxu0 0
        %1764 = vmatmul.mubr.bf16.gmra.mxu0 %v1606
        %v1765 = vpop.f32.mrf.mxu0
        %v1766 = vadd.f32 0.0, %v1765
        %v1767 = vpop.f32.mrf.mxu0
        %v1768 = vpop.f32.mrf.mxu0
        %v1769 = vadd.f32 0.0, %v1768
        %v1770 = vpop.f32.mrf.mxu0
        %1771 = vdwg.mxu0
        %v1772 = vadd.f32 %v1451, %v1646
        %v1773 = vadd.f32 %v1452, %v1649
        %v1774 = vadd.f32 %v1453, %v1654
        %v1775 = vadd.f32 %v1454, %v1657
        %v1776 = vadd.f32 %v1455, %v1662
        %v1777 = vadd.f32 %v1456, %v1665
        %v1778 = vadd.f32 %v1457, %v1670
        %v1779 = vadd.f32 %v1458, %v1673
        %v1780 = vadd.f32 %v1459, %v1678
        %v1781 = vadd.f32 %v1460, %v1681
        %v1782 = vadd.f32 %v1461, %v1686
        %v1783 = vadd.f32 %v1462, %v1689
        %v1784 = vadd.f32 %v1463, %v1694
        %v1785 = vadd.f32 %v1464, %v1697
        %v1786 = vadd.f32 %v1465, %v1702
        %v1787 = vadd.f32 %v1466, %v1705
        %v1788 = vadd.f32 %v1467, %v1710
        %v1789 = vadd.f32 %v1468, %v1713
        %v1790 = vadd.f32 %v1469, %v1718
        %v1791 = vadd.f32 %v1470, %v1721
        %v1792 = vadd.f32 %v1471, %v1726
        %v1793 = vadd.f32 %v1472, %v1729
        %v1794 = vadd.f32 %v1473, %v1734
        %v1795 = vadd.f32 %v1474, %v1737
        %v1796 = vadd.f32 %v1475, %v1742
        %v1797 = vadd.f32 %v1476, %v1745
        %v1798 = vadd.f32 %v1477, %v1750
        %v1799 = vadd.f32 %v1478, %v1753
        %v1800 = vadd.f32 %v1479, %v1758
        %v1801 = vadd.f32 %v1480, %v1761
        %v1802 = vadd.f32 %v1481, %v1766
        %v1803 = vadd.f32 %v1482, %v1769
        %s1804 = scalar_lea.vmem %s2, 10
        %v1805 = vld [vmem:[%s1804] sm:$0x3]
        %vm1806 = vcmask 1045504
        %v1807 = vrot.slane %v424, 2
        %v1808 = vrot.slane %v425, 2
        %v1809 = vsel %vm1806, %v1807, %v1808
        %v1810 = vrot.slane %v426, 2
        %v1811 = vsel %vm1806, %v1808, %v1810
        %v1812 = vrot.slane %v427, 2
        %v1813 = vsel %vm1806, %v1810, %v1812
        %v1814 = vrot.slane %v428, 2
        %v1815 = vsel %vm1806, %v1812, %v1814
        %v1816 = vrot.slane %v429, 2
        %v1817 = vsel %vm1806, %v1814, %v1816
        %v1818 = vrot.slane %v430, 2
        %v1819 = vsel %vm1806, %v1816, %v1818
        %v1820 = vrot.slane %v431, 2
        %v1821 = vsel %vm1806, %v1818, %v1820
        %v1822 = vrot.slane %v432, 2
        %v1823 = vsel %vm1806, %v1820, %v1822
        %v1824 = vrot.slane %v433, 2
        %v1825 = vsel %vm1806, %v1822, %v1824
        %v1826 = vrot.slane %v434, 2
        %v1827 = vsel %vm1806, %v1824, %v1826
        %v1828 = vrot.slane %v435, 2
        %v1829 = vsel %vm1806, %v1826, %v1828
        %v1830 = vrot.slane %v436, 2
        %v1831 = vsel %vm1806, %v1828, %v1830
        %v1832 = vrot.slane %v437, 2
        %v1833 = vsel %vm1806, %v1830, %v1832
        %v1834 = vrot.slane %v438, 2
        %v1835 = vsel %vm1806, %v1832, %v1834
        %v1836 = vrot.slane %v451, 2
        %v1837 = vsel %vm1806, %v1834, %v1836
        %v1838 = vrot.slane %v452, 2
        %v1839 = vsel %vm1806, %v1836, %v1838
        %v1841 = vsel %vm590, %v1809, 0
        %v1844 = vsel %vm590, %v1811, 0
        %v1847 = vsel %vm590, %v1813, 0
        %v1850 = vsel %vm590, %v1815, 0
        %v1853 = vsel %vm590, %v1817, 0
        %v1856 = vsel %vm590, %v1819, 0
        %v1859 = vsel %vm590, %v1821, 0
        %v1862 = vsel %vm590, %v1823, 0
        %v1865 = vsel %vm590, %v1825, 0
        %v1868 = vsel %vm590, %v1827, 0
        %v1871 = vsel %vm590, %v1829, 0
        %v1874 = vsel %vm590, %v1831, 0
        %v1877 = vsel %vm590, %v1833, 0
        %v1880 = vsel %vm590, %v1835, 0
        %v1883 = vsel %vm590, %v1837, 0
        %v1886 = vsel %vm590, %v1839, 0
        %v1889 = vsel %vm639, %v1805, 0
        %1891 = vmatprep.subr.bf16.mxu0 0
        %1892 = vmatpush1.bf16.msra.mxu0 0
        %1893 = vmatprep.subr.bf16.mxu0 0
        %1894 = vmatpush1.bf16.msra.mxu0 0
        %1895 = vmatprep.subr.bf16.mxu0 0
        %1896 = vmatpush1.bf16.msra.mxu0 0
        %1897 = vmatprep.subr.bf16.mxu0 0
        %1898 = vmatpush1.bf16.msra.mxu0 0
        %1899 = vmatprep.subr.bf16.mxu0 0
        %1900 = vmatpush1.bf16.msra.mxu0 0
        %1901 = vmatprep.subr.bf16.mxu0 0
        %1902 = vmatpush1.bf16.msra.mxu0 0
        %1903 = vmatprep.subr.bf16.mxu0 0
        %1904 = vmatpush1.bf16.msra.mxu0 0
        %1905 = vmatprep.subr.bf16.mxu0 0
        %1906 = vmatpush1.bf16.msra.mxu0 %v1889
        %1907 = vmatprep.subr.bf16.mxu0 0
        %1908 = vmatpush2.bf16.msra.mxu0 0
        %1909 = vmatprep.subr.bf16.mxu0 0
        %1910 = vmatpush2.bf16.msra.mxu0 0
        %1911 = vmatprep.subr.bf16.mxu0 0
        %1912 = vmatpush2.bf16.msra.mxu0 0
        %1913 = vmatprep.subr.bf16.mxu0 0
        %1914 = vmatpush2.bf16.msra.mxu0 0
        %1915 = vmatprep.subr.bf16.mxu0 0
        %1916 = vmatpush2.bf16.msra.mxu0 0
        %1917 = vmatprep.subr.bf16.mxu0 0
        %1918 = vmatpush2.bf16.msra.mxu0 0
        %1919 = vmatprep.subr.bf16.mxu0 0
        %1920 = vmatpush2.bf16.msra.mxu0 0
        %1921 = vmatprep.subr.bf16.mxu0 0
        %1922 = vmatpush2.bf16.msra.mxu0 0
        %1923 = vmatprep.mubr.bf16.mxu0 0
        %1924 = vmatmul.mubr.bf16.gmra.mxu0 %v1841
        %v1925 = vpop.f32.mrf.mxu0
        %v1926 = vadd.f32 0.0, %v1925
        %v1927 = vpop.f32.mrf.mxu0
        %v1928 = vpop.f32.mrf.mxu0
        %v1929 = vadd.f32 0.0, %v1928
        %v1930 = vpop.f32.mrf.mxu0
        %1931 = vmatprep.mubr.bf16.mxu0 0
        %1932 = vmatmul.mubr.bf16.gmra.mxu0 %v1844
        %v1933 = vpop.f32.mrf.mxu0
        %v1934 = vadd.f32 0.0, %v1933
        %v1935 = vpop.f32.mrf.mxu0
        %v1936 = vpop.f32.mrf.mxu0
        %v1937 = vadd.f32 0.0, %v1936
        %v1938 = vpop.f32.mrf.mxu0
        %1939 = vmatprep.mubr.bf16.mxu0 0
        %1940 = vmatmul.mubr.bf16.gmra.mxu0 %v1847
        %v1941 = vpop.f32.mrf.mxu0
        %v1942 = vadd.f32 0.0, %v1941
        %v1943 = vpop.f32.mrf.mxu0
        %v1944 = vpop.f32.mrf.mxu0
        %v1945 = vadd.f32 0.0, %v1944
        %v1946 = vpop.f32.mrf.mxu0
        %1947 = vmatprep.mubr.bf16.mxu0 0
        %1948 = vmatmul.mubr.bf16.gmra.mxu0 %v1850
        %v1949 = vpop.f32.mrf.mxu0
        %v1950 = vadd.f32 0.0, %v1949
        %v1951 = vpop.f32.mrf.mxu0
        %v1952 = vpop.f32.mrf.mxu0
        %v1953 = vadd.f32 0.0, %v1952
        %v1954 = vpop.f32.mrf.mxu0
        %1955 = vmatprep.mubr.bf16.mxu0 0
        %1956 = vmatmul.mubr.bf16.gmra.mxu0 %v1853
        %v1957 = vpop.f32.mrf.mxu0
        %v1958 = vadd.f32 0.0, %v1957
        %v1959 = vpop.f32.mrf.mxu0
        %v1960 = vpop.f32.mrf.mxu0
        %v1961 = vadd.f32 0.0, %v1960
        %v1962 = vpop.f32.mrf.mxu0
        %1963 = vmatprep.mubr.bf16.mxu0 0
        %1964 = vmatmul.mubr.bf16.gmra.mxu0 %v1856
        %v1965 = vpop.f32.mrf.mxu0
        %v1966 = vadd.f32 0.0, %v1965
        %v1967 = vpop.f32.mrf.mxu0
        %v1968 = vpop.f32.mrf.mxu0
        %v1969 = vadd.f32 0.0, %v1968
        %v1970 = vpop.f32.mrf.mxu0
        %1971 = vmatprep.mubr.bf16.mxu0 0
        %1972 = vmatmul.mubr.bf16.gmra.mxu0 %v1859
        %v1973 = vpop.f32.mrf.mxu0
        %v1974 = vadd.f32 0.0, %v1973
        %v1975 = vpop.f32.mrf.mxu0
        %v1976 = vpop.f32.mrf.mxu0
        %v1977 = vadd.f32 0.0, %v1976
        %v1978 = vpop.f32.mrf.mxu0
        %1979 = vmatprep.mubr.bf16.mxu0 0
        %1980 = vmatmul.mubr.bf16.gmra.mxu0 %v1862
        %v1981 = vpop.f32.mrf.mxu0
        %v1982 = vadd.f32 0.0, %v1981
        %v1983 = vpop.f32.mrf.mxu0
        %v1984 = vpop.f32.mrf.mxu0
        %v1985 = vadd.f32 0.0, %v1984
        %v1986 = vpop.f32.mrf.mxu0
        %1987 = vmatprep.mubr.bf16.mxu0 0
        %1988 = vmatmul.mubr.bf16.gmra.mxu0 %v1865
        %v1989 = vpop.f32.mrf.mxu0
        %v1990 = vadd.f32 0.0, %v1989
        %v1991 = vpop.f32.mrf.mxu0
        %v1992 = vpop.f32.mrf.mxu0
        %v1993 = vadd.f32 0.0, %v1992
        %v1994 = vpop.f32.mrf.mxu0
        %1995 = vmatprep.mubr.bf16.mxu0 0
        %1996 = vmatmul.mubr.bf16.gmra.mxu0 %v1868
        %v1997 = vpop.f32.mrf.mxu0
        %v1998 = vadd.f32 0.0, %v1997
        %v1999 = vpop.f32.mrf.mxu0
        %v2000 = vpop.f32.mrf.mxu0
        %v2001 = vadd.f32 0.0, %v2000
        %v2002 = vpop.f32.mrf.mxu0
        %2003 = vmatprep.mubr.bf16.mxu0 0
        %2004 = vmatmul.mubr.bf16.gmra.mxu0 %v1871
        %v2005 = vpop.f32.mrf.mxu0
        %v2006 = vadd.f32 0.0, %v2005
        %v2007 = vpop.f32.mrf.mxu0
        %v2008 = vpop.f32.mrf.mxu0
        %v2009 = vadd.f32 0.0, %v2008
        %v2010 = vpop.f32.mrf.mxu0
        %2011 = vmatprep.mubr.bf16.mxu0 0
        %2012 = vmatmul.mubr.bf16.gmra.mxu0 %v1874
        %v2013 = vpop.f32.mrf.mxu0
        %v2014 = vadd.f32 0.0, %v2013
        %v2015 = vpop.f32.mrf.mxu0
        %v2016 = vpop.f32.mrf.mxu0
        %v2017 = vadd.f32 0.0, %v2016
        %v2018 = vpop.f32.mrf.mxu0
        %2019 = vmatprep.mubr.bf16.mxu0 0
        %2020 = vmatmul.mubr.bf16.gmra.mxu0 %v1877
        %v2021 = vpop.f32.mrf.mxu0
        %v2022 = vadd.f32 0.0, %v2021
        %v2023 = vpop.f32.mrf.mxu0
        %v2024 = vpop.f32.mrf.mxu0
        %v2025 = vadd.f32 0.0, %v2024
        %v2026 = vpop.f32.mrf.mxu0
        %2027 = vmatprep.mubr.bf16.mxu0 0
        %2028 = vmatmul.mubr.bf16.gmra.mxu0 %v1880
        %v2029 = vpop.f32.mrf.mxu0
        %v2030 = vadd.f32 0.0, %v2029
        %v2031 = vpop.f32.mrf.mxu0
        %v2032 = vpop.f32.mrf.mxu0
        %v2033 = vadd.f32 0.0, %v2032
        %v2034 = vpop.f32.mrf.mxu0
        %2035 = vmatprep.mubr.bf16.mxu0 0
        %2036 = vmatmul.mubr.bf16.gmra.mxu0 %v1883
        %v2037 = vpop.f32.mrf.mxu0
        %v2038 = vadd.f32 0.0, %v2037
        %v2039 = vpop.f32.mrf.mxu0
        %v2040 = vpop.f32.mrf.mxu0
        %v2041 = vadd.f32 0.0, %v2040
        %v2042 = vpop.f32.mrf.mxu0
        %2043 = vmatprep.mubr.bf16.mxu0 0
        %2044 = vmatmul.mubr.bf16.gmra.mxu0 %v1886
        %v2045 = vpop.f32.mrf.mxu0
        %v2046 = vadd.f32 0.0, %v2045
        %v2047 = vpop.f32.mrf.mxu0
        %v2048 = vpop.f32.mrf.mxu0
        %v2049 = vadd.f32 0.0, %v2048
        %v2050 = vpop.f32.mrf.mxu0
        %2051 = vdwg.mxu0
        %v2052 = vadd.f32 %v1772, %v1926
        %v2053 = vadd.f32 %v1773, %v1929
        %v2054 = vadd.f32 %v1774, %v1934
        %v2055 = vadd.f32 %v1775, %v1937
        %v2056 = vadd.f32 %v1776, %v1942
        %v2057 = vadd.f32 %v1777, %v1945
        %v2058 = vadd.f32 %v1778, %v1950
        %v2059 = vadd.f32 %v1779, %v1953
        %v2060 = vadd.f32 %v1780, %v1958
        %v2061 = vadd.f32 %v1781, %v1961
        %v2062 = vadd.f32 %v1782, %v1966
        %v2063 = vadd.f32 %v1783, %v1969
        %v2064 = vadd.f32 %v1784, %v1974
        %v2065 = vadd.f32 %v1785, %v1977
        %v2066 = vadd.f32 %v1786, %v1982
        %v2067 = vadd.f32 %v1787, %v1985
        %v2068 = vadd.f32 %v1788, %v1990
        %v2069 = vadd.f32 %v1789, %v1993
        %v2070 = vadd.f32 %v1790, %v1998
        %v2071 = vadd.f32 %v1791, %v2001
        %v2072 = vadd.f32 %v1792, %v2006
        %v2073 = vadd.f32 %v1793, %v2009
        %v2074 = vadd.f32 %v1794, %v2014
        %v2075 = vadd.f32 %v1795, %v2017
        %v2076 = vadd.f32 %v1796, %v2022
        %v2077 = vadd.f32 %v1797, %v2025
        %v2078 = vadd.f32 %v1798, %v2030
        %v2079 = vadd.f32 %v1799, %v2033
        %v2080 = vadd.f32 %v1800, %v2038
        %v2081 = vadd.f32 %v1801, %v2041
        %v2082 = vadd.f32 %v1802, %v2046
        %v2083 = vadd.f32 %v1803, %v2049
        %s2084 = scalar_lea.vmem %s2, 12
        %v2085 = vld [vmem:[%s2084] sm:$0x3]
        %v2086 = vrot.slane %v453, 2
        %v2087 = vsel %vm1806, %v1838, %v2086
        %v2089 = vsel %vm590, %v2087, 0
        %v2092 = vsel %vm639, %v2085, 0
        %2094 = vmatprep.subr.bf16.mxu0 0
        %2095 = vmatpush1.bf16.msra.mxu0 0
        %2096 = vmatprep.subr.bf16.mxu0 0
        %2097 = vmatpush1.bf16.msra.mxu0 0
        %2098 = vmatprep.subr.bf16.mxu0 0
        %2099 = vmatpush1.bf16.msra.mxu0 0
        %2100 = vmatprep.subr.bf16.mxu0 0
        %2101 = vmatpush1.bf16.msra.mxu0 0
        %2102 = vmatprep.subr.bf16.mxu0 0
        %2103 = vmatpush1.bf16.msra.mxu0 0
        %2104 = vmatprep.subr.bf16.mxu0 0
        %2105 = vmatpush1.bf16.msra.mxu0 0
        %2106 = vmatprep.subr.bf16.mxu0 0
        %2107 = vmatpush1.bf16.msra.mxu0 0
        %2108 = vmatprep.subr.bf16.mxu0 0
        %2109 = vmatpush1.bf16.msra.mxu0 %v2092
        %2110 = vmatprep.subr.bf16.mxu0 0
        %2111 = vmatpush2.bf16.msra.mxu0 0
        %2112 = vmatprep.subr.bf16.mxu0 0
        %2113 = vmatpush2.bf16.msra.mxu0 0
        %2114 = vmatprep.subr.bf16.mxu0 0
        %2115 = vmatpush2.bf16.msra.mxu0 0
        %2116 = vmatprep.subr.bf16.mxu0 0
        %2117 = vmatpush2.bf16.msra.mxu0 0
        %2118 = vmatprep.subr.bf16.mxu0 0
        %2119 = vmatpush2.bf16.msra.mxu0 0
        %2120 = vmatprep.subr.bf16.mxu0 0
        %2121 = vmatpush2.bf16.msra.mxu0 0
        %2122 = vmatprep.subr.bf16.mxu0 0
        %2123 = vmatpush2.bf16.msra.mxu0 0
        %2124 = vmatprep.subr.bf16.mxu0 0
        %2125 = vmatpush2.bf16.msra.mxu0 0
        %2126 = vmatprep.mubr.bf16.mxu0 0
        %2127 = vmatmul.mubr.bf16.gmra.mxu0 %v1844
        %v2128 = vpop.f32.mrf.mxu0
        %v2129 = vadd.f32 0.0, %v2128
        %v2130 = vpop.f32.mrf.mxu0
        %v2131 = vpop.f32.mrf.mxu0
        %v2132 = vadd.f32 0.0, %v2131
        %v2133 = vpop.f32.mrf.mxu0
        %2134 = vmatprep.mubr.bf16.mxu0 0
        %2135 = vmatmul.mubr.bf16.gmra.mxu0 %v1847
        %v2136 = vpop.f32.mrf.mxu0
        %v2137 = vadd.f32 0.0, %v2136
        %v2138 = vpop.f32.mrf.mxu0
        %v2139 = vpop.f32.mrf.mxu0
        %v2140 = vadd.f32 0.0, %v2139
        %v2141 = vpop.f32.mrf.mxu0
        %2142 = vmatprep.mubr.bf16.mxu0 0
        %2143 = vmatmul.mubr.bf16.gmra.mxu0 %v1850
        %v2144 = vpop.f32.mrf.mxu0
        %v2145 = vadd.f32 0.0, %v2144
        %v2146 = vpop.f32.mrf.mxu0
        %v2147 = vpop.f32.mrf.mxu0
        %v2148 = vadd.f32 0.0, %v2147
        %v2149 = vpop.f32.mrf.mxu0
        %2150 = vmatprep.mubr.bf16.mxu0 0
        %2151 = vmatmul.mubr.bf16.gmra.mxu0 %v1853
        %v2152 = vpop.f32.mrf.mxu0
        %v2153 = vadd.f32 0.0, %v2152
        %v2154 = vpop.f32.mrf.mxu0
        %v2155 = vpop.f32.mrf.mxu0
        %v2156 = vadd.f32 0.0, %v2155
        %v2157 = vpop.f32.mrf.mxu0
        %2158 = vmatprep.mubr.bf16.mxu0 0
        %2159 = vmatmul.mubr.bf16.gmra.mxu0 %v1856
        %v2160 = vpop.f32.mrf.mxu0
        %v2161 = vadd.f32 0.0, %v2160
        %v2162 = vpop.f32.mrf.mxu0
        %v2163 = vpop.f32.mrf.mxu0
        %v2164 = vadd.f32 0.0, %v2163
        %v2165 = vpop.f32.mrf.mxu0
        %2166 = vmatprep.mubr.bf16.mxu0 0
        %2167 = vmatmul.mubr.bf16.gmra.mxu0 %v1859
        %v2168 = vpop.f32.mrf.mxu0
        %v2169 = vadd.f32 0.0, %v2168
        %v2170 = vpop.f32.mrf.mxu0
        %v2171 = vpop.f32.mrf.mxu0
        %v2172 = vadd.f32 0.0, %v2171
        %v2173 = vpop.f32.mrf.mxu0
        %2174 = vmatprep.mubr.bf16.mxu0 0
        %2175 = vmatmul.mubr.bf16.gmra.mxu0 %v1862
        %v2176 = vpop.f32.mrf.mxu0
        %v2177 = vadd.f32 0.0, %v2176
        %v2178 = vpop.f32.mrf.mxu0
        %v2179 = vpop.f32.mrf.mxu0
        %v2180 = vadd.f32 0.0, %v2179
        %v2181 = vpop.f32.mrf.mxu0
        %2182 = vmatprep.mubr.bf16.mxu0 0
        %2183 = vmatmul.mubr.bf16.gmra.mxu0 %v1865
        %v2184 = vpop.f32.mrf.mxu0
        %v2185 = vadd.f32 0.0, %v2184
        %v2186 = vpop.f32.mrf.mxu0
        %v2187 = vpop.f32.mrf.mxu0
        %v2188 = vadd.f32 0.0, %v2187
        %v2189 = vpop.f32.mrf.mxu0
        %2190 = vmatprep.mubr.bf16.mxu0 0
        %2191 = vmatmul.mubr.bf16.gmra.mxu0 %v1868
        %v2192 = vpop.f32.mrf.mxu0
        %v2193 = vadd.f32 0.0, %v2192
        %v2194 = vpop.f32.mrf.mxu0
        %v2195 = vpop.f32.mrf.mxu0
        %v2196 = vadd.f32 0.0, %v2195
        %v2197 = vpop.f32.mrf.mxu0
        %2198 = vmatprep.mubr.bf16.mxu0 0
        %2199 = vmatmul.mubr.bf16.gmra.mxu0 %v1871
        %v2200 = vpop.f32.mrf.mxu0
        %v2201 = vadd.f32 0.0, %v2200
        %v2202 = vpop.f32.mrf.mxu0
        %v2203 = vpop.f32.mrf.mxu0
        %v2204 = vadd.f32 0.0, %v2203
        %v2205 = vpop.f32.mrf.mxu0
        %2206 = vmatprep.mubr.bf16.mxu0 0
        %2207 = vmatmul.mubr.bf16.gmra.mxu0 %v1874
        %v2208 = vpop.f32.mrf.mxu0
        %v2209 = vadd.f32 0.0, %v2208
        %v2210 = vpop.f32.mrf.mxu0
        %v2211 = vpop.f32.mrf.mxu0
        %v2212 = vadd.f32 0.0, %v2211
        %v2213 = vpop.f32.mrf.mxu0
        %2214 = vmatprep.mubr.bf16.mxu0 0
        %2215 = vmatmul.mubr.bf16.gmra.mxu0 %v1877
        %v2216 = vpop.f32.mrf.mxu0
        %v2217 = vadd.f32 0.0, %v2216
        %v2218 = vpop.f32.mrf.mxu0
        %v2219 = vpop.f32.mrf.mxu0
        %v2220 = vadd.f32 0.0, %v2219
        %v2221 = vpop.f32.mrf.mxu0
        %2222 = vmatprep.mubr.bf16.mxu0 0
        %2223 = vmatmul.mubr.bf16.gmra.mxu0 %v1880
        %v2224 = vpop.f32.mrf.mxu0
        %v2225 = vadd.f32 0.0, %v2224
        %v2226 = vpop.f32.mrf.mxu0
        %v2227 = vpop.f32.mrf.mxu0
        %v2228 = vadd.f32 0.0, %v2227
        %v2229 = vpop.f32.mrf.mxu0
        %2230 = vmatprep.mubr.bf16.mxu0 0
        %2231 = vmatmul.mubr.bf16.gmra.mxu0 %v1883
        %v2232 = vpop.f32.mrf.mxu0
        %v2233 = vadd.f32 0.0, %v2232
        %v2234 = vpop.f32.mrf.mxu0
        %v2235 = vpop.f32.mrf.mxu0
        %v2236 = vadd.f32 0.0, %v2235
        %v2237 = vpop.f32.mrf.mxu0
        %2238 = vmatprep.mubr.bf16.mxu0 0
        %2239 = vmatmul.mubr.bf16.gmra.mxu0 %v1886
        %v2240 = vpop.f32.mrf.mxu0
        %v2241 = vadd.f32 0.0, %v2240
        %v2242 = vpop.f32.mrf.mxu0
        %v2243 = vpop.f32.mrf.mxu0
        %v2244 = vadd.f32 0.0, %v2243
        %v2245 = vpop.f32.mrf.mxu0
        %2246 = vmatprep.mubr.bf16.mxu0 0
        %2247 = vmatmul.mubr.bf16.gmra.mxu0 %v2089
        %v2248 = vpop.f32.mrf.mxu0
        %v2249 = vadd.f32 0.0, %v2248
        %v2250 = vpop.f32.mrf.mxu0
        %v2251 = vpop.f32.mrf.mxu0
        %v2252 = vadd.f32 0.0, %v2251
        %v2253 = vpop.f32.mrf.mxu0
        %2254 = vdwg.mxu0
        %v2255 = vadd.f32 %v2052, %v2129
        %v2256 = vadd.f32 %v2053, %v2132
        %v2257 = vadd.f32 %v2054, %v2137
        %v2258 = vadd.f32 %v2055, %v2140
        %v2259 = vadd.f32 %v2056, %v2145
        %v2260 = vadd.f32 %v2057, %v2148
        %v2261 = vadd.f32 %v2058, %v2153
        %v2262 = vadd.f32 %v2059, %v2156
        %v2263 = vadd.f32 %v2060, %v2161
        %v2264 = vadd.f32 %v2061, %v2164
        %v2265 = vadd.f32 %v2062, %v2169
        %v2266 = vadd.f32 %v2063, %v2172
        %v2267 = vadd.f32 %v2064, %v2177
        %v2268 = vadd.f32 %v2065, %v2180
        %v2269 = vadd.f32 %v2066, %v2185
        %v2270 = vadd.f32 %v2067, %v2188
        %v2271 = vadd.f32 %v2068, %v2193
        %v2272 = vadd.f32 %v2069, %v2196
        %v2273 = vadd.f32 %v2070, %v2201
        %v2274 = vadd.f32 %v2071, %v2204
        %v2275 = vadd.f32 %v2072, %v2209
        %v2276 = vadd.f32 %v2073, %v2212
        %v2277 = vadd.f32 %v2074, %v2217
        %v2278 = vadd.f32 %v2075, %v2220
        %v2279 = vadd.f32 %v2076, %v2225
        %v2280 = vadd.f32 %v2077, %v2228
        %v2281 = vadd.f32 %v2078, %v2233
        %v2282 = vadd.f32 %v2079, %v2236
        %v2283 = vadd.f32 %v2080, %v2241
        %v2284 = vadd.f32 %v2081, %v2244
        %v2285 = vadd.f32 %v2082, %v2249
        %v2286 = vadd.f32 %v2083, %v2252
        %s2287 = scalar_lea.vmem %s2, 14
        %v2288 = vld [vmem:[%s2287] sm:$0x3]
        %vm2289 = vsmask.f32 5376
        %v2290 = vrot.slane %v478, 2
        %v2291 = vrot.slane %v474, 3
        %v2292 = vor.u32 %v2290, %v2291
        %v2293 = vrot.slane %v486, 2
        %v2294 = vrot.slane %v482, 3
        %v2295 = vor.u32 %v2293, %v2294
        %v2296 = vsel %vm2289, %v2292, %v2295
        %v2297 = vrot.slane %v494, 2
        %v2298 = vrot.slane %v490, 3
        %v2299 = vor.u32 %v2297, %v2298
        %v2300 = vsel %vm2289, %v2295, %v2299
        %v2301 = vrot.slane %v502, 2
        %v2302 = vrot.slane %v498, 3
        %v2303 = vor.u32 %v2301, %v2302
        %v2304 = vsel %vm2289, %v2299, %v2303
        %v2305 = vrot.slane %v510, 2
        %v2306 = vrot.slane %v506, 3
        %v2307 = vor.u32 %v2305, %v2306
        %v2308 = vsel %vm2289, %v2303, %v2307
        %v2309 = vrot.slane %v518, 2
        %v2310 = vrot.slane %v514, 3
        %v2311 = vor.u32 %v2309, %v2310
        %v2312 = vsel %vm2289, %v2307, %v2311
        %v2313 = vrot.slane %v526, 2
        %v2314 = vrot.slane %v522, 3
        %v2315 = vor.u32 %v2313, %v2314
        %v2316 = vsel %vm2289, %v2311, %v2315
        %v2317 = vrot.slane %v534, 2
        %v2318 = vrot.slane %v530, 3
        %v2319 = vor.u32 %v2317, %v2318
        %v2320 = vsel %vm2289, %v2315, %v2319
        %v2321 = vrot.slane %v542, 2
        %v2322 = vrot.slane %v538, 3
        %v2323 = vor.u32 %v2321, %v2322
        %v2324 = vsel %vm2289, %v2319, %v2323
        %v2325 = vrot.slane %v550, 2
        %v2326 = vrot.slane %v546, 3
        %v2327 = vor.u32 %v2325, %v2326
        %v2328 = vsel %vm2289, %v2323, %v2327
        %v2329 = vrot.slane %v558, 2
        %v2330 = vrot.slane %v554, 3
        %v2331 = vor.u32 %v2329, %v2330
        %v2332 = vsel %vm2289, %v2327, %v2331
        %v2333 = vrot.slane %v566, 2
        %v2334 = vrot.slane %v562, 3
        %v2335 = vor.u32 %v2333, %v2334
        %v2336 = vsel %vm2289, %v2331, %v2335
        %v2337 = vrot.slane %v574, 2
        %v2338 = vrot.slane %v570, 3
        %v2339 = vor.u32 %v2337, %v2338
        %v2340 = vsel %vm2289, %v2335, %v2339
        %v2341 = vrot.slane %v582, 2
        %v2342 = vrot.slane %v578, 3
        %v2343 = vor.u32 %v2341, %v2342
        %v2344 = vsel %vm2289, %v2339, %v2343
        %v2345 = vrot.slane %v1545, 2
        %v2346 = vrot.slane %v586, 3
        %v2347 = vor.u32 %v2345, %v2346
        %v2348 = vsel %vm2289, %v2343, %v2347
        %v2349 = vrot.slane %v1552, 2
        %v2350 = vrot.slane %v1555, 3
        %v2351 = vor.u32 %v2349, %v2350
        %v2352 = vsel %vm2289, %v2347, %v2351
        %v2354 = vshrl.u32 %v453, 16
        %v2356 = vrot.slane %v2354, 2
        %v2357 = vshll.u32 %v453, 16
        %v2359 = vrot.slane %v2357, 3
        %v2360 = vor.u32 %v2356, %v2359
        %v2361 = vsel %vm2289, %v2351, %v2360
        %v2363 = vsel %vm590, %v2296, 0
        %v2366 = vsel %vm590, %v2300, 0
        %v2369 = vsel %vm590, %v2304, 0
        %v2372 = vsel %vm590, %v2308, 0
        %v2375 = vsel %vm590, %v2312, 0
        %v2378 = vsel %vm590, %v2316, 0
        %v2381 = vsel %vm590, %v2320, 0
        %v2384 = vsel %vm590, %v2324, 0
        %v2387 = vsel %vm590, %v2328, 0
        %v2390 = vsel %vm590, %v2332, 0
        %v2393 = vsel %vm590, %v2336, 0
        %v2396 = vsel %vm590, %v2340, 0
        %v2399 = vsel %vm590, %v2344, 0
        %v2402 = vsel %vm590, %v2348, 0
        %v2405 = vsel %vm590, %v2352, 0
        %v2408 = vsel %vm590, %v2361, 0
        %v2411 = vsel %vm639, %v2288, 0
        %2413 = vmatprep.subr.bf16.mxu0 0
        %2414 = vmatpush1.bf16.msra.mxu0 0
        %2415 = vmatprep.subr.bf16.mxu0 0
        %2416 = vmatpush1.bf16.msra.mxu0 0
        %2417 = vmatprep.subr.bf16.mxu0 0
        %2418 = vmatpush1.bf16.msra.mxu0 0
        %2419 = vmatprep.subr.bf16.mxu0 0
        %2420 = vmatpush1.bf16.msra.mxu0 0
        %2421 = vmatprep.subr.bf16.mxu0 0
        %2422 = vmatpush1.bf16.msra.mxu0 0
        %2423 = vmatprep.subr.bf16.mxu0 0
        %2424 = vmatpush1.bf16.msra.mxu0 0
        %2425 = vmatprep.subr.bf16.mxu0 0
        %2426 = vmatpush1.bf16.msra.mxu0 0
        %2427 = vmatprep.subr.bf16.mxu0 0
        %2428 = vmatpush1.bf16.msra.mxu0 %v2411
        %2429 = vmatprep.subr.bf16.mxu0 0
        %2430 = vmatpush2.bf16.msra.mxu0 0
        %2431 = vmatprep.subr.bf16.mxu0 0
        %2432 = vmatpush2.bf16.msra.mxu0 0
        %2433 = vmatprep.subr.bf16.mxu0 0
        %2434 = vmatpush2.bf16.msra.mxu0 0
        %2435 = vmatprep.subr.bf16.mxu0 0
        %2436 = vmatpush2.bf16.msra.mxu0 0
        %2437 = vmatprep.subr.bf16.mxu0 0
        %2438 = vmatpush2.bf16.msra.mxu0 0
        %2439 = vmatprep.subr.bf16.mxu0 0
        %2440 = vmatpush2.bf16.msra.mxu0 0
        %2441 = vmatprep.subr.bf16.mxu0 0
        %2442 = vmatpush2.bf16.msra.mxu0 0
        %2443 = vmatprep.subr.bf16.mxu0 0
        %2444 = vmatpush2.bf16.msra.mxu0 0
        %2445 = vmatprep.mubr.bf16.mxu0 0
        %2446 = vmatmul.mubr.bf16.gmra.mxu0 %v2363
        %v2447 = vpop.f32.mrf.mxu0
        %v2448 = vadd.f32 0.0, %v2447
        %v2449 = vpop.f32.mrf.mxu0
        %v2450 = vpop.f32.mrf.mxu0
        %v2451 = vadd.f32 0.0, %v2450
        %v2452 = vpop.f32.mrf.mxu0
        %2453 = vmatprep.mubr.bf16.mxu0 0
        %2454 = vmatmul.mubr.bf16.gmra.mxu0 %v2366
        %v2455 = vpop.f32.mrf.mxu0
        %v2456 = vadd.f32 0.0, %v2455
        %v2457 = vpop.f32.mrf.mxu0
        %v2458 = vpop.f32.mrf.mxu0
        %v2459 = vadd.f32 0.0, %v2458
        %v2460 = vpop.f32.mrf.mxu0
        %2461 = vmatprep.mubr.bf16.mxu0 0
        %2462 = vmatmul.mubr.bf16.gmra.mxu0 %v2369
        %v2463 = vpop.f32.mrf.mxu0
        %v2464 = vadd.f32 0.0, %v2463
        %v2465 = vpop.f32.mrf.mxu0
        %v2466 = vpop.f32.mrf.mxu0
        %v2467 = vadd.f32 0.0, %v2466
        %v2468 = vpop.f32.mrf.mxu0
        %2469 = vmatprep.mubr.bf16.mxu0 0
        %2470 = vmatmul.mubr.bf16.gmra.mxu0 %v2372
        %v2471 = vpop.f32.mrf.mxu0
        %v2472 = vadd.f32 0.0, %v2471
        %v2473 = vpop.f32.mrf.mxu0
        %v2474 = vpop.f32.mrf.mxu0
        %v2475 = vadd.f32 0.0, %v2474
        %v2476 = vpop.f32.mrf.mxu0
        %2477 = vmatprep.mubr.bf16.mxu0 0
        %2478 = vmatmul.mubr.bf16.gmra.mxu0 %v2375
        %v2479 = vpop.f32.mrf.mxu0
        %v2480 = vadd.f32 0.0, %v2479
        %v2481 = vpop.f32.mrf.mxu0
        %v2482 = vpop.f32.mrf.mxu0
        %v2483 = vadd.f32 0.0, %v2482
        %v2484 = vpop.f32.mrf.mxu0
        %2485 = vmatprep.mubr.bf16.mxu0 0
        %2486 = vmatmul.mubr.bf16.gmra.mxu0 %v2378
        %v2487 = vpop.f32.mrf.mxu0
        %v2488 = vadd.f32 0.0, %v2487
        %v2489 = vpop.f32.mrf.mxu0
        %v2490 = vpop.f32.mrf.mxu0
        %v2491 = vadd.f32 0.0, %v2490
        %v2492 = vpop.f32.mrf.mxu0
        %2493 = vmatprep.mubr.bf16.mxu0 0
        %2494 = vmatmul.mubr.bf16.gmra.mxu0 %v2381
        %v2495 = vpop.f32.mrf.mxu0
        %v2496 = vadd.f32 0.0, %v2495
        %v2497 = vpop.f32.mrf.mxu0
        %v2498 = vpop.f32.mrf.mxu0
        %v2499 = vadd.f32 0.0, %v2498
        %v2500 = vpop.f32.mrf.mxu0
        %2501 = vmatprep.mubr.bf16.mxu0 0
        %2502 = vmatmul.mubr.bf16.gmra.mxu0 %v2384
        %v2503 = vpop.f32.mrf.mxu0
        %v2504 = vadd.f32 0.0, %v2503
        %v2505 = vpop.f32.mrf.mxu0
        %v2506 = vpop.f32.mrf.mxu0
        %v2507 = vadd.f32 0.0, %v2506
        %v2508 = vpop.f32.mrf.mxu0
        %2509 = vmatprep.mubr.bf16.mxu0 0
        %2510 = vmatmul.mubr.bf16.gmra.mxu0 %v2387
        %v2511 = vpop.f32.mrf.mxu0
        %v2512 = vadd.f32 0.0, %v2511
        %v2513 = vpop.f32.mrf.mxu0
        %v2514 = vpop.f32.mrf.mxu0
        %v2515 = vadd.f32 0.0, %v2514
        %v2516 = vpop.f32.mrf.mxu0
        %2517 = vmatprep.mubr.bf16.mxu0 0
        %2518 = vmatmul.mubr.bf16.gmra.mxu0 %v2390
        %v2519 = vpop.f32.mrf.mxu0
        %v2520 = vadd.f32 0.0, %v2519
        %v2521 = vpop.f32.mrf.mxu0
        %v2522 = vpop.f32.mrf.mxu0
        %v2523 = vadd.f32 0.0, %v2522
        %v2524 = vpop.f32.mrf.mxu0
        %2525 = vmatprep.mubr.bf16.mxu0 0
        %2526 = vmatmul.mubr.bf16.gmra.mxu0 %v2393
        %v2527 = vpop.f32.mrf.mxu0
        %v2528 = vadd.f32 0.0, %v2527
        %v2529 = vpop.f32.mrf.mxu0
        %v2530 = vpop.f32.mrf.mxu0
        %v2531 = vadd.f32 0.0, %v2530
        %v2532 = vpop.f32.mrf.mxu0
        %2533 = vmatprep.mubr.bf16.mxu0 0
        %2534 = vmatmul.mubr.bf16.gmra.mxu0 %v2396
        %v2535 = vpop.f32.mrf.mxu0
        %v2536 = vadd.f32 0.0, %v2535
        %v2537 = vpop.f32.mrf.mxu0
        %v2538 = vpop.f32.mrf.mxu0
        %v2539 = vadd.f32 0.0, %v2538
        %v2540 = vpop.f32.mrf.mxu0
        %2541 = vmatprep.mubr.bf16.mxu0 0
        %2542 = vmatmul.mubr.bf16.gmra.mxu0 %v2399
        %v2543 = vpop.f32.mrf.mxu0
        %v2544 = vadd.f32 0.0, %v2543
        %v2545 = vpop.f32.mrf.mxu0
        %v2546 = vpop.f32.mrf.mxu0
        %v2547 = vadd.f32 0.0, %v2546
        %v2548 = vpop.f32.mrf.mxu0
        %2549 = vmatprep.mubr.bf16.mxu0 0
        %2550 = vmatmul.mubr.bf16.gmra.mxu0 %v2402
        %v2551 = vpop.f32.mrf.mxu0
        %v2552 = vadd.f32 0.0, %v2551
        %v2553 = vpop.f32.mrf.mxu0
        %v2554 = vpop.f32.mrf.mxu0
        %v2555 = vadd.f32 0.0, %v2554
        %v2556 = vpop.f32.mrf.mxu0
        %2557 = vmatprep.mubr.bf16.mxu0 0
        %2558 = vmatmul.mubr.bf16.gmra.mxu0 %v2405
        %v2559 = vpop.f32.mrf.mxu0
        %v2560 = vadd.f32 0.0, %v2559
        %v2561 = vpop.f32.mrf.mxu0
        %v2562 = vpop.f32.mrf.mxu0
        %v2563 = vadd.f32 0.0, %v2562
        %v2564 = vpop.f32.mrf.mxu0
        %2565 = vmatprep.mubr.bf16.mxu0 0
        %2566 = vmatmul.mubr.bf16.gmra.mxu0 %v2408
        %v2567 = vpop.f32.mrf.mxu0
        %v2568 = vadd.f32 0.0, %v2567
        %v2569 = vpop.f32.mrf.mxu0
        %v2570 = vpop.f32.mrf.mxu0
        %v2571 = vadd.f32 0.0, %v2570
        %v2572 = vpop.f32.mrf.mxu0
        %2573 = vdwg.mxu0
        %v2574 = vadd.f32 %v2255, %v2448
        %v2575 = vadd.f32 %v2256, %v2451
        %v2576 = vadd.f32 %v2257, %v2456
        %v2577 = vadd.f32 %v2258, %v2459
        %v2578 = vadd.f32 %v2259, %v2464
        %v2579 = vadd.f32 %v2260, %v2467
        %v2580 = vadd.f32 %v2261, %v2472
        %v2581 = vadd.f32 %v2262, %v2475
        %v2582 = vadd.f32 %v2263, %v2480
        %v2583 = vadd.f32 %v2264, %v2483
        %v2584 = vadd.f32 %v2265, %v2488
        %v2585 = vadd.f32 %v2266, %v2491
        %v2586 = vadd.f32 %v2267, %v2496
        %v2587 = vadd.f32 %v2268, %v2499
        %v2588 = vadd.f32 %v2269, %v2504
        %v2589 = vadd.f32 %v2270, %v2507
        %v2590 = vadd.f32 %v2271, %v2512
        %v2591 = vadd.f32 %v2272, %v2515
        %v2592 = vadd.f32 %v2273, %v2520
        %v2593 = vadd.f32 %v2274, %v2523
        %v2594 = vadd.f32 %v2275, %v2528
        %v2595 = vadd.f32 %v2276, %v2531
        %v2596 = vadd.f32 %v2277, %v2536
        %v2597 = vadd.f32 %v2278, %v2539
        %v2598 = vadd.f32 %v2279, %v2544
        %v2599 = vadd.f32 %v2280, %v2547
        %v2600 = vadd.f32 %v2281, %v2552
        %v2601 = vadd.f32 %v2282, %v2555
        %v2602 = vadd.f32 %v2283, %v2560
        %v2603 = vadd.f32 %v2284, %v2563
        %v2604 = vadd.f32 %v2285, %v2568
        %v2605 = vadd.f32 %v2286, %v2571
        %s2606 = scalar_lea.vmem %s2, 16
        %v2607 = vld [vmem:[%s2606] sm:$0x3]
        %vm2608 = vcmask 1044480
        %v2609 = vrot.slane %v425, 3
        %v2610 = vrot.slane %v426, 3
        %v2611 = vsel %vm2608, %v2609, %v2610
        %v2612 = vrot.slane %v427, 3
        %v2613 = vsel %vm2608, %v2610, %v2612
        %v2614 = vrot.slane %v428, 3
        %v2615 = vsel %vm2608, %v2612, %v2614
        %v2616 = vrot.slane %v429, 3
        %v2617 = vsel %vm2608, %v2614, %v2616
        %v2618 = vrot.slane %v430, 3
        %v2619 = vsel %vm2608, %v2616, %v2618
        %v2620 = vrot.slane %v431, 3
        %v2621 = vsel %vm2608, %v2618, %v2620
        %v2622 = vrot.slane %v432, 3
        %v2623 = vsel %vm2608, %v2620, %v2622
        %v2624 = vrot.slane %v433, 3
        %v2625 = vsel %vm2608, %v2622, %v2624
        %v2626 = vrot.slane %v434, 3
        %v2627 = vsel %vm2608, %v2624, %v2626
        %v2628 = vrot.slane %v435, 3
        %v2629 = vsel %vm2608, %v2626, %v2628
        %v2630 = vrot.slane %v436, 3
        %v2631 = vsel %vm2608, %v2628, %v2630
        %v2632 = vrot.slane %v437, 3
        %v2633 = vsel %vm2608, %v2630, %v2632
        %v2634 = vrot.slane %v438, 3
        %v2635 = vsel %vm2608, %v2632, %v2634
        %v2636 = vrot.slane %v451, 3
        %v2637 = vsel %vm2608, %v2634, %v2636
        %v2638 = vrot.slane %v452, 3
        %v2639 = vsel %vm2608, %v2636, %v2638
        %v2640 = vrot.slane %v453, 3
        %v2641 = vsel %vm2608, %v2638, %v2640
        %v2643 = vsel %vm590, %v2611, 0
        %v2646 = vsel %vm590, %v2613, 0
        %v2649 = vsel %vm590, %v2615, 0
        %v2652 = vsel %vm590, %v2617, 0
        %v2655 = vsel %vm590, %v2619, 0
        %v2658 = vsel %vm590, %v2621, 0
        %v2661 = vsel %vm590, %v2623, 0
        %v2664 = vsel %vm590, %v2625, 0
        %v2667 = vsel %vm590, %v2627, 0
        %v2670 = vsel %vm590, %v2629, 0
        %v2673 = vsel %vm590, %v2631, 0
        %v2676 = vsel %vm590, %v2633, 0
        %v2679 = vsel %vm590, %v2635, 0
        %v2682 = vsel %vm590, %v2637, 0
        %v2685 = vsel %vm590, %v2639, 0
        %v2688 = vsel %vm590, %v2641, 0
        %v2691 = vsel %vm639, %v2607, 0
        %2693 = vmatprep.subr.bf16.mxu0 0
        %2694 = vmatpush1.bf16.msra.mxu0 0
        %2695 = vmatprep.subr.bf16.mxu0 0
        %2696 = vmatpush1.bf16.msra.mxu0 0
        %2697 = vmatprep.subr.bf16.mxu0 0
        %2698 = vmatpush1.bf16.msra.mxu0 0
        %2699 = vmatprep.subr.bf16.mxu0 0
        %2700 = vmatpush1.bf16.msra.mxu0 0
        %2701 = vmatprep.subr.bf16.mxu0 0
        %2702 = vmatpush1.bf16.msra.mxu0 0
        %2703 = vmatprep.subr.bf16.mxu0 0
        %2704 = vmatpush1.bf16.msra.mxu0 0
        %2705 = vmatprep.subr.bf16.mxu0 0
        %2706 = vmatpush1.bf16.msra.mxu0 0
        %2707 = vmatprep.subr.bf16.mxu0 0
        %2708 = vmatpush1.bf16.msra.mxu0 %v2691
        %2709 = vmatprep.subr.bf16.mxu0 0
        %2710 = vmatpush2.bf16.msra.mxu0 0
        %2711 = vmatprep.subr.bf16.mxu0 0
        %2712 = vmatpush2.bf16.msra.mxu0 0
        %2713 = vmatprep.subr.bf16.mxu0 0
        %2714 = vmatpush2.bf16.msra.mxu0 0
        %2715 = vmatprep.subr.bf16.mxu0 0
        %2716 = vmatpush2.bf16.msra.mxu0 0
        %2717 = vmatprep.subr.bf16.mxu0 0
        %2718 = vmatpush2.bf16.msra.mxu0 0
        %2719 = vmatprep.subr.bf16.mxu0 0
        %2720 = vmatpush2.bf16.msra.mxu0 0
        %2721 = vmatprep.subr.bf16.mxu0 0
        %2722 = vmatpush2.bf16.msra.mxu0 0
        %2723 = vmatprep.subr.bf16.mxu0 0
        %2724 = vmatpush2.bf16.msra.mxu0 0
        %2725 = vmatprep.mubr.bf16.mxu0 0
        %2726 = vmatmul.mubr.bf16.gmra.mxu0 %v2643
        %v2727 = vpop.f32.mrf.mxu0
        %v2728 = vadd.f32 0.0, %v2727
        %v2729 = vpop.f32.mrf.mxu0
        %v2730 = vpop.f32.mrf.mxu0
        %v2731 = vadd.f32 0.0, %v2730
        %v2732 = vpop.f32.mrf.mxu0
        %2733 = vmatprep.mubr.bf16.mxu0 0
        %2734 = vmatmul.mubr.bf16.gmra.mxu0 %v2646
        %v2735 = vpop.f32.mrf.mxu0
        %v2736 = vadd.f32 0.0, %v2735
        %v2737 = vpop.f32.mrf.mxu0
        %v2738 = vpop.f32.mrf.mxu0
        %v2739 = vadd.f32 0.0, %v2738
        %v2740 = vpop.f32.mrf.mxu0
        %2741 = vmatprep.mubr.bf16.mxu0 0
        %2742 = vmatmul.mubr.bf16.gmra.mxu0 %v2649
        %v2743 = vpop.f32.mrf.mxu0
        %v2744 = vadd.f32 0.0, %v2743
        %v2745 = vpop.f32.mrf.mxu0
        %v2746 = vpop.f32.mrf.mxu0
        %v2747 = vadd.f32 0.0, %v2746
        %v2748 = vpop.f32.mrf.mxu0
        %2749 = vmatprep.mubr.bf16.mxu0 0
        %2750 = vmatmul.mubr.bf16.gmra.mxu0 %v2652
        %v2751 = vpop.f32.mrf.mxu0
        %v2752 = vadd.f32 0.0, %v2751
        %v2753 = vpop.f32.mrf.mxu0
        %v2754 = vpop.f32.mrf.mxu0
        %v2755 = vadd.f32 0.0, %v2754
        %v2756 = vpop.f32.mrf.mxu0
        %2757 = vmatprep.mubr.bf16.mxu0 0
        %2758 = vmatmul.mubr.bf16.gmra.mxu0 %v2655
        %v2759 = vpop.f32.mrf.mxu0
        %v2760 = vadd.f32 0.0, %v2759
        %v2761 = vpop.f32.mrf.mxu0
        %v2762 = vpop.f32.mrf.mxu0
        %v2763 = vadd.f32 0.0, %v2762
        %v2764 = vpop.f32.mrf.mxu0
        %2765 = vmatprep.mubr.bf16.mxu0 0
        %2766 = vmatmul.mubr.bf16.gmra.mxu0 %v2658
        %v2767 = vpop.f32.mrf.mxu0
        %v2768 = vadd.f32 0.0, %v2767
        %v2769 = vpop.f32.mrf.mxu0
        %v2770 = vpop.f32.mrf.mxu0
        %v2771 = vadd.f32 0.0, %v2770
        %v2772 = vpop.f32.mrf.mxu0
        %2773 = vmatprep.mubr.bf16.mxu0 0
        %2774 = vmatmul.mubr.bf16.gmra.mxu0 %v2661
        %v2775 = vpop.f32.mrf.mxu0
        %v2776 = vadd.f32 0.0, %v2775
        %v2777 = vpop.f32.mrf.mxu0
        %v2778 = vpop.f32.mrf.mxu0
        %v2779 = vadd.f32 0.0, %v2778
        %v2780 = vpop.f32.mrf.mxu0
        %2781 = vmatprep.mubr.bf16.mxu0 0
        %2782 = vmatmul.mubr.bf16.gmra.mxu0 %v2664
        %v2783 = vpop.f32.mrf.mxu0
        %v2784 = vadd.f32 0.0, %v2783
        %v2785 = vpop.f32.mrf.mxu0
        %v2786 = vpop.f32.mrf.mxu0
        %v2787 = vadd.f32 0.0, %v2786
        %v2788 = vpop.f32.mrf.mxu0
        %2789 = vmatprep.mubr.bf16.mxu0 0
        %2790 = vmatmul.mubr.bf16.gmra.mxu0 %v2667
        %v2791 = vpop.f32.mrf.mxu0
        %v2792 = vadd.f32 0.0, %v2791
        %v2793 = vpop.f32.mrf.mxu0
        %v2794 = vpop.f32.mrf.mxu0
        %v2795 = vadd.f32 0.0, %v2794
        %v2796 = vpop.f32.mrf.mxu0
        %2797 = vmatprep.mubr.bf16.mxu0 0
        %2798 = vmatmul.mubr.bf16.gmra.mxu0 %v2670
        %v2799 = vpop.f32.mrf.mxu0
        %v2800 = vadd.f32 0.0, %v2799
        %v2801 = vpop.f32.mrf.mxu0
        %v2802 = vpop.f32.mrf.mxu0
        %v2803 = vadd.f32 0.0, %v2802
        %v2804 = vpop.f32.mrf.mxu0
        %2805 = vmatprep.mubr.bf16.mxu0 0
        %2806 = vmatmul.mubr.bf16.gmra.mxu0 %v2673
        %v2807 = vpop.f32.mrf.mxu0
        %v2808 = vadd.f32 0.0, %v2807
        %v2809 = vpop.f32.mrf.mxu0
        %v2810 = vpop.f32.mrf.mxu0
        %v2811 = vadd.f32 0.0, %v2810
        %v2812 = vpop.f32.mrf.mxu0
        %2813 = vmatprep.mubr.bf16.mxu0 0
        %2814 = vmatmul.mubr.bf16.gmra.mxu0 %v2676
        %v2815 = vpop.f32.mrf.mxu0
        %v2816 = vadd.f32 0.0, %v2815
        %v2817 = vpop.f32.mrf.mxu0
        %v2818 = vpop.f32.mrf.mxu0
        %v2819 = vadd.f32 0.0, %v2818
        %v2820 = vpop.f32.mrf.mxu0
        %2821 = vmatprep.mubr.bf16.mxu0 0
        %2822 = vmatmul.mubr.bf16.gmra.mxu0 %v2679
        %v2823 = vpop.f32.mrf.mxu0
        %v2824 = vadd.f32 0.0, %v2823
        %v2825 = vpop.f32.mrf.mxu0
        %v2826 = vpop.f32.mrf.mxu0
        %v2827 = vadd.f32 0.0, %v2826
        %v2828 = vpop.f32.mrf.mxu0
        %2829 = vmatprep.mubr.bf16.mxu0 0
        %2830 = vmatmul.mubr.bf16.gmra.mxu0 %v2682
        %v2831 = vpop.f32.mrf.mxu0
        %v2832 = vadd.f32 0.0, %v2831
        %v2833 = vpop.f32.mrf.mxu0
        %v2834 = vpop.f32.mrf.mxu0
        %v2835 = vadd.f32 0.0, %v2834
        %v2836 = vpop.f32.mrf.mxu0
        %2837 = vmatprep.mubr.bf16.mxu0 0
        %2838 = vmatmul.mubr.bf16.gmra.mxu0 %v2685
        %v2839 = vpop.f32.mrf.mxu0
        %v2840 = vadd.f32 0.0, %v2839
        %v2841 = vpop.f32.mrf.mxu0
        %v2842 = vpop.f32.mrf.mxu0
        %v2843 = vadd.f32 0.0, %v2842
        %v2844 = vpop.f32.mrf.mxu0
        %2845 = vmatprep.mubr.bf16.mxu0 0
        %2846 = vmatmul.mubr.bf16.gmra.mxu0 %v2688
        %v2847 = vpop.f32.mrf.mxu0
        %v2848 = vadd.f32 0.0, %v2847
        %v2849 = vpop.f32.mrf.mxu0
        %v2850 = vpop.f32.mrf.mxu0
        %v2851 = vadd.f32 0.0, %v2850
        %v2852 = vpop.f32.mrf.mxu0
        %2853 = vdwg.mxu0
        %v2854 = vadd.f32 %v2574, %v2728
        %v2855 = vadd.f32 %v2575, %v2731
        %v2856 = vadd.f32 %v2576, %v2736
        %v2857 = vadd.f32 %v2577, %v2739
        %v2858 = vadd.f32 %v2578, %v2744
        %v2859 = vadd.f32 %v2579, %v2747
        %v2860 = vadd.f32 %v2580, %v2752
        %v2861 = vadd.f32 %v2581, %v2755
        %v2862 = vadd.f32 %v2582, %v2760
        %v2863 = vadd.f32 %v2583, %v2763
        %v2864 = vadd.f32 %v2584, %v2768
        %v2865 = vadd.f32 %v2585, %v2771
        %v2866 = vadd.f32 %v2586, %v2776
        %v2867 = vadd.f32 %v2587, %v2779
        %v2868 = vadd.f32 %v2588, %v2784
        %v2869 = vadd.f32 %v2589, %v2787
        %v2870 = vadd.f32 %v2590, %v2792
        %v2871 = vadd.f32 %v2591, %v2795
        %v2872 = vadd.f32 %v2592, %v2800
        %v2873 = vadd.f32 %v2593, %v2803
        %v2874 = vadd.f32 %v2594, %v2808
        %v2875 = vadd.f32 %v2595, %v2811
        %v2876 = vadd.f32 %v2596, %v2816
        %v2877 = vadd.f32 %v2597, %v2819
        %v2878 = vadd.f32 %v2598, %v2824
        %v2879 = vadd.f32 %v2599, %v2827
        %v2880 = vadd.f32 %v2600, %v2832
        %v2881 = vadd.f32 %v2601, %v2835
        %v2882 = vadd.f32 %v2602, %v2840
        %v2883 = vadd.f32 %v2603, %v2843
        %v2884 = vadd.f32 %v2604, %v2848
        %v2885 = vadd.f32 %v2605, %v2851
        %v2886 = vld [vmem:[%s317] sm:$0xff]
        %v2887 = vld [vmem:[%s317 + $0x8] sm:$0xff]
        %v2888 = vld [vmem:[%s317 + $0x10] sm:$0xff]
        %v2889 = vld [vmem:[%s317 + $0x18] sm:$0xff]
        %v2890 = vld [vmem:[%s317 + $0x20] sm:$0xff]
        %v2891 = vld [vmem:[%s317 + $0x28] sm:$0xff]
        %v2892 = vld [vmem:[%s317 + $0x30] sm:$0xff]
        %v2893 = vld [vmem:[%s317 + $0x38] sm:$0xff]
        %v2894 = vld [vmem:[%s317 + $0x40] sm:$0xff]
        %v2895 = vld [vmem:[%s317 + $0x48] sm:$0xff]
        %v2896 = vld [vmem:[%s317 + $0x50] sm:$0xff]
        %v2897 = vld [vmem:[%s317 + $0x58] sm:$0xff]
        %v2898 = vld [vmem:[%s317 + $0x60] sm:$0xff]
        %v2899 = vld [vmem:[%s317 + $0x68] sm:$0xff]
        %v2900 = vld [vmem:[%s317 + $0x70] sm:$0xff]
        %v2901 = vld [vmem:[%s317 + $0x78] sm:$0xff]
        %v2902 = vld [vmem:[%s317 + $0x80] sm:$0xff]
        %v2903 = vld [vmem:[%s317 + $0x88] sm:$0xff]
        %v2904 = vld [vmem:[%s317 + $0x90] sm:$0xff]
        %v2905 = vld [vmem:[%s317 + $0x98] sm:$0xff]
        %v2906 = vld [vmem:[%s317 + $0xa0] sm:$0xff]
        %v2907 = vld [vmem:[%s317 + $0xa8] sm:$0xff]
        %v2908 = vld [vmem:[%s317 + $0xb0] sm:$0xff]
        %v2909 = vld [vmem:[%s317 + $0xb8] sm:$0xff]
        %v2910 = vld [vmem:[%s317 + $0xc0] sm:$0xff]
        %v2911 = vld [vmem:[%s317 + $0xc8] sm:$0xff]
        %v2912 = vld [vmem:[%s317 + $0xd0] sm:$0xff]
        %v2913 = vld [vmem:[%s317 + $0xd8] sm:$0xff]
        %v2914 = vld [vmem:[%s317 + $0xe0] sm:$0xff]
        %v2915 = vld [vmem:[%s317 + $0xe8] sm:$0xff]
        %v2916 = vld [vmem:[%s317 + $0xf0] sm:$0xff]
        %v2917 = vld [vmem:[%s317 + $0xf8] sm:$0xff]
        %2919 = vset.pattern.permute.xlu0 0
        %2920 = vperm.xlu0 %2919, %v2886
        %v2921 = vpop.permute.xlu0 %2920
        %2924 = vset.pattern.permute.xlu0 0
        %2925 = vperm.xlu0 %2924, %v2887
        %v2926 = vpop.permute.xlu0 %2925
        %2929 = vset.pattern.permute.xlu0 0
        %2930 = vperm.xlu0 %2929, %v2888
        %v2931 = vpop.permute.xlu0 %2930
        %2934 = vset.pattern.permute.xlu0 0
        %2935 = vperm.xlu0 %2934, %v2889
        %v2936 = vpop.permute.xlu0 %2935
        %2939 = vset.pattern.permute.xlu0 0
        %2940 = vperm.xlu0 %2939, %v2890
        %v2941 = vpop.permute.xlu0 %2940
        %2944 = vset.pattern.permute.xlu0 0
        %2945 = vperm.xlu0 %2944, %v2891
        %v2946 = vpop.permute.xlu0 %2945
        %2949 = vset.pattern.permute.xlu0 0
        %2950 = vperm.xlu0 %2949, %v2892
        %v2951 = vpop.permute.xlu0 %2950
        %2954 = vset.pattern.permute.xlu0 0
        %2955 = vperm.xlu0 %2954, %v2893
        %v2956 = vpop.permute.xlu0 %2955
        %2959 = vset.pattern.permute.xlu0 0
        %2960 = vperm.xlu0 %2959, %v2894
        %v2961 = vpop.permute.xlu0 %2960
        %2964 = vset.pattern.permute.xlu0 0
        %2965 = vperm.xlu0 %2964, %v2895
        %v2966 = vpop.permute.xlu0 %2965
        %2969 = vset.pattern.permute.xlu0 0
        %2970 = vperm.xlu0 %2969, %v2896
        %v2971 = vpop.permute.xlu0 %2970
        %2974 = vset.pattern.permute.xlu0 0
        %2975 = vperm.xlu0 %2974, %v2897
        %v2976 = vpop.permute.xlu0 %2975
        %2979 = vset.pattern.permute.xlu0 0
        %2980 = vperm.xlu0 %2979, %v2898
        %v2981 = vpop.permute.xlu0 %2980
        %2984 = vset.pattern.permute.xlu0 0
        %2985 = vperm.xlu0 %2984, %v2899
        %v2986 = vpop.permute.xlu0 %2985
        %2989 = vset.pattern.permute.xlu0 0
        %2990 = vperm.xlu0 %2989, %v2900
        %v2991 = vpop.permute.xlu0 %2990
        %2994 = vset.pattern.permute.xlu0 0
        %2995 = vperm.xlu0 %2994, %v2901
        %v2996 = vpop.permute.xlu0 %2995
        %2999 = vset.pattern.permute.xlu0 0
        %3000 = vperm.xlu0 %2999, %v2902
        %v3001 = vpop.permute.xlu0 %3000
        %3004 = vset.pattern.permute.xlu0 0
        %3005 = vperm.xlu0 %3004, %v2903
        %v3006 = vpop.permute.xlu0 %3005
        %3009 = vset.pattern.permute.xlu0 0
        %3010 = vperm.xlu0 %3009, %v2904
        %v3011 = vpop.permute.xlu0 %3010
        %3014 = vset.pattern.permute.xlu0 0
        %3015 = vperm.xlu0 %3014, %v2905
        %v3016 = vpop.permute.xlu0 %3015
        %3019 = vset.pattern.permute.xlu0 0
        %3020 = vperm.xlu0 %3019, %v2906
        %v3021 = vpop.permute.xlu0 %3020
        %3024 = vset.pattern.permute.xlu0 0
        %3025 = vperm.xlu0 %3024, %v2907
        %v3026 = vpop.permute.xlu0 %3025
        %3029 = vset.pattern.permute.xlu0 0
        %3030 = vperm.xlu0 %3029, %v2908
        %v3031 = vpop.permute.xlu0 %3030
        %3034 = vset.pattern.permute.xlu0 0
        %3035 = vperm.xlu0 %3034, %v2909
        %v3036 = vpop.permute.xlu0 %3035
        %3039 = vset.pattern.permute.xlu0 0
        %3040 = vperm.xlu0 %3039, %v2910
        %v3041 = vpop.permute.xlu0 %3040
        %3044 = vset.pattern.permute.xlu0 0
        %3045 = vperm.xlu0 %3044, %v2911
        %v3046 = vpop.permute.xlu0 %3045
        %3049 = vset.pattern.permute.xlu0 0
        %3050 = vperm.xlu0 %3049, %v2912
        %v3051 = vpop.permute.xlu0 %3050
        %3054 = vset.pattern.permute.xlu0 0
        %3055 = vperm.xlu0 %3054, %v2913
        %v3056 = vpop.permute.xlu0 %3055
        %3059 = vset.pattern.permute.xlu0 0
        %3060 = vperm.xlu0 %3059, %v2914
        %v3061 = vpop.permute.xlu0 %3060
        %3064 = vset.pattern.permute.xlu0 0
        %3065 = vperm.xlu0 %3064, %v2915
        %v3066 = vpop.permute.xlu0 %3065
        %3069 = vset.pattern.permute.xlu0 0
        %3070 = vperm.xlu0 %3069, %v2916
        %v3071 = vpop.permute.xlu0 %3070
        %3074 = vset.pattern.permute.xlu0 0
        %3075 = vperm.xlu0 %3074, %v2917
        %v3076 = vpop.permute.xlu0 %3075
        %v3078 = vmul.f32 %v2854, %v2921
        %v3079 = vmul.f32 %v2855, %v2926
        %v3080 = vmul.f32 %v2856, %v2931
        %v3081 = vmul.f32 %v2857, %v2936
        %v3082 = vmul.f32 %v2858, %v2941
        %v3083 = vmul.f32 %v2859, %v2946
        %v3084 = vmul.f32 %v2860, %v2951
        %v3085 = vmul.f32 %v2861, %v2956
        %v3086 = vmul.f32 %v2862, %v2961
        %v3087 = vmul.f32 %v2863, %v2966
        %v3088 = vmul.f32 %v2864, %v2971
        %v3089 = vmul.f32 %v2865, %v2976
        %v3090 = vmul.f32 %v2866, %v2981
        %v3091 = vmul.f32 %v2867, %v2986
        %v3092 = vmul.f32 %v2868, %v2991
        %v3093 = vmul.f32 %v2869, %v2996
        %v3094 = vmul.f32 %v2870, %v3001
        %v3095 = vmul.f32 %v2871, %v3006
        %v3096 = vmul.f32 %v2872, %v3011
        %v3097 = vmul.f32 %v2873, %v3016
        %v3098 = vmul.f32 %v2874, %v3021
        %v3099 = vmul.f32 %v2875, %v3026
        %v3100 = vmul.f32 %v2876, %v3031
        %v3101 = vmul.f32 %v2877, %v3036
        %v3102 = vmul.f32 %v2878, %v3041
        %v3103 = vmul.f32 %v2879, %v3046
        %v3104 = vmul.f32 %v2880, %v3051
        %v3105 = vmul.f32 %v2881, %v3056
        %v3106 = vmul.f32 %v2882, %v3061
        %v3107 = vmul.f32 %v2883, %v3066
        %v3108 = vmul.f32 %v2884, %v3071
        %v3109 = vmul.f32 %v2885, %v3076
        %v3110 = vpack.c.bf16 %v3079, %v3078
        %v3111 = vpack.c.bf16 %v3081, %v3080
        %v3112 = vpack.c.bf16 %v3083, %v3082
        %v3113 = vpack.c.bf16 %v3085, %v3084
        %v3114 = vpack.c.bf16 %v3087, %v3086
        %v3115 = vpack.c.bf16 %v3089, %v3088
        %v3116 = vpack.c.bf16 %v3091, %v3090
        %v3117 = vpack.c.bf16 %v3093, %v3092
        %v3118 = vpack.c.bf16 %v3095, %v3094
        %v3119 = vpack.c.bf16 %v3097, %v3096
        %v3120 = vpack.c.bf16 %v3099, %v3098
        %v3121 = vpack.c.bf16 %v3101, %v3100
        %v3122 = vpack.c.bf16 %v3103, %v3102
        %v3123 = vpack.c.bf16 %v3105, %v3104
        %v3124 = vpack.c.bf16 %v3107, %v3106
        %v3125 = vpack.c.bf16 %v3109, %v3108
        %v3142 = vunpack.c.l.b16 %v3110
        %v3143 = vunpack.c.h.b16 %v3110
        %v3144 = vunpack.c.l.b16 %v3111
        %v3145 = vunpack.c.h.b16 %v3111
        %v3146 = vunpack.c.l.b16 %v3112
        %v3147 = vunpack.c.h.b16 %v3112
        %v3148 = vunpack.c.l.b16 %v3113
        %v3149 = vunpack.c.h.b16 %v3113
        %v3150 = vunpack.c.l.b16 %v3114
        %v3151 = vunpack.c.h.b16 %v3114
        %v3152 = vunpack.c.l.b16 %v3115
        %v3153 = vunpack.c.h.b16 %v3115
        %v3154 = vunpack.c.l.b16 %v3116
        %v3155 = vunpack.c.h.b16 %v3116
        %v3156 = vunpack.c.l.b16 %v3117
        %v3157 = vunpack.c.h.b16 %v3117
        %v3158 = vunpack.c.l.b16 %v3118
        %v3159 = vunpack.c.h.b16 %v3118
        %v3160 = vunpack.c.l.b16 %v3119
        %v3161 = vunpack.c.h.b16 %v3119
        %v3162 = vunpack.c.l.b16 %v3120
        %v3163 = vunpack.c.h.b16 %v3120
        %v3164 = vunpack.c.l.b16 %v3121
        %v3165 = vunpack.c.h.b16 %v3121
        %v3166 = vunpack.c.l.b16 %v3122
        %v3167 = vunpack.c.h.b16 %v3122
        %v3168 = vunpack.c.l.b16 %v3123
        %v3169 = vunpack.c.h.b16 %v3123
        %v3170 = vunpack.c.l.b16 %v3124
        %v3171 = vunpack.c.h.b16 %v3124
        %v3172 = vunpack.c.l.b16 %v3125
        %v3173 = vunpack.c.h.b16 %v3125
        %v3174 = vpack.c.b16 %v3142, %v3142
        %v3175 = vpack.c.b16 %v3143, %v3143
        %v3176 = vpack.c.b16 %v3144, %v3144
        %v3177 = vpack.c.b16 %v3145, %v3145
        %v3178 = vpack.c.b16 %v3146, %v3146
        %v3179 = vpack.c.b16 %v3147, %v3147
        %v3180 = vpack.c.b16 %v3148, %v3148
        %v3181 = vpack.c.b16 %v3149, %v3149
        %v3182 = vpack.c.b16 %v3150, %v3150
        %v3183 = vpack.c.b16 %v3151, %v3151
        %v3184 = vpack.c.b16 %v3152, %v3152
        %v3185 = vpack.c.b16 %v3153, %v3153
        %v3186 = vpack.c.b16 %v3154, %v3154
        %v3187 = vpack.c.b16 %v3155, %v3155
        %v3188 = vpack.c.b16 %v3156, %v3156
        %v3189 = vpack.c.b16 %v3157, %v3157
        %v3190 = vpack.c.b16 %v3158, %v3158
        %v3191 = vpack.c.b16 %v3159, %v3159
        %v3192 = vpack.c.b16 %v3160, %v3160
        %v3193 = vpack.c.b16 %v3161, %v3161
        %v3194 = vpack.c.b16 %v3162, %v3162
        %v3195 = vpack.c.b16 %v3163, %v3163
        %v3196 = vpack.c.b16 %v3164, %v3164
        %v3197 = vpack.c.b16 %v3165, %v3165
        %v3198 = vpack.c.b16 %v3166, %v3166
        %v3199 = vpack.c.b16 %v3167, %v3167
        %v3200 = vpack.c.b16 %v3168, %v3168
        %v3201 = vpack.c.b16 %v3169, %v3169
        %v3202 = vpack.c.b16 %v3170, %v3170
        %v3203 = vpack.c.b16 %v3171, %v3171
        %v3204 = vpack.c.b16 %v3172, %v3172
        %v3205 = vpack.c.b16 %v3173, %v3173
        %3238 = vst [vmem:[%s286] sm:$0xf] %v3174
        %3239 = vst [vmem:[%s286 + $0x4] sm:$0xf] %v3175
        %3240 = vst [vmem:[%s286 + $0x8] sm:$0xf] %v3176
        %3241 = vst [vmem:[%s286 + $0xc] sm:$0xf] %v3177
        %3242 = vst [vmem:[%s286 + $0x10] sm:$0xf] %v3178
        %3243 = vst [vmem:[%s286 + $0x14] sm:$0xf] %v3179
        %3244 = vst [vmem:[%s286 + $0x18] sm:$0xf] %v3180
        %3245 = vst [vmem:[%s286 + $0x1c] sm:$0xf] %v3181
        %3246 = vst [vmem:[%s286 + $0x20] sm:$0xf] %v3182
        %3247 = vst [vmem:[%s286 + $0x24] sm:$0xf] %v3183
        %3248 = vst [vmem:[%s286 + $0x28] sm:$0xf] %v3184
        %3249 = vst [vmem:[%s286 + $0x2c] sm:$0xf] %v3185
        %3250 = vst [vmem:[%s286 + $0x30] sm:$0xf] %v3186
        %3251 = vst [vmem:[%s286 + $0x34] sm:$0xf] %v3187
        %3252 = vst [vmem:[%s286 + $0x38] sm:$0xf] %v3188
        %3253 = vst [vmem:[%s286 + $0x3c] sm:$0xf] %v3189
        %3254 = vst [vmem:[%s286 + $0x40] sm:$0xf] %v3190
        %3255 = vst [vmem:[%s286 + $0x44] sm:$0xf] %v3191
        %3256 = vst [vmem:[%s286 + $0x48] sm:$0xf] %v3192
        %3257 = vst [vmem:[%s286 + $0x4c] sm:$0xf] %v3193
        %3258 = vst [vmem:[%s286 + $0x50] sm:$0xf] %v3194
        %3259 = vst [vmem:[%s286 + $0x54] sm:$0xf] %v3195
        %3260 = vst [vmem:[%s286 + $0x58] sm:$0xf] %v3196
        %3261 = vst [vmem:[%s286 + $0x5c] sm:$0xf] %v3197
        %3262 = vst [vmem:[%s286 + $0x60] sm:$0xf] %v3198
        %3263 = vst [vmem:[%s286 + $0x64] sm:$0xf] %v3199
        %3264 = vst [vmem:[%s286 + $0x68] sm:$0xf] %v3200
        %3265 = vst [vmem:[%s286 + $0x6c] sm:$0xf] %v3201
        %3266 = vst [vmem:[%s286 + $0x70] sm:$0xf] %v3202
        %3267 = vst [vmem:[%s286 + $0x74] sm:$0xf] %v3203
        %3268 = vst [vmem:[%s286 + $0x78] sm:$0xf] %v3204
        %3269 = vst [vmem:[%s286 + $0x7c] sm:$0xf] %v3205
        %v3270 = vadd.f32 %v3078, %v3079
        %v3271 = vadd.f32 %v3270, %v3080
        %v3272 = vadd.f32 %v3271, %v3081
        %v3273 = vadd.f32 %v3272, %v3082
        %v3274 = vadd.f32 %v3273, %v3083
        %v3275 = vadd.f32 %v3274, %v3084
        %v3276 = vadd.f32 %v3275, %v3085
        %v3277 = vadd.f32 %v3276, %v3086
        %v3278 = vadd.f32 %v3277, %v3087
        %v3279 = vadd.f32 %v3278, %v3088
        %v3280 = vadd.f32 %v3279, %v3089
        %v3281 = vadd.f32 %v3280, %v3090
        %v3282 = vadd.f32 %v3281, %v3091
        %v3283 = vadd.f32 %v3282, %v3092
        %v3284 = vadd.f32 %v3283, %v3093
        %v3285 = vadd.f32 %v3284, %v3094
        %v3286 = vadd.f32 %v3285, %v3095
        %v3287 = vadd.f32 %v3286, %v3096
        %v3288 = vadd.f32 %v3287, %v3097
        %v3289 = vadd.f32 %v3288, %v3098
        %v3290 = vadd.f32 %v3289, %v3099
        %v3291 = vadd.f32 %v3290, %v3100
        %v3292 = vadd.f32 %v3291, %v3101
        %v3293 = vadd.f32 %v3292, %v3102
        %v3294 = vadd.f32 %v3293, %v3103
        %v3295 = vadd.f32 %v3294, %v3104
        %v3296 = vadd.f32 %v3295, %v3105
        %v3297 = vadd.f32 %v3296, %v3106
        %v3298 = vadd.f32 %v3297, %v3107
        %v3299 = vadd.f32 %v3298, %v3108
        %v3300 = vadd.f32 %v3299, %v3109
        %v3301 = vrot.slane %v3300, 4
        %v3302 = vadd.f32 %v3300, %v3301
        %v3303 = vrot.slane %v3302, 2
        %v3304 = vadd.f32 %v3302, %v3303
        %v3305 = vrot.slane %v3304, 1
        %v3306 = vadd.f32 %v3304, %v3305
        %3307 = vst [vmem:[%s292] sm:$0x1] %v3306
        %v3308 = vmul.f32 %v3078, %v3078
        %v3309 = vmul.f32 %v3079, %v3079
        %v3310 = vmul.f32 %v3080, %v3080
        %v3311 = vmul.f32 %v3081, %v3081
        %v3312 = vmul.f32 %v3082, %v3082
        %v3313 = vmul.f32 %v3083, %v3083
        %v3314 = vmul.f32 %v3084, %v3084
        %v3315 = vmul.f32 %v3085, %v3085
        %v3316 = vmul.f32 %v3086, %v3086
        %v3317 = vmul.f32 %v3087, %v3087
        %v3318 = vmul.f32 %v3088, %v3088
        %v3319 = vmul.f32 %v3089, %v3089
        %v3320 = vmul.f32 %v3090, %v3090
        %v3321 = vmul.f32 %v3091, %v3091
        %v3322 = vmul.f32 %v3092, %v3092
        %v3323 = vmul.f32 %v3093, %v3093
        %v3324 = vmul.f32 %v3094, %v3094
        %v3325 = vmul.f32 %v3095, %v3095
        %v3326 = vmul.f32 %v3096, %v3096
        %v3327 = vmul.f32 %v3097, %v3097
        %v3328 = vmul.f32 %v3098, %v3098
        %v3329 = vmul.f32 %v3099, %v3099
        %v3330 = vmul.f32 %v3100, %v3100
        %v3331 = vmul.f32 %v3101, %v3101
        %v3332 = vmul.f32 %v3102, %v3102
        %v3333 = vmul.f32 %v3103, %v3103
        %v3334 = vmul.f32 %v3104, %v3104
        %v3335 = vmul.f32 %v3105, %v3105
        %v3336 = vmul.f32 %v3106, %v3106
        %v3337 = vmul.f32 %v3107, %v3107
        %v3338 = vmul.f32 %v3108, %v3108
        %v3339 = vmul.f32 %v3109, %v3109
        %v3340 = vadd.f32 %v3308, %v3309
        %v3341 = vadd.f32 %v3340, %v3310
        %v3342 = vadd.f32 %v3341, %v3311
        %v3343 = vadd.f32 %v3342, %v3312
        %v3344 = vadd.f32 %v3343, %v3313
        %v3345 = vadd.f32 %v3344, %v3314
        %v3346 = vadd.f32 %v3345, %v3315
        %v3347 = vadd.f32 %v3346, %v3316
        %v3348 = vadd.f32 %v3347, %v3317
        %v3349 = vadd.f32 %v3348, %v3318
        %v3350 = vadd.f32 %v3349, %v3319
        %v3351 = vadd.f32 %v3350, %v3320
        %v3352 = vadd.f32 %v3351, %v3321
        %v3353 = vadd.f32 %v3352, %v3322
        %v3354 = vadd.f32 %v3353, %v3323
        %v3355 = vadd.f32 %v3354, %v3324
        %v3356 = vadd.f32 %v3355, %v3325
        %v3357 = vadd.f32 %v3356, %v3326
        %v3358 = vadd.f32 %v3357, %v3327
        %v3359 = vadd.f32 %v3358, %v3328
        %v3360 = vadd.f32 %v3359, %v3329
        %v3361 = vadd.f32 %v3360, %v3330
        %v3362 = vadd.f32 %v3361, %v3331
        %v3363 = vadd.f32 %v3362, %v3332
        %v3364 = vadd.f32 %v3363, %v3333
        %v3365 = vadd.f32 %v3364, %v3334
        %v3366 = vadd.f32 %v3365, %v3335
        %v3367 = vadd.f32 %v3366, %v3336
        %v3368 = vadd.f32 %v3367, %v3337
        %v3369 = vadd.f32 %v3368, %v3338
        %v3370 = vadd.f32 %v3369, %v3339
        %v3371 = vrot.slane %v3370, 4
        %v3372 = vadd.f32 %v3370, %v3371
        %v3373 = vrot.slane %v3372, 2
        %v3374 = vadd.f32 %v3372, %v3373
        %v3375 = vrot.slane %v3374, 1
        %v3376 = vadd.f32 %v3374, %v3375
        %3377 = vst [vmem:[%s298] sm:$0x1] %v3376
        %s3378 = sand.u32 %s133, 1
        %s3379 = scalar_lea.sflag [#allocation3], %s3378
        %s3380 = sand.u32 %s133, 1
        %s3381 = smul.addr %s3380, 128
        %s3382 = scalar_lea.vmem [#allocation2], %s3381
        %s3383 = sand.u32 %s24, 1
        %s3384 = scalar_lea.sflag [#allocation5], %s3383
        %s3385 = sand.u32 %s159, 1
        %s3386 = scalar_lea.vmem [#allocation4], %s3385
        %s3387 = sand.u32 %s24, 1
        %s3388 = scalar_lea.sflag [#allocation5], %s3387
        %s3389 = sand.u32 %s185, 1
        %s3390 = scalar_lea.vmem [#allocation6], %s3389
        // Predicated region
        $region37: #{tpu_custom_call.1} parent=35 // pred_check
          %p3391 = pneg %p143
        $region38: #{tpu_custom_call.1} parent=35 // pred_check_branch
          %3393 = sbr.rel (%p3391) target = $region40
        $region39: #{tpu_custom_call.1} parent=35 // pred_region
          %s3394 = smul.u32 32, %s24
          %s3396 = ssub.s32 2048, 2048
          %3397 = vsyncadd %s3379, %s3396
          %s3398 = smul.addr %s3394, 64
          %s3399 = scalar_lea.hbm %s4, %s3398
          %s3400 = sshll.u32 %s3382, 4
          %s3401 = int_to_ptr.vmem [resolvable:$true] %s3400
          %3406 = dma.vmem_to_hbm [thread:$0]  %s3401, 2048, %s3399, %s3379, 64, 64, 4
        $region40: #{tpu_custom_call.1} parent=35 // pred_fallthru
          _
        // Predicated region
        $region41: #{tpu_custom_call.1} parent=35 // pred_check
          %p3407 = pneg %p169
        $region42: #{tpu_custom_call.1} parent=35 // pred_check_branch
          %3409 = sbr.rel (%p3407) target = $region44
        $region43: #{tpu_custom_call.1} parent=35 // pred_region
          %s3411 = ssub.s32 16, 16
          %3412 = vsyncadd %s3384, %s3411
          %s3413 = smul.addr %s24, 16
          %s3414 = scalar_lea.hbm %s5, %s3413
          %s3416 = sshll.u32 %s3386, 4
          %s3417 = int_to_ptr.vmem [resolvable:$true] %s3416
          %3419 = dma.vmem_to_hbm [thread:$0]  %s3417, 16, %s3414, %s3384
        $region44: #{tpu_custom_call.1} parent=35 // pred_fallthru
          _
        // Predicated region
        $region45: #{tpu_custom_call.1} parent=35 // pred_check
          %p3420 = pneg %p195
        $region46: #{tpu_custom_call.1} parent=35 // pred_check_branch
          %3422 = sbr.rel (%p3420) target = $region48
        $region47: #{tpu_custom_call.1} parent=35 // pred_region
          %s3424 = ssub.s32 16, 16
          %3425 = vsyncadd %s3388, %s3424
          %s3426 = smul.addr %s24, 16
          %s3427 = scalar_lea.hbm %s6, %s3426
          %s3429 = sshll.u32 %s3390, 4
          %s3430 = int_to_ptr.vmem [resolvable:$true] %s3429
          %3432 = dma.vmem_to_hbm [thread:$0]  %s3430, 16, %s3427, %s3388
        $region48: #{tpu_custom_call.1} parent=35 // pred_fallthru
          _
      $region36: #{tpu_custom_call.1} parent=5 // pred_fallthru
        _
      %p3433 = scmp.le.s32.totalorder 2, %s19
      // Predicated region
      $region49: #{tpu_custom_call.1} parent=5 // pred_check
        %p3434 = pneg %p3433
      $region50: #{tpu_custom_call.1} parent=5 // pred_check_branch
        %3436 = sbr.rel (%p3434) target = $region52
      $region51: #{tpu_custom_call.1} parent=5 // pred_region
        %s3437 = ssub.s32 %s19, 2
        // Predicated region
        $region53: #{tpu_custom_call.1} parent=51 // pred_check
          %p3438 = pneg %p149
        $region54: #{tpu_custom_call.1} parent=51 // pred_check_branch
          %3440 = sbr.rel (%p3438) target = $region56
        $region55: #{tpu_custom_call.1} parent=51 // pred_region
          %s3441 = sand.u32 %s134, 1
          %s3442 = scalar_lea.sflag [#allocation3], %s3441
          %s3443 = sand.u32 %s134, 1
          %s3444 = smul.addr %s3443, 128
          %s3445 = scalar_lea.vmem [#allocation2], %s3444
          %3446 = dma.done %s3442, 2048
        $region56: #{tpu_custom_call.1} parent=51 // pred_fallthru
          _
        // Predicated region
        $region57: #{tpu_custom_call.1} parent=51 // pred_check
          %p3447 = pneg %p175
        $region58: #{tpu_custom_call.1} parent=51 // pred_check_branch
          %3449 = sbr.rel (%p3447) target = $region60
        $region59: #{tpu_custom_call.1} parent=51 // pred_region
          %s3450 = sand.u32 %s25, 1
          %s3451 = scalar_lea.sflag [#allocation5], %s3450
          %s3452 = sand.u32 %s160, 1
          %s3453 = scalar_lea.vmem [#allocation4], %s3452
          %3454 = dma.done %s3451, 16
        $region60: #{tpu_custom_call.1} parent=51 // pred_fallthru
          _
        // Predicated region
        $region61: #{tpu_custom_call.1} parent=51 // pred_check
          %p3455 = pneg %p201
        $region62: #{tpu_custom_call.1} parent=51 // pred_check_branch
          %3457 = sbr.rel (%p3455) target = $region64
        $region63: #{tpu_custom_call.1} parent=51 // pred_region
          %s3458 = sand.u32 %s25, 1
          %s3459 = scalar_lea.sflag [#allocation5], %s3458
          %s3460 = sand.u32 %s186, 1
          %s3461 = scalar_lea.vmem [#allocation6], %s3460
          %3462 = dma.done %s3459, 16
        $region64: #{tpu_custom_call.1} parent=51 // pred_fallthru
          _
      $region52: #{tpu_custom_call.1} parent=5 // pred_fallthru
        _
    $region6: #{tpu_custom_call.1} parent=1 // loop_footer
      %s23 = sadd.s32 1, %s19
    $region7: #{tpu_custom_call.1} parent=1 // loop_footer_branch
      %18 = sbr.rel target = $region3
    $region8: #{tpu_custom_call.1} parent=1 // loop_exit
      _
    %3463 = vsyncpa [#allocation3], 1
    %s3464 = scalar_lea.sflag [#allocation3], 1
    %3465 = vsyncpa %s3464, 1
    %3466 = vsyncpa [#allocation5], 1
    %s3467 = scalar_lea.sflag [#allocation5], 1
    %3468 = vsyncpa %s3467, 1

</llo_original>
